<compile_context>
chip_gen: v7x
topology: tpu7x:2x2x1
jax: 0.10.0
libtpu: 0.0.40
codegen_flags: <defaults>
</compile_context>

<pallas_src>
import functools

import jax
import jax.numpy as jnp
from jax import lax
from jax.experimental import pallas as pl
from jax.experimental.pallas import tpu as pltpu

_MXU_DTYPE = jnp.bfloat16          # matmul operand dtype (accumulation stays f32)
_ACT_DTYPE = jnp.bfloat16          # inter-layer activation storage dtype
_VMEM_LIMIT = 48 * 1024 * 1024     # <= ~48 MiB: safe on v7x (64 MiB), fine on v5e/v6e
_BN_EPS = 1e-5
_TM_TARGET = 4096                  # column-tile target (2048-4096 v5e/v6e, 4096-8192 v7x)


def _round_up(x, m):
    return (x + m - 1) // m * m


def _pick_tiling(m):
    """Pick (tm, mp) for the flattened point axis of length m."""
    m128 = _round_up(max(m, 1), 128)
    ntiles = max(1, -(-m128 // _TM_TARGET))
    # v7x has 2 TensorCores: keep >= 2 grid steps when the problem is big enough.
    if ntiles == 1 and m128 >= 1024:
        ntiles = 2
    tm = _round_up(-(-m // ntiles), 128)
    return tm, tm * ntiles


def _pick_pool_tile(s, c, k):
    """Lane tile over the query-point axis; keep the f32 working tile modest."""
    budget = 4 * 1024 * 1024
    for t in (512, 256, 128):
        if s % t == 0 and c * k * t * 4 <= budget:
            return t
    return s


# --------------------------- MLP-layer kernel --------------------------------

def _mlp_layer_kernel(*refs, apply_prologue, tm, m_real, m_padded):
    """One MSG-MLP layer on a [Cin, tm] column tile of the [Cin, Mp] feature matrix.

    Fuses (optional) BN-apply+ReLU of the previous layer, the 1x1-conv matmul
    W[Cout,Cin] @ X[Cin,tm], and per-tile BatchNorm partial statistics.
    """
    if apply_prologue:
        x_ref, s_ref, t_ref, w_ref, y_ref, ps_ref, pss_ref = refs
    else:
        x_ref, w_ref, y_ref, ps_ref, pss_ref = refs

    x = x_ref[...]
    if apply_prologue:
        # Previous layer's BN (precomputed scale/shift) + ReLU, fused here so the
        # normalized activation never makes an extra HBM round trip.  Arithmetic
        # in f32 (v5e has no bf16 VALU path); bf16 only for MXU operands.
        xf = jnp.maximum(x.astype(jnp.float32) * s_ref[...] + t_ref[...], 0.0)
        x = xf.astype(_MXU_DTYPE)
    else:
        x = x.astype(_MXU_DTYPE)

    # 1x1 Conv2d == channel matmul.  bf16 operands, f32 accumulation.  The conv
    # bias is dropped: it is cancelled exactly by the mean subtraction of the
    # training-mode BatchNorm that follows.
    y = jnp.dot(w_ref[...], x, preferred_element_type=jnp.float32)
    y_ref[...] = y.astype(y_ref.dtype)          # bf16 activation back to HBM

    # Per-tile BatchNorm partial statistics, computed from the f32 accumulator
    # (before the bf16 downcast).  Padded tail columns are masked on the last
    # tile only (pl.when), so non-last tiles skip the iota/compare/select.
    def store_stats(yv):
        ps_ref[...] = jnp.sum(yv, axis=1, keepdims=True)[None]
        pss_ref[...] = jnp.sum(yv * yv, axis=1, keepdims=True)[None]

    if m_padded != m_real:
        is_last = pl.program_id(0) == pl.num_programs(0) - 1

        @pl.when(is_last)
        def _():
            col = pl.program_id(0) * tm + lax.broadcasted_iota(jnp.int32, (1, tm), 1)
            store_stats(jnp.where(col < m_real, y, 0.0))

        @pl.when(jnp.logical_not(is_last))
        def _():
            store_stats(y)
    else:
        store_stats(y)


def mlp_layer(x_t, w, scale=None, shift=None, *, m_real, tm):
    """x_t: [Cin, Mp] bf16 (zero-padded past m_real) -> (y [Cout, Mp] bf16, psum, psumsq)."""
    cin, mp = x_t.shape
    cout = w.shape[0]
    ntiles = mp // tm
    apply_prologue = scale is not None

    kernel = functools.partial(_mlp_layer_kernel, apply_prologue=apply_prologue,
                               tm=tm, m_real=m_real, m_padded=mp)

    in_specs = [pl.BlockSpec((cin, tm), lambda i: (0, i))]
    args = [x_t]
    if apply_prologue:
        in_specs += [pl.BlockSpec((cin, 1), lambda i: (0, 0)),
                     pl.BlockSpec((cin, 1), lambda i: (0, 0))]
        args += [scale.reshape(cin, 1), shift.reshape(cin, 1)]
    in_specs.append(pl.BlockSpec((cout, cin), lambda i: (0, 0)))
    args.append(w.astype(_MXU_DTYPE))

    return pl.pallas_call(
        kernel,
        out_shape=(jax.ShapeDtypeStruct((cout, mp), _ACT_DTYPE),
                   jax.ShapeDtypeStruct((ntiles, cout, 1), jnp.float32),
                   jax.ShapeDtypeStruct((ntiles, cout, 1), jnp.float32)),
        grid=(ntiles,),
        in_specs=in_specs,
        out_specs=(pl.BlockSpec((cout, tm), lambda i: (0, i)),
                   pl.BlockSpec((1, cout, 1), lambda i: (i, 0, 0)),
                   pl.BlockSpec((1, cout, 1), lambda i: (i, 0, 0))),
        compiler_params=pltpu.CompilerParams(
            dimension_semantics=("parallel",),
            vmem_limit_bytes=_VMEM_LIMIT),
    )(*args)


# --------------------------- BN+ReLU+max-over-K kernel ------------------------

def _bn_relu_maxk_kernel(y_ref, s_ref, t_ref, o_ref):
    # Block layout keeps the query-point axis S on the 128 lanes and K on the
    # sublane axis, so every vreg is lane-dense and the K-max is a cheap
    # sublane/XLU reduce.
    y = y_ref[...].astype(jnp.float32)[:, 0]                   # (C, K, ts)
    z = jnp.maximum(y * s_ref[...] + t_ref[...], 0.0)
    o_ref[0] = jnp.max(z, axis=1)                              # (C, ts)


def bn_relu_maxk(y4, scale, shift, *, ts):
    """y4: [C, B, K, S] bf16 -> [B, C, S] f32  (== relu(bn(y)) then torch.max over K)."""
    c, b, k, s = y4.shape
    return pl.pallas_call(
        _bn_relu_maxk_kernel,
        out_shape=jax.ShapeDtypeStruct((b, c, s), jnp.float32),
        grid=(b, s // ts),
        in_specs=[pl.BlockSpec((c, 1, k, ts), lambda bi, si: (0, bi, 0, si)),
                  pl.BlockSpec((c, 1, 1), lambda bi, si: (0, 0, 0)),
                  pl.BlockSpec((c, 1, 1), lambda bi, si: (0, 0, 0))],
        out_specs=pl.BlockSpec((1, c, ts), lambda bi, si: (bi, 0, si)),
        compiler_params=pltpu.CompilerParams(
            dimension_semantics=("parallel", "parallel"),
            vmem_limit_bytes=_VMEM_LIMIT),
    )(y4, scale.reshape(c, 1, 1), shift.reshape(c, 1, 1))


# --------------------------- farthest-point-sampling kernel -------------------

def _fps_kernel(xyz_ref, seed_ref, out_ref, *, npoint, n, b):
    # Whole FPS loop lives in VMEM: no per-iteration XLA dispatch and no HBM
    # round trip of the [B, N] distance buffer.
    x0 = xyz_ref[0]
    x1 = xyz_ref[1]
    x2 = xyz_ref[2]
    lane = lax.broadcasted_iota(jnp.int32, (b, n), 1)
    cols = lax.broadcasted_iota(jnp.int32, (b, npoint), 1)

    def body(i, carry):
        distance, farthest, cents = carry
        cents = jnp.where(cols == i, farthest, cents)
        sel = (lane == farthest).astype(jnp.float32)           # one-hot row gather
        cx = jnp.sum(x0 * sel, axis=1, keepdims=True)
        cy = jnp.sum(x1 * sel, axis=1, keepdims=True)
        cz = jnp.sum(x2 * sel, axis=1, keepdims=True)
        d = (x0 - cx) ** 2 + (x1 - cy) ** 2 + (x2 - cz) ** 2
        distance = jnp.minimum(distance, d)
        mx = jnp.max(distance, axis=1, keepdims=True)
        farthest = jnp.min(jnp.where(distance >= mx, lane, n), axis=1, keepdims=True)
        return distance, farthest, cents

    init = (jnp.full((b, n), 1e10, jnp.float32),
            seed_ref[...],
            jnp.zeros((b, npoint), jnp.int32))
    _, _, cents = lax.fori_loop(0, npoint, body, init)
    out_ref[...] = cents


def farthest_point_sample(xyz_cb, seed, npoint):
    """xyz_cb: [3, B, N] f32, seed: [B] int32 -> centroids [B, npoint] int32."""
    _, b, n = xyz_cb.shape
    kernel = functools.partial(_fps_kernel, npoint=npoint, n=n, b=b)
    return pl.pallas_call(
        kernel,
        out_shape=jax.ShapeDtypeStruct((b, npoint), jnp.int32),
        grid=(1,),
        in_specs=[pl.BlockSpec((3, b, n), lambda i: (0, 0, 0)),
                  pl.BlockSpec((b, 1), lambda i: (0, 0))],
        out_specs=pl.BlockSpec((b, npoint), lambda i: (0, 0)),
        compiler_params=pltpu.CompilerParams(
            dimension_semantics=("arbitrary",),
            vmem_limit_bytes=_VMEM_LIMIT),
    )(xyz_cb, seed.reshape(b, 1).astype(jnp.int32))


# --------------------------- plain-JAX glue ----------------------------------

def _bn_scale_shift(psum, psumsq, gamma, beta, count):
    """Finalize training-mode BatchNorm (biased batch stats) into scale/shift."""
    s1 = jnp.sum(psum, axis=0)[:, 0]
    s2 = jnp.sum(psumsq, axis=0)[:, 0]
    mean = s1 / count
    var = jnp.maximum(s2 / count - mean * mean, 0.0)
    scale = gamma * lax.rsqrt(var + _BN_EPS)
    shift = beta - mean * scale
    return scale, shift


def square_distance(src, dst):
    dist = -2.0 * jnp.einsum("bnc,bmc->bnm", src, dst)
    dist = dist + jnp.sum(src ** 2, -1)[:, :, None]
    dist = dist + jnp.sum(dst ** 2, -1)[:, None, :]
    return dist


def query_ball_point(radius, nsample, xyz, new_xyz):
    # TODO(synk): a dedicated Pallas partial-selection kernel could replace the
    # XLA top_k; top_k already avoids the full O(N log N) sort over N.
    B, N, _ = xyz.shape
    S = new_xyz.shape[1]
    sqrdists = square_distance(new_xyz, xyz)                         # [B,S,N]
    idx = jnp.broadcast_to(jnp.arange(N, dtype=jnp.int32), (B, S, N))
    keyed = jnp.where(sqrdists > radius ** 2, N, idx)
    group_idx = -lax.top_k(-keyed, nsample)[0]                       # nsample smallest
    group_first = group_idx[:, :, :1]
    group_idx = jnp.where(group_idx == N, group_first, group_idx)
    return group_idx


# --------------------------- module ------------------------------------------

class PointNetSetAbstractionMsgPallas:
    def __init__(self, npoint, radius_list, nsample_list, in_channel, mlp_list, key):
        self.npoint = npoint
        self.radius_list = radius_list
        self.nsample_list = nsample_list
        self.params = []                                  # per scale, per layer
        for mlp in mlp_list:
            last = in_channel + 3
            layers = []
            for out_c in mlp:
                key, k1 = jax.random.split(key)
                bound = 1.0 / (last ** 0.5)
                # Conv2d(last, out_c, 1) weight stored as [Cout, Cin].  The conv bias
                # is omitted: it cancels under the training-mode BatchNorm that follows.
                w = jax.random.uniform(k1, (out_c, last), jnp.float32, -bound, bound)
                gamma = jnp.ones((out_c,), jnp.float32)   # BN weight init
                beta = jnp.zeros((out_c,), jnp.float32)   # BN bias init
                layers.append((w, gamma, beta))
                last = out_c
            self.params.append(layers)

    def __call__(self, xyz, points, fps_seed):
        # xyz: [B, 3, N], points: [B, D, N]  (PyTorch conventions)
        B = xyz.shape[0]
        N = xyz.shape[2]
        S = self.npoint

        xyz_cb = jnp.transpose(xyz, (1, 0, 2))                         # [3, B, N]
        xyz_bnc = jnp.transpose(xyz, (0, 2, 1))                        # [B, N, 3]
        pts_cb = None
        if points is not None:
            pts_cb = jnp.transpose(points, (1, 0, 2))                  # [D, B, N]

        fps_idx = farthest_point_sample(xyz_cb, fps_seed, S)           # [B, S]
        new_xyz = jnp.take_along_axis(xyz_bnc, fps_idx[..., None], axis=1)  # [B,S,3]
        new_xyz_cb = jnp.transpose(new_xyz, (2, 0, 1))                 # [3, B, S]

        batch_off = (jnp.arange(B, dtype=jnp.int32) * N)[:, None, None]

        new_points_list = []
        for i, radius in enumerate(self.radius_list):
            K = self.nsample_list[i]
            group_idx = query_ball_point(radius, K, xyz_bnc, new_xyz)  # [B,S,K]

            # Channels-first gather directly into the [C, B, K, S] kernel layout
            # (flat gather index; no post-gather transpose of the big intermediate).
            idx_kms = jnp.transpose(group_idx, (0, 2, 1))              # [B,K,S]
            flat_idx = (idx_kms + batch_off).reshape(-1)               # [B*K*S]
            g_xyz = jnp.take(xyz_cb.reshape(3, B * N), flat_idx, axis=1)
            g_xyz = g_xyz.reshape(3, B, K, S) - new_xyz_cb[:, :, None, :]
            if pts_cb is not None:
                D = pts_cb.shape[0]
                g_pts = jnp.take(pts_cb.reshape(D, B * N), flat_idx, axis=1)
                grouped = jnp.concatenate([g_pts.reshape(D, B, K, S), g_xyz], axis=0)
            else:
                grouped = g_xyz
            cin = grouped.shape[0]
            M = B * K * S

            # Pad channels to the sublane packing and the point axis to the column tile.
            cin_pad = _round_up(cin, 8)
            tm, mp = _pick_tiling(M)
            feat = grouped.reshape(cin, M).astype(_ACT_DTYPE)
            if cin_pad != cin or mp != M:
                feat = jnp.pad(feat, ((0, cin_pad - cin), (0, mp - M)))

            scale = shift = None
            first = True
            for (w, gamma, beta) in self.params[i]:
                if first and cin_pad != cin:
                    w = jnp.pad(w, ((0, 0), (0, cin_pad - cin)))       # zero cols: no-op
                first = False
                y, psum, psumsq = mlp_layer(feat, w, scale, shift, m_real=M, tm=tm)
                scale, shift = _bn_scale_shift(psum, psumsq, gamma, beta, float(M))
                feat = y
            cout = feat.shape[0]

            y4 = feat[:, :M].reshape(cout, B, K, S)
            ts = _pick_pool_tile(S, cout, K)
            pooled = bn_relu_maxk(y4, scale, shift, ts=ts)             # [B, cout, S]
            new_points_list.append(pooled)

        new_xyz_out = jnp.transpose(new_xyz, (0, 2, 1))                # [B, 3, S]
        new_points_concat = jnp.concatenate(new_points_list, axis=1)   # [B, D', S]
        return new_xyz_out, new_points_concat


# --------------------------- main --------------------------------------------

if __name__ == "__main__":
    key = jax.random.PRNGKey(0)
    k_xyz, k_pts, k_param, k_fps = jax.random.split(key, 4)

    B, N, D = 2, 16, 4          # in_channel = 4
    npoint = 8
    radius_list = [0.3, 0.6]
    nsample_list = [8, 16]
    mlp_list = [[8, 16], [8, 16]]

    xyz = jax.random.uniform(k_xyz, (B, 3, N), jnp.float32)            # [B, 3, N]
    points = jax.random.normal(k_pts, (B, D, N), jnp.float32)          # [B, D, N]
    fps_seed = jax.random.randint(k_fps, (B,), 0, N, dtype=jnp.int32)  # random start points

    module = PointNetSetAbstractionMsgPallas(
        npoint, radius_list, nsample_list, D, mlp_list, k_param)

    fwd = jax.jit(module.__call__)
    new_xyz, new_points = fwd(xyz, points, fps_seed)
    jax.block_until_ready((new_xyz, new_points))

    assert new_xyz.shape == (B, 3, npoint)
    assert new_points.shape == (B, sum(m[-1] for m in mlp_list), npoint)
    assert bool(jnp.all(jnp.isfinite(new_points)))
    print("KERNEL_OK")
</pallas_src>

<mosaic_0001>
module attributes {stable_mosaic.version = 11 : i64} {
  func.func @_fps_kernel(%arg0: i32, %arg1: memref<3x2x16xf32, #tpu.memory_space<vmem>>, %arg2: memref<2x1xi32, #tpu.memory_space<vmem>>, %arg3: memref<2x8xi32, #tpu.memory_space<vmem>>) attributes {dimension_semantics = [#tpu.dimension_semantics<arbitrary>], iteration_bounds = array<i64: 1>, scalar_prefetch = 0 : i64, scratch_operands = 0 : i64, tpu.core_type = #tpu.core_type<tc>, window_params = [{pipeline_mode = #tpu.pipeline_mode<synchronous>, transform_indices = @transform_0, window_bounds = array<i64: 3, 2, 16>}, {pipeline_mode = #tpu.pipeline_mode<synchronous>, transform_indices = @transform_1, window_bounds = array<i64: 2, 1>}, {pipeline_mode = #tpu.pipeline_mode<synchronous>, transform_indices = @transform_2, window_bounds = array<i64: 2, 8>}]} {
    %c0 = arith.constant 0 : index
    %c0_0 = arith.constant 0 : index
    %c0_1 = arith.constant 0 : index
    %0 = vector.load %arg1[%c0, %c0_0, %c0_1] : memref<3x2x16xf32, #tpu.memory_space<vmem>>, vector<1x2x16xf32>
    %1 = vector.shape_cast %0 : vector<1x2x16xf32> to vector<2x16xf32>
    %c1 = arith.constant 1 : index
    %c0_2 = arith.constant 0 : index
    %c0_3 = arith.constant 0 : index
    %2 = vector.load %arg1[%c1, %c0_2, %c0_3] : memref<3x2x16xf32, #tpu.memory_space<vmem>>, vector<1x2x16xf32>
    %3 = vector.shape_cast %2 : vector<1x2x16xf32> to vector<2x16xf32>
    %c2 = arith.constant 2 : index
    %c0_4 = arith.constant 0 : index
    %c0_5 = arith.constant 0 : index
    %4 = vector.load %arg1[%c2, %c0_4, %c0_5] : memref<3x2x16xf32, #tpu.memory_space<vmem>>, vector<1x2x16xf32>
    %5 = vector.shape_cast %4 : vector<1x2x16xf32> to vector<2x16xf32>
    %6 = tpu.iota {dimensions = array<i32: 1>} : vector<2x16xi32>
    %7 = tpu.iota {dimensions = array<i32: 1>} : vector<2x8xi32>
    %cst = arith.constant 1.000000e+10 : f32
    %8 = vector.broadcast %cst : f32 to vector<2x16xf32>
    %c0_6 = arith.constant 0 : index
    %c0_7 = arith.constant 0 : index
    %9 = vector.load %arg2[%c0_6, %c0_7] : memref<2x1xi32, #tpu.memory_space<vmem>>, vector<2x1xi32>
    %c0_i32 = arith.constant 0 : i32
    %10 = vector.broadcast %c0_i32 : i32 to vector<2x8xi32>
    %c0_i32_8 = arith.constant 0 : i32
    %c8_i32 = arith.constant 8 : i32
    %11 = arith.addi %c0_i32_8, %c8_i32 : i32
    %c1_i32 = arith.constant 1 : i32
    %12:3 = scf.for %arg4 = %c0_i32_8 to %11 step %c1_i32 iter_args(%arg5 = %8, %arg6 = %9, %arg7 = %10) -> (vector<2x16xf32>, vector<2x1xi32>, vector<2x8xi32>)  : i32 {
      %14 = vector.broadcast %arg4 : i32 to vector<2x8xi32>
      %15 = arith.cmpi eq, %7, %14 : vector<2x8xi32>
      %16 = vector.shape_cast %arg6 : vector<2x1xi32> to vector<2x1xi32>
      %17 = vector.broadcast %16 : vector<2x1xi32> to vector<2x8xi32>
      %18 = arith.select %15, %17, %arg7 : vector<2x8xi1>, vector<2x8xi32>
      %19 = vector.broadcast %arg6 : vector<2x1xi32> to vector<2x16xi32>
      %20 = arith.cmpi eq, %6, %19 : vector<2x16xi32>
      %21 = arith.extui %20 : vector<2x16xi1> to vector<2x16xi32>
      %22 = arith.sitofp %21 : vector<2x16xi32> to vector<2x16xf32>
      %23 = arith.mulf %1, %22 : vector<2x16xf32>
      %cst_12 = arith.constant dense<0.000000e+00> : vector<2xf32>
      %24 = vector.multi_reduction <add>, %23, %cst_12 [1] : vector<2x16xf32> to vector<2xf32>
      %25 = vector.shape_cast %24 : vector<2xf32> to vector<2x1xf32>
      %26 = arith.mulf %3, %22 : vector<2x16xf32>
      %cst_13 = arith.constant dense<0.000000e+00> : vector<2xf32>
      %27 = vector.multi_reduction <add>, %26, %cst_13 [1] : vector<2x16xf32> to vector<2xf32>
      %28 = vector.shape_cast %27 : vector<2xf32> to vector<2x1xf32>
      %29 = arith.mulf %5, %22 : vector<2x16xf32>
      %cst_14 = arith.constant dense<0.000000e+00> : vector<2xf32>
      %30 = vector.multi_reduction <add>, %29, %cst_14 [1] : vector<2x16xf32> to vector<2xf32>
      %31 = vector.shape_cast %30 : vector<2xf32> to vector<2x1xf32>
      %32 = vector.broadcast %25 : vector<2x1xf32> to vector<2x16xf32>
      %33 = arith.subf %1, %32 : vector<2x16xf32>
      %34 = arith.mulf %33, %33 : vector<2x16xf32>
      %35 = vector.broadcast %28 : vector<2x1xf32> to vector<2x16xf32>
      %36 = arith.subf %3, %35 : vector<2x16xf32>
      %37 = arith.mulf %36, %36 : vector<2x16xf32>
      %38 = arith.addf %34, %37 : vector<2x16xf32>
      %39 = vector.broadcast %31 : vector<2x1xf32> to vector<2x16xf32>
      %40 = arith.subf %5, %39 : vector<2x16xf32>
      %41 = arith.mulf %40, %40 : vector<2x16xf32>
      %42 = arith.addf %38, %41 : vector<2x16xf32>
      %43 = arith.minimumf %arg5, %42 : vector<2x16xf32>
      %cst_15 = arith.constant dense<0xFF800000> : vector<2xf32>
      %44 = vector.multi_reduction <maximumf>, %43, %cst_15 [1] : vector<2x16xf32> to vector<2xf32>
      %45 = vector.shape_cast %44 : vector<2xf32> to vector<2x1xf32>
      %46 = vector.broadcast %45 : vector<2x1xf32> to vector<2x16xf32>
      %47 = arith.cmpf oge, %43, %46 : vector<2x16xf32>
      %c16_i32 = arith.constant 16 : i32
      %48 = vector.broadcast %c16_i32 : i32 to vector<2x16xi32>
      %49 = arith.select %47, %6, %48 : vector<2x16xi1>, vector<2x16xi32>
      %cst_16 = arith.constant dense<2147483647> : vector<2xi32>
      %50 = vector.multi_reduction <minsi>, %49, %cst_16 [1] : vector<2x16xi32> to vector<2xi32>
      %51 = vector.shape_cast %50 : vector<2xi32> to vector<2x1xi32>
      scf.yield %43, %51, %18 : vector<2x16xf32>, vector<2x1xi32>, vector<2x8xi32>
    }
    %c8_i32_9 = arith.constant 8 : i32
    %c0_10 = arith.constant 0 : index
    %c0_11 = arith.constant 0 : index
    %13 = vector.load %arg3[%c0_10, %c0_11] : memref<2x8xi32, #tpu.memory_space<vmem>>, vector<2x8xi32>
    tpu.vector_store %arg3[%c0_10, %c0_11], %12#2 {strides = array<i32>} : memref<2x8xi32, #tpu.memory_space<vmem>>, vector<2x8xi32>,
    return
  }
  func.func @transform_0(%arg0: i32) -> (i32, i32, i32) {
    %c0_i32 = arith.constant 0 : i32
    %c0_i32_0 = arith.constant 0 : i32
    %c0_i32_1 = arith.constant 0 : i32
    %c0_i32_2 = arith.constant 0 : i32
    return %c0_i32, %c0_i32_0, %c0_i32_1 : i32, i32, i32
  }
  func.func @transform_1(%arg0: i32) -> (i32, i32) {
    %c0_i32 = arith.constant 0 : i32
    %c0_i32_0 = arith.constant 0 : i32
    %c0_i32_1 = arith.constant 0 : i32
    return %c0_i32, %c0_i32_0 : i32, i32
  }
  func.func @transform_2(%arg0: i32) -> (i32, i32) {
    %c0_i32 = arith.constant 0 : i32
    %c0_i32_0 = arith.constant 0 : i32
    %c0_i32_1 = arith.constant 0 : i32
    return %c0_i32, %c0_i32_0 : i32, i32
  }
}

module attributes {stable_mosaic.version = 11 : i64} {
  func.func @_mlp_layer_kernel(%arg0: i32, %arg1: memref<8x128xbf16, #tpu.memory_space<vmem>>, %arg2: memref<8x8xbf16, #tpu.memory_space<vmem>>, %arg3: memref<8x128xbf16, #tpu.memory_space<vmem>>, %arg4: memref<1x8x1xf32, #tpu.memory_space<vmem>>, %arg5: memref<1x8x1xf32, #tpu.memory_space<vmem>>) attributes {dimension_semantics = [#tpu.dimension_semantics<parallel>], iteration_bounds = array<i64: 1>, scalar_prefetch = 0 : i64, scratch_operands = 0 : i64, tpu.core_type = #tpu.core_type<tc>, window_params = [{transform_indices = @transform_0, window_bounds = array<i64: 8, 128>}, {pipeline_mode = #tpu.pipeline_mode<synchronous>, transform_indices = @transform_1, window_bounds = array<i64: 8, 8>}, {transform_indices = @transform_2, window_bounds = array<i64: 8, 128>}, {transform_indices = @transform_3, window_bounds = array<i64: 1, 8, 1>}, {transform_indices = @transform_4, window_bounds = array<i64: 1, 8, 1>}]} {
    %c0 = arith.constant 0 : index
    %c0_0 = arith.constant 0 : index
    %0 = vector.load %arg1[%c0, %c0_0] : memref<8x128xbf16, #tpu.memory_space<vmem>>, vector<8x128xbf16>
    %c0_1 = arith.constant 0 : index
    %c0_2 = arith.constant 0 : index
    %1 = vector.load %arg2[%c0_1, %c0_2] : memref<8x8xbf16, #tpu.memory_space<vmem>>, vector<8x8xbf16>
    %cst = arith.constant dense<0.000000e+00> : vector<8x128xf32>
    %2 = tpu.matmul %1, %0, %cst {dimension_numbers = #tpu.dot_dimension_numbers<[1], [0], [0], [1], [0, 0, 1, 1], [], []>} : vector<8x8xbf16>, vector<8x128xbf16>, vector<8x128xf32> -> vector<8x128xf32>
    %3 = arith.truncf %2 : vector<8x128xf32> to vector<8x128xbf16>
    %c0_3 = arith.constant 0 : index
    %c0_4 = arith.constant 0 : index
    %4 = vector.load %arg3[%c0_3, %c0_4] : memref<8x128xbf16, #tpu.memory_space<vmem>>, vector<8x128xbf16>
    tpu.vector_store %arg3[%c0_3, %c0_4], %3 {strides = array<i32>} : memref<8x128xbf16, #tpu.memory_space<vmem>>, vector<8x128xbf16>,
    %cst_5 = arith.constant dense<0.000000e+00> : vector<8xf32>
    %5 = vector.multi_reduction <add>, %2, %cst_5 [1] : vector<8x128xf32> to vector<8xf32>
    %6 = vector.shape_cast %5 : vector<8xf32> to vector<8x1xf32>
    %7 = vector.shape_cast %6 : vector<8x1xf32> to vector<1x8x1xf32>
    %c0_6 = arith.constant 0 : index
    %c0_7 = arith.constant 0 : index
    %c0_8 = arith.constant 0 : index
    %8 = vector.load %arg4[%c0_6, %c0_7, %c0_8] : memref<1x8x1xf32, #tpu.memory_space<vmem>>, vector<1x8x1xf32>
    tpu.vector_store %arg4[%c0_6, %c0_7, %c0_8], %7 {strides = array<i32>} : memref<1x8x1xf32, #tpu.memory_space<vmem>>, vector<1x8x1xf32>,
    %9 = arith.mulf %2, %2 : vector<8x128xf32>
    %cst_9 = arith.constant dense<0.000000e+00> : vector<8xf32>
    %10 = vector.multi_reduction <add>, %9, %cst_9 [1] : vector<8x128xf32> to vector<8xf32>
    %11 = vector.shape_cast %10 : vector<8xf32> to vector<8x1xf32>
    %12 = vector.shape_cast %11 : vector<8x1xf32> to vector<1x8x1xf32>
    %c0_10 = arith.constant 0 : index
    %c0_11 = arith.constant 0 : index
    %c0_12 = arith.constant 0 : index
    %13 = vector.load %arg5[%c0_10, %c0_11, %c0_12] : memref<1x8x1xf32, #tpu.memory_space<vmem>>, vector<1x8x1xf32>
    tpu.vector_store %arg5[%c0_10, %c0_11, %c0_12], %12 {strides = array<i32>} : memref<1x8x1xf32, #tpu.memory_space<vmem>>, vector<1x8x1xf32>,
    return
  }
  func.func @transform_0(%arg0: i32) -> (i32, i32) {
    %c0_i32 = arith.constant 0 : i32
    %c0_i32_0 = arith.constant 0 : i32
    return %c0_i32, %arg0 : i32, i32
  }
  func.func @transform_1(%arg0: i32) -> (i32, i32) {
    %c0_i32 = arith.constant 0 : i32
    %c0_i32_0 = arith.constant 0 : i32
    %c0_i32_1 = arith.constant 0 : i32
    return %c0_i32, %c0_i32_0 : i32, i32
  }
  func.func @transform_2(%arg0: i32) -> (i32, i32) {
    %c0_i32 = arith.constant 0 : i32
    %c0_i32_0 = arith.constant 0 : i32
    return %c0_i32, %arg0 : i32, i32
  }
  func.func @transform_3(%arg0: i32) -> (i32, i32, i32) {
    %c0_i32 = arith.constant 0 : i32
    %c0_i32_0 = arith.constant 0 : i32
    %c0_i32_1 = arith.constant 0 : i32
    return %arg0, %c0_i32, %c0_i32_0 : i32, i32, i32
  }
  func.func @transform_4(%arg0: i32) -> (i32, i32, i32) {
    %c0_i32 = arith.constant 0 : i32
    %c0_i32_0 = arith.constant 0 : i32
    %c0_i32_1 = arith.constant 0 : i32
    return %arg0, %c0_i32, %c0_i32_0 : i32, i32, i32
  }
}

module attributes {stable_mosaic.version = 11 : i64} {
  func.func @_mlp_layer_kernel(%arg0: i32, %arg1: memref<8x128xbf16, #tpu.memory_space<vmem>>, %arg2: memref<8x1xf32, #tpu.memory_space<vmem>>, %arg3: memref<8x1xf32, #tpu.memory_space<vmem>>, %arg4: memref<16x8xbf16, #tpu.memory_space<vmem>>, %arg5: memref<16x128xbf16, #tpu.memory_space<vmem>>, %arg6: memref<1x16x1xf32, #tpu.memory_space<vmem>>, %arg7: memref<1x16x1xf32, #tpu.memory_space<vmem>>) attributes {dimension_semantics = [#tpu.dimension_semantics<parallel>], iteration_bounds = array<i64: 1>, scalar_prefetch = 0 : i64, scratch_operands = 0 : i64, tpu.core_type = #tpu.core_type<tc>, window_params = [{transform_indices = @transform_0, window_bounds = array<i64: 8, 128>}, {pipeline_mode = #tpu.pipeline_mode<synchronous>, transform_indices = @transform_1, window_bounds = array<i64: 8, 1>}, {pipeline_mode = #tpu.pipeline_mode<synchronous>, transform_indices = @transform_2, window_bounds = array<i64: 8, 1>}, {pipeline_mode = #tpu.pipeline_mode<synchronous>, transform_indices = @transform_3, window_bounds = array<i64: 16, 8>}, {transform_indices = @transform_4, window_bounds = array<i64: 16, 128>}, {transform_indices = @transform_5, window_bounds = array<i64: 1, 16, 1>}, {transform_indices = @transform_6, window_bounds = array<i64: 1, 16, 1>}]} {
    %c0 = arith.constant 0 : index
    %c0_0 = arith.constant 0 : index
    %0 = vector.load %arg1[%c0, %c0_0] : memref<8x128xbf16, #tpu.memory_space<vmem>>, vector<8x128xbf16>
    %1 = arith.extf %0 : vector<8x128xbf16> to vector<8x128xf32>
    %c0_1 = arith.constant 0 : index
    %c0_2 = arith.constant 0 : index
    %2 = vector.load %arg2[%c0_1, %c0_2] : memref<8x1xf32, #tpu.memory_space<vmem>>, vector<8x1xf32>
    %3 = vector.broadcast %2 : vector<8x1xf32> to vector<8x128xf32>
    %4 = arith.mulf %1, %3 : vector<8x128xf32>
    %c0_3 = arith.constant 0 : index
    %c0_4 = arith.constant 0 : index
    %5 = vector.load %arg3[%c0_3, %c0_4] : memref<8x1xf32, #tpu.memory_space<vmem>>, vector<8x1xf32>
    %6 = vector.broadcast %5 : vector<8x1xf32> to vector<8x128xf32>
    %7 = arith.addf %4, %6 : vector<8x128xf32>
    %cst = arith.constant 0.000000e+00 : f32
    %8 = vector.broadcast %cst : f32 to vector<8x128xf32>
    %9 = arith.maximumf %7, %8 : vector<8x128xf32>
    %10 = arith.truncf %9 : vector<8x128xf32> to vector<8x128xbf16>
    %c0_5 = arith.constant 0 : index
    %c0_6 = arith.constant 0 : index
    %11 = vector.load %arg4[%c0_5, %c0_6] : memref<16x8xbf16, #tpu.memory_space<vmem>>, vector<16x8xbf16>
    %cst_7 = arith.constant dense<0.000000e+00> : vector<16x128xf32>
    %12 = tpu.matmul %11, %10, %cst_7 {dimension_numbers = #tpu.dot_dimension_numbers<[1], [0], [0], [1], [0, 0, 1, 1], [], []>} : vector<16x8xbf16>, vector<8x128xbf16>, vector<16x128xf32> -> vector<16x128xf32>
    %13 = arith.truncf %12 : vector<16x128xf32> to vector<16x128xbf16>
    %c0_8 = arith.constant 0 : index
    %c0_9 = arith.constant 0 : index
    %14 = vector.load %arg5[%c0_8, %c0_9] : memref<16x128xbf16, #tpu.memory_space<vmem>>, vector<16x128xbf16>
    tpu.vector_store %arg5[%c0_8, %c0_9], %13 {strides = array<i32>} : memref<16x128xbf16, #tpu.memory_space<vmem>>, vector<16x128xbf16>,
    %cst_10 = arith.constant dense<0.000000e+00> : vector<16xf32>
    %15 = vector.multi_reduction <add>, %12, %cst_10 [1] : vector<16x128xf32> to vector<16xf32>
    %16 = vector.shape_cast %15 : vector<16xf32> to vector<16x1xf32>
    %17 = vector.shape_cast %16 : vector<16x1xf32> to vector<1x16x1xf32>
    %c0_11 = arith.constant 0 : index
    %c0_12 = arith.constant 0 : index
    %c0_13 = arith.constant 0 : index
    %18 = vector.load %arg6[%c0_11, %c0_12, %c0_13] : memref<1x16x1xf32, #tpu.memory_space<vmem>>, vector<1x16x1xf32>
    tpu.vector_store %arg6[%c0_11, %c0_12, %c0_13], %17 {strides = array<i32>} : memref<1x16x1xf32, #tpu.memory_space<vmem>>, vector<1x16x1xf32>,
    %19 = arith.mulf %12, %12 : vector<16x128xf32>
    %cst_14 = arith.constant dense<0.000000e+00> : vector<16xf32>
    %20 = vector.multi_reduction <add>, %19, %cst_14 [1] : vector<16x128xf32> to vector<16xf32>
    %21 = vector.shape_cast %20 : vector<16xf32> to vector<16x1xf32>
    %22 = vector.shape_cast %21 : vector<16x1xf32> to vector<1x16x1xf32>
    %c0_15 = arith.constant 0 : index
    %c0_16 = arith.constant 0 : index
    %c0_17 = arith.constant 0 : index
    %23 = vector.load %arg7[%c0_15, %c0_16, %c0_17] : memref<1x16x1xf32, #tpu.memory_space<vmem>>, vector<1x16x1xf32>
    tpu.vector_store %arg7[%c0_15, %c0_16, %c0_17], %22 {strides = array<i32>} : memref<1x16x1xf32, #tpu.memory_space<vmem>>, vector<1x16x1xf32>,
    return
  }
  func.func @transform_0(%arg0: i32) -> (i32, i32) {
    %c0_i32 = arith.constant 0 : i32
    %c0_i32_0 = arith.constant 0 : i32
    return %c0_i32, %arg0 : i32, i32
  }
  func.func @transform_1(%arg0: i32) -> (i32, i32) {
    %c0_i32 = arith.constant 0 : i32
    %c0_i32_0 = arith.constant 0 : i32
    %c0_i32_1 = arith.constant 0 : i32
    return %c0_i32, %c0_i32_0 : i32, i32
  }
  func.func @transform_2(%arg0: i32) -> (i32, i32) {
    %c0_i32 = arith.constant 0 : i32
    %c0_i32_0 = arith.constant 0 : i32
    %c0_i32_1 = arith.constant 0 : i32
    return %c0_i32, %c0_i32_0 : i32, i32
  }
  func.func @transform_3(%arg0: i32) -> (i32, i32) {
    %c0_i32 = arith.constant 0 : i32
    %c0_i32_0 = arith.constant 0 : i32
    %c0_i32_1 = arith.constant 0 : i32
    return %c0_i32, %c0_i32_0 : i32, i32
  }
  func.func @transform_4(%arg0: i32) -> (i32, i32) {
    %c0_i32 = arith.constant 0 : i32
    %c0_i32_0 = arith.constant 0 : i32
    return %c0_i32, %arg0 : i32, i32
  }
  func.func @transform_5(%arg0: i32) -> (i32, i32, i32) {
    %c0_i32 = arith.constant 0 : i32
    %c0_i32_0 = arith.constant 0 : i32
    %c0_i32_1 = arith.constant 0 : i32
    return %arg0, %c0_i32, %c0_i32_0 : i32, i32, i32
  }
  func.func @transform_6(%arg0: i32) -> (i32, i32, i32) {
    %c0_i32 = arith.constant 0 : i32
    %c0_i32_0 = arith.constant 0 : i32
    %c0_i32_1 = arith.constant 0 : i32
    return %arg0, %c0_i32, %c0_i32_0 : i32, i32, i32
  }
}

module attributes {stable_mosaic.version = 11 : i64} {
  func.func @_bn_relu_maxk_kernel(%arg0: i32, %arg1: i32, %arg2: memref<16x1x8x8xbf16, #tpu.memory_space<vmem>>, %arg3: memref<16x1x1xf32, #tpu.memory_space<vmem>>, %arg4: memref<16x1x1xf32, #tpu.memory_space<vmem>>, %arg5: memref<1x16x8xf32, #tpu.memory_space<vmem>>) attributes {dimension_semantics = [#tpu.dimension_semantics<parallel>, #tpu.dimension_semantics<parallel>], iteration_bounds = array<i64: 2, 1>, scalar_prefetch = 0 : i64, scratch_operands = 0 : i64, tpu.core_type = #tpu.core_type<tc>, window_params = [{transform_indices = @transform_0, window_bounds = array<i64: 16, 1, 8, 8>}, {pipeline_mode = #tpu.pipeline_mode<synchronous>, transform_indices = @transform_1, window_bounds = array<i64: 16, 1, 1>}, {pipeline_mode = #tpu.pipeline_mode<synchronous>, transform_indices = @transform_2, window_bounds = array<i64: 16, 1, 1>}, {transform_indices = @transform_3, window_bounds = array<i64: 1, 16, 8>}]} {
    %c0 = arith.constant 0 : index
    %c0_0 = arith.constant 0 : index
    %c0_1 = arith.constant 0 : index
    %c0_2 = arith.constant 0 : index
    %0 = vector.load %arg2[%c0, %c0_0, %c0_1, %c0_2] : memref<16x1x8x8xbf16, #tpu.memory_space<vmem>>, vector<16x1x8x8xbf16>
    %1 = arith.extf %0 : vector<16x1x8x8xbf16> to vector<16x1x8x8xf32>
    %2 = vector.shape_cast %1 : vector<16x1x8x8xf32> to vector<16x8x8xf32>
    %c0_3 = arith.constant 0 : index
    %c0_4 = arith.constant 0 : index
    %c0_5 = arith.constant 0 : index
    %3 = vector.load %arg3[%c0_3, %c0_4, %c0_5] : memref<16x1x1xf32, #tpu.memory_space<vmem>>, vector<16x1x1xf32>
    %4 = vector.broadcast %3 : vector<16x1x1xf32> to vector<16x8x8xf32>
    %5 = arith.mulf %2, %4 : vector<16x8x8xf32>
    %c0_6 = arith.constant 0 : index
    %c0_7 = arith.constant 0 : index
    %c0_8 = arith.constant 0 : index
    %6 = vector.load %arg4[%c0_6, %c0_7, %c0_8] : memref<16x1x1xf32, #tpu.memory_space<vmem>>, vector<16x1x1xf32>
    %7 = vector.broadcast %6 : vector<16x1x1xf32> to vector<16x8x8xf32>
    %8 = arith.addf %5, %7 : vector<16x8x8xf32>
    %cst = arith.constant 0.000000e+00 : f32
    %9 = vector.broadcast %cst : f32 to vector<16x8x8xf32>
    %10 = arith.maximumf %8, %9 : vector<16x8x8xf32>
    %cst_9 = arith.constant dense<0xFF800000> : vector<16x8xf32>
    %11 = vector.multi_reduction <maximumf>, %10, %cst_9 [1] : vector<16x8x8xf32> to vector<16x8xf32>
    %c0_10 = arith.constant 0 : index
    %c0_11 = arith.constant 0 : index
    %c0_12 = arith.constant 0 : index
    %12 = vector.load %arg5[%c0_10, %c0_11, %c0_12] : memref<1x16x8xf32, #tpu.memory_space<vmem>>, vector<1x16x8xf32>
    %13 = vector.shape_cast %12 : vector<1x16x8xf32> to vector<16x8xf32>
    %14 = vector.shape_cast %11 : vector<16x8xf32> to vector<1x16x8xf32>
    tpu.vector_store %arg5[%c0_10, %c0_11, %c0_12], %14 {strides = array<i32>} : memref<1x16x8xf32, #tpu.memory_space<vmem>>, vector<1x16x8xf32>,
    return
  }
  func.func @transform_0(%arg0: i32, %arg1: i32) -> (i32, i32, i32, i32) {
    %c0_i32 = arith.constant 0 : i32
    %c0_i32_0 = arith.constant 0 : i32
    %c0_i32_1 = arith.constant 0 : i32
    return %c0_i32, %arg0, %c0_i32_0, %arg1 : i32, i32, i32, i32
  }
  func.func @transform_1(%arg0: i32, %arg1: i32) -> (i32, i32, i32) {
    %c0_i32 = arith.constant 0 : i32
    %c0_i32_0 = arith.constant 0 : i32
    %c0_i32_1 = arith.constant 0 : i32
    %c0_i32_2 = arith.constant 0 : i32
    return %c0_i32, %c0_i32_0, %c0_i32_1 : i32, i32, i32
  }
  func.func @transform_2(%arg0: i32, %arg1: i32) -> (i32, i32, i32) {
    %c0_i32 = arith.constant 0 : i32
    %c0_i32_0 = arith.constant 0 : i32
    %c0_i32_1 = arith.constant 0 : i32
    %c0_i32_2 = arith.constant 0 : i32
    return %c0_i32, %c0_i32_0, %c0_i32_1 : i32, i32, i32
  }
  func.func @transform_3(%arg0: i32, %arg1: i32) -> (i32, i32, i32) {
    %c0_i32 = arith.constant 0 : i32
    %c0_i32_0 = arith.constant 0 : i32
    return %arg0, %c0_i32, %arg1 : i32, i32, i32
  }
}

module attributes {stable_mosaic.version = 11 : i64} {
  func.func @_mlp_layer_kernel(%arg0: i32, %arg1: memref<8x256xbf16, #tpu.memory_space<vmem>>, %arg2: memref<8x8xbf16, #tpu.memory_space<vmem>>, %arg3: memref<8x256xbf16, #tpu.memory_space<vmem>>, %arg4: memref<1x8x1xf32, #tpu.memory_space<vmem>>, %arg5: memref<1x8x1xf32, #tpu.memory_space<vmem>>) attributes {dimension_semantics = [#tpu.dimension_semantics<parallel>], iteration_bounds = array<i64: 1>, scalar_prefetch = 0 : i64, scratch_operands = 0 : i64, tpu.core_type = #tpu.core_type<tc>, window_params = [{transform_indices = @transform_0, window_bounds = array<i64: 8, 256>}, {pipeline_mode = #tpu.pipeline_mode<synchronous>, transform_indices = @transform_1, window_bounds = array<i64: 8, 8>}, {transform_indices = @transform_2, window_bounds = array<i64: 8, 256>}, {transform_indices = @transform_3, window_bounds = array<i64: 1, 8, 1>}, {transform_indices = @transform_4, window_bounds = array<i64: 1, 8, 1>}]} {
    %c0 = arith.constant 0 : index
    %c0_0 = arith.constant 0 : index
    %0 = vector.load %arg1[%c0, %c0_0] : memref<8x256xbf16, #tpu.memory_space<vmem>>, vector<8x256xbf16>
    %c0_1 = arith.constant 0 : index
    %c0_2 = arith.constant 0 : index
    %1 = vector.load %arg2[%c0_1, %c0_2] : memref<8x8xbf16, #tpu.memory_space<vmem>>, vector<8x8xbf16>
    %cst = arith.constant dense<0.000000e+00> : vector<8x256xf32>
    %2 = tpu.matmul %1, %0, %cst {dimension_numbers = #tpu.dot_dimension_numbers<[1], [0], [0], [1], [0, 0, 1, 1], [], []>} : vector<8x8xbf16>, vector<8x256xbf16>, vector<8x256xf32> -> vector<8x256xf32>
    %3 = arith.truncf %2 : vector<8x256xf32> to vector<8x256xbf16>
    %c0_3 = arith.constant 0 : index
    %c0_4 = arith.constant 0 : index
    %4 = vector.load %arg3[%c0_3, %c0_4] : memref<8x256xbf16, #tpu.memory_space<vmem>>, vector<8x256xbf16>
    tpu.vector_store %arg3[%c0_3, %c0_4], %3 {strides = array<i32>} : memref<8x256xbf16, #tpu.memory_space<vmem>>, vector<8x256xbf16>,
    %cst_5 = arith.constant dense<0.000000e+00> : vector<8xf32>
    %5 = vector.multi_reduction <add>, %2, %cst_5 [1] : vector<8x256xf32> to vector<8xf32>
    %6 = vector.shape_cast %5 : vector<8xf32> to vector<8x1xf32>
    %7 = vector.shape_cast %6 : vector<8x1xf32> to vector<1x8x1xf32>
    %c0_6 = arith.constant 0 : index
    %c0_7 = arith.constant 0 : index
    %c0_8 = arith.constant 0 : index
    %8 = vector.load %arg4[%c0_6, %c0_7, %c0_8] : memref<1x8x1xf32, #tpu.memory_space<vmem>>, vector<1x8x1xf32>
    tpu.vector_store %arg4[%c0_6, %c0_7, %c0_8], %7 {strides = array<i32>} : memref<1x8x1xf32, #tpu.memory_space<vmem>>, vector<1x8x1xf32>,
    %9 = arith.mulf %2, %2 : vector<8x256xf32>
    %cst_9 = arith.constant dense<0.000000e+00> : vector<8xf32>
    %10 = vector.multi_reduction <add>, %9, %cst_9 [1] : vector<8x256xf32> to vector<8xf32>
    %11 = vector.shape_cast %10 : vector<8xf32> to vector<8x1xf32>
    %12 = vector.shape_cast %11 : vector<8x1xf32> to vector<1x8x1xf32>
    %c0_10 = arith.constant 0 : index
    %c0_11 = arith.constant 0 : index
    %c0_12 = arith.constant 0 : index
    %13 = vector.load %arg5[%c0_10, %c0_11, %c0_12] : memref<1x8x1xf32, #tpu.memory_space<vmem>>, vector<1x8x1xf32>
    tpu.vector_store %arg5[%c0_10, %c0_11, %c0_12], %12 {strides = array<i32>} : memref<1x8x1xf32, #tpu.memory_space<vmem>>, vector<1x8x1xf32>,
    return
  }
  func.func @transform_0(%arg0: i32) -> (i32, i32) {
    %c0_i32 = arith.constant 0 : i32
    %c0_i32_0 = arith.constant 0 : i32
    return %c0_i32, %arg0 : i32, i32
  }
  func.func @transform_1(%arg0: i32) -> (i32, i32) {
    %c0_i32 = arith.constant 0 : i32
    %c0_i32_0 = arith.constant 0 : i32
    %c0_i32_1 = arith.constant 0 : i32
    return %c0_i32, %c0_i32_0 : i32, i32
  }
  func.func @transform_2(%arg0: i32) -> (i32, i32) {
    %c0_i32 = arith.constant 0 : i32
    %c0_i32_0 = arith.constant 0 : i32
    return %c0_i32, %arg0 : i32, i32
  }
  func.func @transform_3(%arg0: i32) -> (i32, i32, i32) {
    %c0_i32 = arith.constant 0 : i32
    %c0_i32_0 = arith.constant 0 : i32
    %c0_i32_1 = arith.constant 0 : i32
    return %arg0, %c0_i32, %c0_i32_0 : i32, i32, i32
  }
  func.func @transform_4(%arg0: i32) -> (i32, i32, i32) {
    %c0_i32 = arith.constant 0 : i32
    %c0_i32_0 = arith.constant 0 : i32
    %c0_i32_1 = arith.constant 0 : i32
    return %arg0, %c0_i32, %c0_i32_0 : i32, i32, i32
  }
}

module attributes {stable_mosaic.version = 11 : i64} {
  func.func @_mlp_layer_kernel(%arg0: i32, %arg1: memref<8x256xbf16, #tpu.memory_space<vmem>>, %arg2: memref<8x1xf32, #tpu.memory_space<vmem>>, %arg3: memref<8x1xf32, #tpu.memory_space<vmem>>, %arg4: memref<16x8xbf16, #tpu.memory_space<vmem>>, %arg5: memref<16x256xbf16, #tpu.memory_space<vmem>>, %arg6: memref<1x16x1xf32, #tpu.memory_space<vmem>>, %arg7: memref<1x16x1xf32, #tpu.memory_space<vmem>>) attributes {dimension_semantics = [#tpu.dimension_semantics<parallel>], iteration_bounds = array<i64: 1>, scalar_prefetch = 0 : i64, scratch_operands = 0 : i64, tpu.core_type = #tpu.core_type<tc>, window_params = [{transform_indices = @transform_0, window_bounds = array<i64: 8, 256>}, {pipeline_mode = #tpu.pipeline_mode<synchronous>, transform_indices = @transform_1, window_bounds = array<i64: 8, 1>}, {pipeline_mode = #tpu.pipeline_mode<synchronous>, transform_indices = @transform_2, window_bounds = array<i64: 8, 1>}, {pipeline_mode = #tpu.pipeline_mode<synchronous>, transform_indices = @transform_3, window_bounds = array<i64: 16, 8>}, {transform_indices = @transform_4, window_bounds = array<i64: 16, 256>}, {transform_indices = @transform_5, window_bounds = array<i64: 1, 16, 1>}, {transform_indices = @transform_6, window_bounds = array<i64: 1, 16, 1>}]} {
    %c0 = arith.constant 0 : index
    %c0_0 = arith.constant 0 : index
    %0 = vector.load %arg1[%c0, %c0_0] : memref<8x256xbf16, #tpu.memory_space<vmem>>, vector<8x256xbf16>
    %1 = arith.extf %0 : vector<8x256xbf16> to vector<8x256xf32>
    %c0_1 = arith.constant 0 : index
    %c0_2 = arith.constant 0 : index
    %2 = vector.load %arg2[%c0_1, %c0_2] : memref<8x1xf32, #tpu.memory_space<vmem>>, vector<8x1xf32>
    %3 = vector.broadcast %2 : vector<8x1xf32> to vector<8x256xf32>
    %4 = arith.mulf %1, %3 : vector<8x256xf32>
    %c0_3 = arith.constant 0 : index
    %c0_4 = arith.constant 0 : index
    %5 = vector.load %arg3[%c0_3, %c0_4] : memref<8x1xf32, #tpu.memory_space<vmem>>, vector<8x1xf32>
    %6 = vector.broadcast %5 : vector<8x1xf32> to vector<8x256xf32>
    %7 = arith.addf %4, %6 : vector<8x256xf32>
    %cst = arith.constant 0.000000e+00 : f32
    %8 = vector.broadcast %cst : f32 to vector<8x256xf32>
    %9 = arith.maximumf %7, %8 : vector<8x256xf32>
    %10 = arith.truncf %9 : vector<8x256xf32> to vector<8x256xbf16>
    %c0_5 = arith.constant 0 : index
    %c0_6 = arith.constant 0 : index
    %11 = vector.load %arg4[%c0_5, %c0_6] : memref<16x8xbf16, #tpu.memory_space<vmem>>, vector<16x8xbf16>
    %cst_7 = arith.constant dense<0.000000e+00> : vector<16x256xf32>
    %12 = tpu.matmul %11, %10, %cst_7 {dimension_numbers = #tpu.dot_dimension_numbers<[1], [0], [0], [1], [0, 0, 1, 1], [], []>} : vector<16x8xbf16>, vector<8x256xbf16>, vector<16x256xf32> -> vector<16x256xf32>
    %13 = arith.truncf %12 : vector<16x256xf32> to vector<16x256xbf16>
    %c0_8 = arith.constant 0 : index
    %c0_9 = arith.constant 0 : index
    %14 = vector.load %arg5[%c0_8, %c0_9] : memref<16x256xbf16, #tpu.memory_space<vmem>>, vector<16x256xbf16>
    tpu.vector_store %arg5[%c0_8, %c0_9], %13 {strides = array<i32>} : memref<16x256xbf16, #tpu.memory_space<vmem>>, vector<16x256xbf16>,
    %cst_10 = arith.constant dense<0.000000e+00> : vector<16xf32>
    %15 = vector.multi_reduction <add>, %12, %cst_10 [1] : vector<16x256xf32> to vector<16xf32>
    %16 = vector.shape_cast %15 : vector<16xf32> to vector<16x1xf32>
    %17 = vector.shape_cast %16 : vector<16x1xf32> to vector<1x16x1xf32>
    %c0_11 = arith.constant 0 : index
    %c0_12 = arith.constant 0 : index
    %c0_13 = arith.constant 0 : index
    %18 = vector.load %arg6[%c0_11, %c0_12, %c0_13] : memref<1x16x1xf32, #tpu.memory_space<vmem>>, vector<1x16x1xf32>
    tpu.vector_store %arg6[%c0_11, %c0_12, %c0_13], %17 {strides = array<i32>} : memref<1x16x1xf32, #tpu.memory_space<vmem>>, vector<1x16x1xf32>,
    %19 = arith.mulf %12, %12 : vector<16x256xf32>
    %cst_14 = arith.constant dense<0.000000e+00> : vector<16xf32>
    %20 = vector.multi_reduction <add>, %19, %cst_14 [1] : vector<16x256xf32> to vector<16xf32>
    %21 = vector.shape_cast %20 : vector<16xf32> to vector<16x1xf32>
    %22 = vector.shape_cast %21 : vector<16x1xf32> to vector<1x16x1xf32>
    %c0_15 = arith.constant 0 : index
    %c0_16 = arith.constant 0 : index
    %c0_17 = arith.constant 0 : index
    %23 = vector.load %arg7[%c0_15, %c0_16, %c0_17] : memref<1x16x1xf32, #tpu.memory_space<vmem>>, vector<1x16x1xf32>
    tpu.vector_store %arg7[%c0_15, %c0_16, %c0_17], %22 {strides = array<i32>} : memref<1x16x1xf32, #tpu.memory_space<vmem>>, vector<1x16x1xf32>,
    return
  }
  func.func @transform_0(%arg0: i32) -> (i32, i32) {
    %c0_i32 = arith.constant 0 : i32
    %c0_i32_0 = arith.constant 0 : i32
    return %c0_i32, %arg0 : i32, i32
  }
  func.func @transform_1(%arg0: i32) -> (i32, i32) {
    %c0_i32 = arith.constant 0 : i32
    %c0_i32_0 = arith.constant 0 : i32
    %c0_i32_1 = arith.constant 0 : i32
    return %c0_i32, %c0_i32_0 : i32, i32
  }
  func.func @transform_2(%arg0: i32) -> (i32, i32) {
    %c0_i32 = arith.constant 0 : i32
    %c0_i32_0 = arith.constant 0 : i32
    %c0_i32_1 = arith.constant 0 : i32
    return %c0_i32, %c0_i32_0 : i32, i32
  }
  func.func @transform_3(%arg0: i32) -> (i32, i32) {
    %c0_i32 = arith.constant 0 : i32
    %c0_i32_0 = arith.constant 0 : i32
    %c0_i32_1 = arith.constant 0 : i32
    return %c0_i32, %c0_i32_0 : i32, i32
  }
  func.func @transform_4(%arg0: i32) -> (i32, i32) {
    %c0_i32 = arith.constant 0 : i32
    %c0_i32_0 = arith.constant 0 : i32
    return %c0_i32, %arg0 : i32, i32
  }
  func.func @transform_5(%arg0: i32) -> (i32, i32, i32) {
    %c0_i32 = arith.constant 0 : i32
    %c0_i32_0 = arith.constant 0 : i32
    %c0_i32_1 = arith.constant 0 : i32
    return %arg0, %c0_i32, %c0_i32_0 : i32, i32, i32
  }
  func.func @transform_6(%arg0: i32) -> (i32, i32, i32) {
    %c0_i32 = arith.constant 0 : i32
    %c0_i32_0 = arith.constant 0 : i32
    %c0_i32_1 = arith.constant 0 : i32
    return %arg0, %c0_i32, %c0_i32_0 : i32, i32, i32
  }
}

module attributes {stable_mosaic.version = 11 : i64} {
  func.func @_bn_relu_maxk_kernel(%arg0: i32, %arg1: i32, %arg2: memref<16x1x16x8xbf16, #tpu.memory_space<vmem>>, %arg3: memref<16x1x1xf32, #tpu.memory_space<vmem>>, %arg4: memref<16x1x1xf32, #tpu.memory_space<vmem>>, %arg5: memref<1x16x8xf32, #tpu.memory_space<vmem>>) attributes {dimension_semantics = [#tpu.dimension_semantics<parallel>, #tpu.dimension_semantics<parallel>], iteration_bounds = array<i64: 2, 1>, scalar_prefetch = 0 : i64, scratch_operands = 0 : i64, tpu.core_type = #tpu.core_type<tc>, window_params = [{transform_indices = @transform_0, window_bounds = array<i64: 16, 1, 16, 8>}, {pipeline_mode = #tpu.pipeline_mode<synchronous>, transform_indices = @transform_1, window_bounds = array<i64: 16, 1, 1>}, {pipeline_mode = #tpu.pipeline_mode<synchronous>, transform_indices = @transform_2, window_bounds = array<i64: 16, 1, 1>}, {transform_indices = @transform_3, window_bounds = array<i64: 1, 16, 8>}]} {
    %c0 = arith.constant 0 : index
    %c0_0 = arith.constant 0 : index
    %c0_1 = arith.constant 0 : index
    %c0_2 = arith.constant 0 : index
    %0 = vector.load %arg2[%c0, %c0_0, %c0_1, %c0_2] : memref<16x1x16x8xbf16, #tpu.memory_space<vmem>>, vector<16x1x16x8xbf16>
    %1 = arith.extf %0 : vector<16x1x16x8xbf16> to vector<16x1x16x8xf32>
    %2 = vector.shape_cast %1 : vector<16x1x16x8xf32> to vector<16x16x8xf32>
    %c0_3 = arith.constant 0 : index
    %c0_4 = arith.constant 0 : index
    %c0_5 = arith.constant 0 : index
    %3 = vector.load %arg3[%c0_3, %c0_4, %c0_5] : memref<16x1x1xf32, #tpu.memory_space<vmem>>, vector<16x1x1xf32>
    %4 = vector.broadcast %3 : vector<16x1x1xf32> to vector<16x16x8xf32>
    %5 = arith.mulf %2, %4 : vector<16x16x8xf32>
    %c0_6 = arith.constant 0 : index
    %c0_7 = arith.constant 0 : index
    %c0_8 = arith.constant 0 : index
    %6 = vector.load %arg4[%c0_6, %c0_7, %c0_8] : memref<16x1x1xf32, #tpu.memory_space<vmem>>, vector<16x1x1xf32>
    %7 = vector.broadcast %6 : vector<16x1x1xf32> to vector<16x16x8xf32>
    %8 = arith.addf %5, %7 : vector<16x16x8xf32>
    %cst = arith.constant 0.000000e+00 : f32
    %9 = vector.broadcast %cst : f32 to vector<16x16x8xf32>
    %10 = arith.maximumf %8, %9 : vector<16x16x8xf32>
    %cst_9 = arith.constant dense<0xFF800000> : vector<16x8xf32>
    %11 = vector.multi_reduction <maximumf>, %10, %cst_9 [1] : vector<16x16x8xf32> to vector<16x8xf32>
    %c0_10 = arith.constant 0 : index
    %c0_11 = arith.constant 0 : index
    %c0_12 = arith.constant 0 : index
    %12 = vector.load %arg5[%c0_10, %c0_11, %c0_12] : memref<1x16x8xf32, #tpu.memory_space<vmem>>, vector<1x16x8xf32>
    %13 = vector.shape_cast %12 : vector<1x16x8xf32> to vector<16x8xf32>
    %14 = vector.shape_cast %11 : vector<16x8xf32> to vector<1x16x8xf32>
    tpu.vector_store %arg5[%c0_10, %c0_11, %c0_12], %14 {strides = array<i32>} : memref<1x16x8xf32, #tpu.memory_space<vmem>>, vector<1x16x8xf32>,
    return
  }
  func.func @transform_0(%arg0: i32, %arg1: i32) -> (i32, i32, i32, i32) {
    %c0_i32 = arith.constant 0 : i32
    %c0_i32_0 = arith.constant 0 : i32
    %c0_i32_1 = arith.constant 0 : i32
    return %c0_i32, %arg0, %c0_i32_0, %arg1 : i32, i32, i32, i32
  }
  func.func @transform_1(%arg0: i32, %arg1: i32) -> (i32, i32, i32) {
    %c0_i32 = arith.constant 0 : i32
    %c0_i32_0 = arith.constant 0 : i32
    %c0_i32_1 = arith.constant 0 : i32
    %c0_i32_2 = arith.constant 0 : i32
    return %c0_i32, %c0_i32_0, %c0_i32_1 : i32, i32, i32
  }
  func.func @transform_2(%arg0: i32, %arg1: i32) -> (i32, i32, i32) {
    %c0_i32 = arith.constant 0 : i32
    %c0_i32_0 = arith.constant 0 : i32
    %c0_i32_1 = arith.constant 0 : i32
    %c0_i32_2 = arith.constant 0 : i32
    return %c0_i32, %c0_i32_0, %c0_i32_1 : i32, i32, i32
  }
  func.func @transform_3(%arg0: i32, %arg1: i32) -> (i32, i32, i32) {
    %c0_i32 = arith.constant 0 : i32
    %c0_i32_0 = arith.constant 0 : i32
    return %arg0, %c0_i32, %arg1 : i32, i32, i32
  }
}

</mosaic_0001>

<llo_original>
// kernel: neg.7
$region0: #{neg.7}
  #allocation0 [shape = 's32[1]{0}', space=sflag, size = 0x4, scoped, tag = 'scoped memory for neg.7']
  %s0 = inlined_call_operand.vmem [shape: s32[2,8,16], index: 0, kind: input, shape index: {}]
  %s1 = inlined_call_operand.vmem [shape: s32[2,8,16], index: 1, kind: output, shape index: {}]
  %v2 = vld [vmem:[%s0] sm:$0xff]
  %3 = xla_tuple %v2
  %4 = xla_tuple %3
  %v5 = vsub.s32 0, %v2
  %6 = xla_tuple %v5
  %7 = vst [vmem:[%s1] sm:$0xff] %v5
  %s8 = scalar_lea.vmem %s0, 8
  %v9 = vld [vmem:[%s8] sm:$0xff]
  %10 = xla_tuple %v9
  %11 = xla_tuple %10
  %v12 = vsub.s32 0, %v9
  %13 = xla_tuple %v12
  %s14 = scalar_lea.vmem %s1, 8
  %15 = vst [vmem:[%s14] sm:$0xff] %v12

// kernel: a_call__.7
$region0: #{a_call__.7}
  #allocation0 [shape = 'u32[]', space=smem, size = 0x4, offset = 0x4, fixed_abs, tag = 'smem constant byte address 0x4 - core index']
  #allocation1 [shape = 'u32[144,128]{1,0:T(1,128)}', space=vmem, size = 0x12000, scoped, tag = 'internal scratch']
  %s0 = inlined_call_operand.vmem [shape: f32[3,2,16], index: 0, kind: input, shape index: {}]
  %s1 = inlined_call_operand.vmem [shape: s32[2,1], index: 1, kind: input, shape index: {}]
  %s2 = inlined_call_operand.vmem [shape: s32[2,8], index: 2, kind: output, shape index: {}]
  %s3 = sld [smem:[#allocation0]]
  $region25: #{a_call__.7} parent=0
    _
  %s5 = ssub.s32 1, %s3
  %s6 = scalar_select 0, %s5, %s3
  // Predicated region
  $region2: #{a_call__.7} parent=0 // pred_check
    _
  $region3: #{a_call__.7} parent=0 // pred_check_branch
    %8 = sbr.rel (0) target = $region5
  $region4: #{a_call__.7} parent=0 // pred_region
    _
  $region5: #{a_call__.7} parent=0 // pred_fallthru
    _
  // Predicated region
  $region6: #{a_call__.7} parent=0 // pred_check
    _
  $region7: #{a_call__.7} parent=0 // pred_check_branch
    %10 = sbr.rel (0) target = $region9
  $region8: #{a_call__.7} parent=0 // pred_region
    _
  $region9: #{a_call__.7} parent=0 // pred_fallthru
    _
  %v11 = vld [vmem:[%s0] sm:$0x3]
  %s12 = scalar_lea.vmem %s0, 2
  %v13 = vld [vmem:[%s12] sm:$0x3]
  %s14 = scalar_lea.vmem %s0, 4
  %v15 = vld [vmem:[%s14] sm:$0x3]
  %v16 = vlaneseq
  %v17 = vand.u32 %v16, 127
  %v18 = vld [vmem:[%s1] sm:$0x3]
  loop: start=0, step=1, limit=8
  $region10: #{a_call__.7} parent=0 // loop_pre_header
    _
  $region11: #{a_call__.7} parent=0 // loop_header
    %s20 = sphi 0, %s24
    %p21 = scmp.ge.s32.totalorder %s20, 8
    %v25 = vphi 1e+10, %v58
    %v26 = vphi %v18, %v78
    %v27 = vphi 0, %v33
  $region12: #{a_call__.7} parent=0 // loop_header_branch
    %23 = sbr.rel (%p21) target = $region16
  $region13: #{a_call__.7} parent=0 // loop_body
    %v28 = vstv %s20
    %vm29 = vcmp.eq.s32.totalorder %v17, %v28
    %30 = vset.pattern.permute.xlu0 0
    %31 = vperm.xlu0 %30, %v26
    %v32 = vpop.permute.xlu0 %31
    %v33 = vsel %vm29, %v32, %v27
    %vm34 = vcmp.eq.s32.totalorder %v17, %v32
    %v35 = vsel %vm34, 1, 0
    %v36 = vcvt.s32.f32 %v35
    %v37 = vmul.f32 %v11, %v36
    %vm38 = vcmask 123904
    %v39 = vsel %vm38, %v37, 0.0
    %40 = vadd.xlane.f32.xlu0 %v39
    %v41 = vpop.xlane.xlu0 %40
    %v42 = vmul.f32 %v13, %v36
    %v43 = vsel %vm38, %v42, 0.0
    %44 = vadd.xlane.f32.xlu0 %v43
    %v45 = vpop.xlane.xlu0 %44
    %v46 = vmul.f32 %v15, %v36
    %v47 = vsel %vm38, %v46, 0.0
    %48 = vadd.xlane.f32.xlu0 %v47
    %v49 = vpop.xlane.xlu0 %48
    %v50 = vsub.f32 %v11, %v41
    %v51 = vmul.f32 %v50, %v50
    %v52 = vsub.f32 %v13, %v45
    %v53 = vmul.f32 %v52, %v52
    %v54 = vadd.f32 %v51, %v53
    %v55 = vsub.f32 %v15, %v49
    %v56 = vmul.f32 %v55, %v55
    %v57 = vadd.f32 %v54, %v56
    %v58 = vmin.f32 %v25, %v57
    %v59 = vsel %vm38, %v58, -inf
    %60 = vmax.xlane.f32.xlu0 %v59
    %v61 = vpop.xlane.xlu0 %60
    %vm62 = vcmp.ge.f32.partialorder %v58, %v61
    %v63 = vsel %vm62, %v17, 16
    %v64 = vsel %vm38, %v63, 2147483647
    %v65 = vand.u32 %v64, 65535
    %v66 = vshra.s32 %v64, 16
    %v67 = vcvt.s32.f32 %v65
    %v68 = vcvt.s32.f32 %v66
    %69 = vmin.xlane.f32.xlu0 %v68
    %v70 = vpop.xlane.xlu0 %69
    %vm71 = vcmp.eq.f32.partialorder %v68, %v70
    %v72 = vsel %vm71, %v67, inf
    %73 = vmin.xlane.f32.xlu0 %v72
    %v74 = vpop.xlane.xlu0 %73
    %v75 = vcvt.f32.s32 %v74
    %v76 = vcvt.f32.s32 %v70
    %v77 = vshll.u32 %v76, 16
    %v78 = vadd.s32 %v77, %v75
  $region14: #{a_call__.7} parent=0 // loop_footer
    %s24 = sadd.s32 1, %s20
  $region15: #{a_call__.7} parent=0 // loop_footer_branch
    %19 = sbr.rel target = $region11
  $region16: #{a_call__.7} parent=0 // loop_exit
    _
  %vm79 = vcmask 58368
  %80 = vst.msk [vmem:[%s2] sm:$0x3] %vm79, %v27
  // Predicated region
  $region17: #{a_call__.7} parent=0 // pred_check
    _
  $region18: #{a_call__.7} parent=0 // pred_check_branch
    %82 = sbr.rel (0) target = $region20
  $region19: #{a_call__.7} parent=0 // pred_region
    _
  $region20: #{a_call__.7} parent=0 // pred_fallthru
    _
  // Predicated region
  $region21: #{a_call__.7} parent=0 // pred_check
    _
  $region22: #{a_call__.7} parent=0 // pred_check_branch
    %84 = sbr.rel (0) target = $region24
  $region23: #{a_call__.7} parent=0 // pred_region
    _
  $region24: #{a_call__.7} parent=0 // pred_fallthru
    _

// kernel: a_call__.8
$region0: #{a_call__.8}
  #allocation0 [shape = 'u32[]', space=smem, size = 0x4, offset = 0x4, fixed_abs, tag = 'smem constant byte address 0x4 - core index']
  #allocation1 [shape = 'u32[144,128]{1,0:T(1,128)}', space=vmem, size = 0x12000, scoped, tag = 'internal scratch']
  %s0 = inlined_call_operand.vmem [shape: bf16[8,128], index: 0, kind: input, shape index: {}]
  %s1 = inlined_call_operand.vmem [shape: bf16[8,8], index: 1, kind: input, shape index: {}]
  %s2 = inlined_call_operand.vmem [shape: bf16[8,128], index: 2, kind: output, shape index: {0}]
  %s3 = inlined_call_operand.vmem [shape: f32[1,8,1], index: 3, kind: output, shape index: {1}]
  %s4 = inlined_call_operand.vmem [shape: f32[1,8,1], index: 4, kind: output, shape index: {2}]
  %5 = xla_tuple %s2, %s3, %s4
  %s6 = sld [smem:[#allocation0]]
  $region34: #{a_call__.8} parent=0
    _
  %s8 = ssub.s32 1, %s6
  %s9 = scalar_select 0, %s8, %s6
  // Predicated region
  $region2: #{a_call__.8} parent=0 // pred_check
    _
  $region3: #{a_call__.8} parent=0 // pred_check_branch
    %11 = sbr.rel (0) target = $region5
  $region4: #{a_call__.8} parent=0 // pred_region
    _
  $region5: #{a_call__.8} parent=0 // pred_fallthru
    _
  // Predicated region
  $region6: #{a_call__.8} parent=0 // pred_check
    _
  $region7: #{a_call__.8} parent=0 // pred_check_branch
    %13 = sbr.rel (0) target = $region9
  $region8: #{a_call__.8} parent=0 // pred_region
    _
  $region9: #{a_call__.8} parent=0 // pred_fallthru
    _
  %v15 = vld [vmem:[%s0] sm:$0xf]
  %v16 = vld [vmem:[%s1] sm:$0xf]
  %vm17 = vcmask 64512
  %v19 = vsel %vm17, %v16, 0
  %vm21 = vcmask 1043456
  %v23 = vsel %vm21, %v15, 0
  %25 = vmatprep.subr.bf16.mxu0 0
  %26 = vmatpush1.bf16.msra.mxu0 %v23
  %27 = vmatprep.subr.bf16.mxu0 0
  %28 = vmatpush1.bf16.msra.mxu0 0
  %29 = vmatprep.subr.bf16.mxu0 0
  %30 = vmatpush1.bf16.msra.mxu0 0
  %31 = vmatprep.subr.bf16.mxu0 0
  %32 = vmatpush1.bf16.msra.mxu0 0
  %33 = vmatprep.subr.bf16.mxu0 0
  %34 = vmatpush1.bf16.msra.mxu0 0
  %35 = vmatprep.subr.bf16.mxu0 0
  %36 = vmatpush1.bf16.msra.mxu0 0
  %37 = vmatprep.subr.bf16.mxu0 0
  %38 = vmatpush1.bf16.msra.mxu0 0
  %39 = vmatprep.subr.bf16.mxu0 0
  %40 = vmatpush1.bf16.msra.mxu0 0
  %41 = vmatprep.subr.bf16.mxu0 0
  %42 = vmatpush1.bf16.msra.mxu0 0
  %43 = vmatprep.subr.bf16.mxu0 0
  %44 = vmatpush1.bf16.msra.mxu0 0
  %45 = vmatprep.subr.bf16.mxu0 0
  %46 = vmatpush1.bf16.msra.mxu0 0
  %47 = vmatprep.subr.bf16.mxu0 0
  %48 = vmatpush1.bf16.msra.mxu0 0
  %49 = vmatprep.subr.bf16.mxu0 0
  %50 = vmatpush1.bf16.msra.mxu0 0
  %51 = vmatprep.subr.bf16.mxu0 0
  %52 = vmatpush1.bf16.msra.mxu0 0
  %53 = vmatprep.subr.bf16.mxu0 0
  %54 = vmatpush1.bf16.msra.mxu0 0
  %55 = vmatprep.subr.bf16.mxu0 0
  %56 = vmatpush1.bf16.msra.mxu0 0
  %57 = vmatprep.mubr.bf16.mxu0 0
  %58 = vmatmul.mubr.bf16.gmra.mrb[0].mxu0 %v19
  %v59 = vpop.f32.mrb[0].mxu0
  %v60 = vadd.f32 0.0, %v59
  %v61 = vpop.f32.mrb[0].mxu0
  %v62 = vpop.f32.mrb[0].mxu0
  %v63 = vpop.f32.mrb[0].mxu0
  %64 = vdwg.mxu0
  %v65 = vpack.c.bf16 %v60, %v60
  %66 = vst [vmem:[%s2] sm:$0xf] %v65
  %67 = vadd.xlane.f32.xlu0 %v60
  %v68 = vpop.xlane.xlu0 %67
  %vm69 = vcmask 7168
  %70 = vst.msk [vmem:[%s3] sm:$0xff] %vm69, %v68
  %v71 = vmul.f32 %v60, %v60
  %72 = vadd.xlane.f32.xlu0 %v71
  %v73 = vpop.xlane.xlu0 %72
  %74 = vst.msk [vmem:[%s4] sm:$0xff] %vm69, %v73
  // Predicated region
  $region10: #{a_call__.8} parent=0 // pred_check
    _
  $region11: #{a_call__.8} parent=0 // pred_check_branch
    %76 = sbr.rel (0) target = $region13
  $region12: #{a_call__.8} parent=0 // pred_region
    _
  $region13: #{a_call__.8} parent=0 // pred_fallthru
    _
  // Predicated region
  $region14: #{a_call__.8} parent=0 // pred_check
    _
  $region15: #{a_call__.8} parent=0 // pred_check_branch
    %78 = sbr.rel (0) target = $region17
  $region16: #{a_call__.8} parent=0 // pred_region
    _
  $region17: #{a_call__.8} parent=0 // pred_fallthru
    _
  // Predicated region
  $region18: #{a_call__.8} parent=0 // pred_check
    _
  $region19: #{a_call__.8} parent=0 // pred_check_branch
    %80 = sbr.rel (0) target = $region21
  $region20: #{a_call__.8} parent=0 // pred_region
    _
  $region21: #{a_call__.8} parent=0 // pred_fallthru
    _
  // Predicated region
  $region22: #{a_call__.8} parent=0 // pred_check
    _
  $region23: #{a_call__.8} parent=0 // pred_check_branch
    %82 = sbr.rel (0) target = $region25
  $region24: #{a_call__.8} parent=0 // pred_region
    _
  $region25: #{a_call__.8} parent=0 // pred_fallthru
    _
  // Predicated region
  $region26: #{a_call__.8} parent=0 // pred_check
    _
  $region27: #{a_call__.8} parent=0 // pred_check_branch
    %84 = sbr.rel (0) target = $region29
  $region28: #{a_call__.8} parent=0 // pred_region
    _
  $region29: #{a_call__.8} parent=0 // pred_fallthru
    _
  // Predicated region
  $region30: #{a_call__.8} parent=0 // pred_check
    _
  $region31: #{a_call__.8} parent=0 // pred_check_branch
    %86 = sbr.rel (0) target = $region33
  $region32: #{a_call__.8} parent=0 // pred_region
    _
  $region33: #{a_call__.8} parent=0 // pred_fallthru
    _

// kernel: a_call__.9
$region0: #{a_call__.9}
  #allocation0 [shape = 'u32[]', space=smem, size = 0x4, offset = 0x4, fixed_abs, tag = 'smem constant byte address 0x4 - core index']
  #allocation1 [shape = 'u32[144,128]{1,0:T(1,128)}', space=vmem, size = 0x12000, scoped, tag = 'internal scratch']
  %s0 = inlined_call_operand.vmem [shape: bf16[8,128], index: 0, kind: input, shape index: {}]
  %s1 = inlined_call_operand.vmem [shape: f32[8,1], index: 1, kind: input, shape index: {}]
  %s2 = inlined_call_operand.vmem [shape: f32[8,1], index: 2, kind: input, shape index: {}]
  %s3 = inlined_call_operand.vmem [shape: bf16[16,8], index: 3, kind: input, shape index: {}]
  %s4 = inlined_call_operand.vmem [shape: bf16[16,128], index: 4, kind: output, shape index: {0}]
  %s5 = inlined_call_operand.vmem [shape: f32[1,16,1], index: 5, kind: output, shape index: {1}]
  %s6 = inlined_call_operand.vmem [shape: f32[1,16,1], index: 6, kind: output, shape index: {2}]
  %7 = xla_tuple %s4, %s5, %s6
  %s8 = sld [smem:[#allocation0]]
  $region42: #{a_call__.9} parent=0
    _
  %s10 = ssub.s32 1, %s8
  %s11 = scalar_select 0, %s10, %s8
  // Predicated region
  $region2: #{a_call__.9} parent=0 // pred_check
    _
  $region3: #{a_call__.9} parent=0 // pred_check_branch
    %13 = sbr.rel (0) target = $region5
  $region4: #{a_call__.9} parent=0 // pred_region
    _
  $region5: #{a_call__.9} parent=0 // pred_fallthru
    _
  // Predicated region
  $region6: #{a_call__.9} parent=0 // pred_check
    _
  $region7: #{a_call__.9} parent=0 // pred_check_branch
    %15 = sbr.rel (0) target = $region9
  $region8: #{a_call__.9} parent=0 // pred_region
    _
  $region9: #{a_call__.9} parent=0 // pred_fallthru
    _
  // Predicated region
  $region10: #{a_call__.9} parent=0 // pred_check
    _
  $region11: #{a_call__.9} parent=0 // pred_check_branch
    %17 = sbr.rel (0) target = $region13
  $region12: #{a_call__.9} parent=0 // pred_region
    _
  $region13: #{a_call__.9} parent=0 // pred_fallthru
    _
  // Predicated region
  $region14: #{a_call__.9} parent=0 // pred_check
    _
  $region15: #{a_call__.9} parent=0 // pred_check_branch
    %19 = sbr.rel (0) target = $region17
  $region16: #{a_call__.9} parent=0 // pred_region
    _
  $region17: #{a_call__.9} parent=0 // pred_fallthru
    _
  %v21 = vld [vmem:[%s0] sm:$0xf]
  %v22 = vunpack.c.l.bf16 %v21
  %v23 = vld [vmem:[%s1] sm:$0xff]
  %25 = vset.pattern.permute.xlu0 0
  %26 = vperm.xlu0 %25, %v23
  %v27 = vpop.permute.xlu0 %26
  %v29 = vmul.f32 %v22, %v27
  %v30 = vld [vmem:[%s2] sm:$0xff]
  %32 = vset.pattern.permute.xlu0 0
  %33 = vperm.xlu0 %32, %v30
  %v34 = vpop.permute.xlu0 %33
  %v36 = vadd.f32 %v29, %v34
  %v37 = vmax.f32 %v36, 0.0
  %v38 = vpack.c.bf16 %v37, %v37
  %v39 = vld [vmem:[%s3] sm:$0xf]
  %v40 = vld [vmem:[%s3 + $0x4] sm:$0xf]
  %v43 = vunpack.c.l.b16 %v39
  %v44 = vunpack.c.l.b16 %v40
  %v45 = vpack.c.b16 %v44, %v43
  %vm46 = vcmask 64512
  %v48 = vsel %vm46, %v45, 0
  %vm50 = vcmask 1043456
  %v52 = vsel %vm50, %v38, 0
  %54 = vmatprep.subr.bf16.mxu0 0
  %55 = vmatpush1.bf16.msra.mxu0 %v52
  %56 = vmatprep.subr.bf16.mxu0 0
  %57 = vmatpush1.bf16.msra.mxu0 0
  %58 = vmatprep.subr.bf16.mxu0 0
  %59 = vmatpush1.bf16.msra.mxu0 0
  %60 = vmatprep.subr.bf16.mxu0 0
  %61 = vmatpush1.bf16.msra.mxu0 0
  %62 = vmatprep.subr.bf16.mxu0 0
  %63 = vmatpush1.bf16.msra.mxu0 0
  %64 = vmatprep.subr.bf16.mxu0 0
  %65 = vmatpush1.bf16.msra.mxu0 0
  %66 = vmatprep.subr.bf16.mxu0 0
  %67 = vmatpush1.bf16.msra.mxu0 0
  %68 = vmatprep.subr.bf16.mxu0 0
  %69 = vmatpush1.bf16.msra.mxu0 0
  %70 = vmatprep.subr.bf16.mxu0 0
  %71 = vmatpush1.bf16.msra.mxu0 0
  %72 = vmatprep.subr.bf16.mxu0 0
  %73 = vmatpush1.bf16.msra.mxu0 0
  %74 = vmatprep.subr.bf16.mxu0 0
  %75 = vmatpush1.bf16.msra.mxu0 0
  %76 = vmatprep.subr.bf16.mxu0 0
  %77 = vmatpush1.bf16.msra.mxu0 0
  %78 = vmatprep.subr.bf16.mxu0 0
  %79 = vmatpush1.bf16.msra.mxu0 0
  %80 = vmatprep.subr.bf16.mxu0 0
  %81 = vmatpush1.bf16.msra.mxu0 0
  %82 = vmatprep.subr.bf16.mxu0 0
  %83 = vmatpush1.bf16.msra.mxu0 0
  %84 = vmatprep.subr.bf16.mxu0 0
  %85 = vmatpush1.bf16.msra.mxu0 0
  %86 = vmatprep.mubr.bf16.mxu0 0
  %87 = vmatmul.mubr.bf16.gmra.mrb[0].mxu0 %v48
  %v88 = vpop.f32.mrb[0].mxu0
  %v89 = vadd.f32 0.0, %v88
  %v90 = vpop.f32.mrb[0].mxu0
  %v91 = vpop.f32.mrb[0].mxu0
  %v92 = vadd.f32 0.0, %v91
  %v93 = vpop.f32.mrb[0].mxu0
  %94 = vdwg.mxu0
  %v95 = vpack.c.bf16 %v92, %v89
  %v97 = vunpack.c.l.b16 %v95
  %v98 = vunpack.c.h.b16 %v95
  %v99 = vpack.c.b16 %v97, %v97
  %v100 = vpack.c.b16 %v98, %v98
  %103 = vst [vmem:[%s4] sm:$0xf] %v99
  %104 = vst [vmem:[%s4 + $0x4] sm:$0xf] %v100
  %105 = vadd.xlane.f32.xlu0 %v89
  %v106 = vpop.xlane.xlu0 %105
  %107 = vadd.xlane.f32.xlu0 %v92
  %v108 = vpop.xlane.xlu0 %107
  %vm109 = vcmask 7168
  %110 = vst.msk [vmem:[%s5] sm:$0xff] %vm109, %v106
  %111 = vst.msk [vmem:[%s5 + $0x8] sm:$0xff] %vm109, %v108
  %v112 = vmul.f32 %v89, %v89
  %v113 = vmul.f32 %v92, %v92
  %114 = vadd.xlane.f32.xlu0 %v112
  %v115 = vpop.xlane.xlu0 %114
  %116 = vadd.xlane.f32.xlu0 %v113
  %v117 = vpop.xlane.xlu0 %116
  %118 = vst.msk [vmem:[%s6] sm:$0xff] %vm109, %v115
  %119 = vst.msk [vmem:[%s6 + $0x8] sm:$0xff] %vm109, %v117
  // Predicated region
  $region18: #{a_call__.9} parent=0 // pred_check
    _
  $region19: #{a_call__.9} parent=0 // pred_check_branch
    %121 = sbr.rel (0) target = $region21
  $region20: #{a_call__.9} parent=0 // pred_region
    _
  $region21: #{a_call__.9} parent=0 // pred_fallthru
    _
  // Predicated region
  $region22: #{a_call__.9} parent=0 // pred_check
    _
  $region23: #{a_call__.9} parent=0 // pred_check_branch
    %123 = sbr.rel (0) target = $region25
  $region24: #{a_call__.9} parent=0 // pred_region
    _
  $region25: #{a_call__.9} parent=0 // pred_fallthru
    _
  // Predicated region
  $region26: #{a_call__.9} parent=0 // pred_check
    _
  $region27: #{a_call__.9} parent=0 // pred_check_branch
    %125 = sbr.rel (0) target = $region29
  $region28: #{a_call__.9} parent=0 // pred_region
    _
  $region29: #{a_call__.9} parent=0 // pred_fallthru
    _
  // Predicated region
  $region30: #{a_call__.9} parent=0 // pred_check
    _
  $region31: #{a_call__.9} parent=0 // pred_check_branch
    %127 = sbr.rel (0) target = $region33
  $region32: #{a_call__.9} parent=0 // pred_region
    _
  $region33: #{a_call__.9} parent=0 // pred_fallthru
    _
  // Predicated region
  $region34: #{a_call__.9} parent=0 // pred_check
    _
  $region35: #{a_call__.9} parent=0 // pred_check_branch
    %129 = sbr.rel (0) target = $region37
  $region36: #{a_call__.9} parent=0 // pred_region
    _
  $region37: #{a_call__.9} parent=0 // pred_fallthru
    _
  // Predicated region
  $region38: #{a_call__.9} parent=0 // pred_check
    _
  $region39: #{a_call__.9} parent=0 // pred_check_branch
    %131 = sbr.rel (0) target = $region41
  $region40: #{a_call__.9} parent=0 // pred_region
    _
  $region41: #{a_call__.9} parent=0 // pred_fallthru
    _

// kernel: a_call__.10
$region0: #{a_call__.10}
  #allocation0 [shape = 'u32[]', space=smem, size = 0x4, offset = 0x4, fixed_abs, tag = 'smem constant byte address 0x4 - core index']
  #allocation1 [shape = 'u32[144,128]{1,0:T(1,128)}', space=vmem, size = 0x12000, scoped, tag = 'internal scratch']
  %s0 = inlined_call_operand.vmem [shape: bf16[16,2,8,8], index: 0, kind: input, shape index: {}]
  %s1 = inlined_call_operand.vmem [shape: f32[16,1,1], index: 1, kind: input, shape index: {}]
  %s2 = inlined_call_operand.vmem [shape: f32[16,1,1], index: 2, kind: input, shape index: {}]
  %s3 = inlined_call_operand.vmem [shape: f32[2,16,8], index: 3, kind: output, shape index: {}]
  %s4 = sld [smem:[#allocation0]]
  $region86: #{a_call__.10} parent=0
    _
  %s6 = ssub.s32 1, %s4
  %s7 = scalar_select 0, %s6, %s4
  $region1: #{a_call__.10} parent=0
    #allocation2 [shape = 'u8[65536]{0}', space=vmem, size = 0x10000, scoped, tag = 'input window, operand 0']
    loop: start=0, step=1, limit=4
    $region2: #{a_call__.10} parent=1 // loop_pre_header
      _
    $region3: #{a_call__.10} parent=1 // loop_header
      %s9 = sphi 0, %s13
      %p10 = scmp.ge.s32.totalorder %s9, 4
      %s16 = sphi 0, %s28
      %s17 = sphi 0, %s24
      %s18 = sphi 0, %s16
      %s19 = sphi 0, %s17
      %s20 = sphi 0, %s18
      %s21 = sphi 0, %s19
      %s33 = sphi 0, %s35
      %s36 = sphi 0, %s33
      %s37 = sphi 0, %s36
      %s53 = sphi 0, %s37
      %s57 = sphi 0, %s57
      %s59 = sphi 0, %s57
      %s60 = sphi 0, %s59
      %s74 = sphi 0, %s60
      %s78 = sphi 0, %s78
      %s80 = sphi 0, %s78
      %s81 = sphi 0, %s80
      %s95 = sphi 0, %s81
      %s103 = sphi 0, %s105
      %s106 = sphi 0, %s103
      %s107 = sphi 0, %s106
      %s123 = sphi 0, %s107
    $region4: #{a_call__.10} parent=1 // loop_header_branch
      %12 = sbr.rel (%p10) target = $region8
    $region5: #{a_call__.10} parent=1 // loop_body
      %s14 = ssub.s32 %s9, 1
      %s15 = ssub.s32 %s9, 2
      %s22 = sadd.s32 1, %s17
      %p23 = scmp.ge.s32.totalorder %s22, 1
      %s24 = scalar_select %p23, 0, %s22
      %s25 = sadd.s32 1, %s16
      %s26 = scalar_select %p23, %s25, %s16
      %p27 = scmp.ge.s32.totalorder %s26, 2
      %s28 = scalar_select %p27, 0, %s26
      %s29 = ssub.s32 %s16, %s28
      %s30 = ssub.s32 %s17, %s24
      %s31 = sor.u32 %s29, %s30
      %p32 = scmp.eq.s32.totalorder %s31, 0
      %s34 = sadd.s32 %s33, 1
      %s35 = scalar_select %p32, %s33, %s34
      %p38 = pneg %p32
      %p39 = scmp.eq.s32.totalorder %s9, 1
      %p40 = por %p38, %p39
      %p41 = scmp.ne.s32.totalorder %s33, %s36
      %p42 = scmp.eq.s32.totalorder %s9, 0
      %p43 = por %p41, %p42
      %p44 = scmp.ne.s32.totalorder %s33, %s36
      %p45 = scmp.eq.s32.totalorder %s14, 1
      %p46 = por %p44, %p45
      %p47 = scmp.ne.s32.totalorder %s36, %s37
      %p48 = scmp.eq.s32.totalorder %s14, 0
      %p49 = por %p47, %p48
      %p50 = scmp.ne.s32.totalorder %s36, %s37
      %p51 = scmp.eq.s32.totalorder %s15, 1
      %p52 = por %p50, %p51
      %p54 = scmp.ne.s32.totalorder %s37, %s53
      %p55 = scmp.eq.s32.totalorder %s15, 0
      %p56 = por %p54, %p55
      %s58 = sadd.s32 %s57, 1
      %p61 = scmp.eq.s32.totalorder %s9, 1
      %p62 = scmp.ne.s32.totalorder %s57, %s59
      %p63 = scmp.eq.s32.totalorder %s9, 0
      %p64 = por %p62, %p63
      %p65 = scmp.ne.s32.totalorder %s57, %s59
      %p66 = scmp.eq.s32.totalorder %s14, 1
      %p67 = por %p65, %p66
      %p68 = scmp.ne.s32.totalorder %s59, %s60
      %p69 = scmp.eq.s32.totalorder %s14, 0
      %p70 = por %p68, %p69
      %p71 = scmp.ne.s32.totalorder %s59, %s60
      %p72 = scmp.eq.s32.totalorder %s15, 1
      %p73 = por %p71, %p72
      %p75 = scmp.ne.s32.totalorder %s60, %s74
      %p76 = scmp.eq.s32.totalorder %s15, 0
      %p77 = por %p75, %p76
      %s79 = sadd.s32 %s78, 1
      %p82 = scmp.eq.s32.totalorder %s9, 1
      %p83 = scmp.ne.s32.totalorder %s78, %s80
      %p84 = scmp.eq.s32.totalorder %s9, 0
      %p85 = por %p83, %p84
      %p86 = scmp.ne.s32.totalorder %s78, %s80
      %p87 = scmp.eq.s32.totalorder %s14, 1
      %p88 = por %p86, %p87
      %p89 = scmp.ne.s32.totalorder %s80, %s81
      %p90 = scmp.eq.s32.totalorder %s14, 0
      %p91 = por %p89, %p90
      %p92 = scmp.ne.s32.totalorder %s80, %s81
      %p93 = scmp.eq.s32.totalorder %s15, 1
      %p94 = por %p92, %p93
      %p96 = scmp.ne.s32.totalorder %s81, %s95
      %p97 = scmp.eq.s32.totalorder %s15, 0
      %p98 = por %p96, %p97
      %s99 = ssub.s32 %s16, %s28
      %s100 = ssub.s32 %s17, %s24
      %s101 = sor.u32 %s99, %s100
      %p102 = scmp.eq.s32.totalorder %s101, 0
      %s104 = sadd.s32 %s103, 1
      %s105 = scalar_select %p102, %s103, %s104
      %p108 = pneg %p102
      %p109 = scmp.eq.s32.totalorder %s9, 1
      %p110 = por %p108, %p109
      %p111 = scmp.ne.s32.totalorder %s103, %s106
      %p112 = scmp.eq.s32.totalorder %s9, 0
      %p113 = por %p111, %p112
      %p114 = scmp.ne.s32.totalorder %s103, %s106
      %p115 = scmp.eq.s32.totalorder %s14, 1
      %p116 = por %p114, %p115
      %p117 = scmp.ne.s32.totalorder %s106, %s107
      %p118 = scmp.eq.s32.totalorder %s14, 0
      %p119 = por %p117, %p118
      %p120 = scmp.ne.s32.totalorder %s106, %s107
      %p121 = scmp.eq.s32.totalorder %s15, 1
      %p122 = por %p120, %p121
      %p124 = scmp.ne.s32.totalorder %s107, %s123
      %p125 = scmp.eq.s32.totalorder %s15, 0
      %p126 = por %p124, %p125
      %p127 = scmp.le.s32.totalorder 1, %s9
      %p128 = scmp.lt.s32.totalorder %s9, 3
      %p129 = pnand %p127, %p128
      %p130 = pneg %p129
      // Predicated region
      $region9: #{a_call__.10} parent=5 // pred_check
        _
      $region10: #{a_call__.10} parent=5 // pred_check_branch
        %132 = sbr.rel (%p129) target = $region12
      $region11: #{a_call__.10} parent=5 // pred_region
        %s133 = ssub.s32 %s9, 1
        // Predicated region
        $region13: #{a_call__.10} parent=11 // pred_check
          %p134 = pneg %p70
        $region14: #{a_call__.10} parent=11 // pred_check_branch
          %136 = sbr.rel (%p134) target = $region16
        $region15: #{a_call__.10} parent=11 // pred_region
          _
        $region16: #{a_call__.10} parent=11 // pred_fallthru
          _
        // Predicated region
        $region17: #{a_call__.10} parent=11 // pred_check
          %p137 = pneg %p91
        $region18: #{a_call__.10} parent=11 // pred_check_branch
          %139 = sbr.rel (%p137) target = $region20
        $region19: #{a_call__.10} parent=11 // pred_region
          _
        $region20: #{a_call__.10} parent=11 // pred_fallthru
          _
      $region12: #{a_call__.10} parent=5 // pred_fallthru
        _
      %p140 = scmp.lt.s32.totalorder %s9, 2
      // Predicated region
      $region21: #{a_call__.10} parent=5 // pred_check
        %p141 = pneg %p140
      $region22: #{a_call__.10} parent=5 // pred_check_branch
        %143 = sbr.rel (%p141) target = $region24
      $region23: #{a_call__.10} parent=5 // pred_region
        // Predicated region
        $region25: #{a_call__.10} parent=23 // pred_check
          %p144 = pneg %p43
        $region26: #{a_call__.10} parent=23 // pred_check_branch
          %146 = sbr.rel (%p144) target = $region28
        $region27: #{a_call__.10} parent=23 // pred_region
          %s147 = sand.u32 %s33, 1
          %s148 = sand.u32 %s33, 1
          %s149 = smul.addr %s148, 64
          %s150 = scalar_lea.vmem [#allocation2], %s149
          %s151 = sadd.s32 %s17, %s16
          %s152 = smul.addr %s151, 4
          %s153 = scalar_lea.vmem %s0, %s152
          // Predicated region
          $region29: #{a_call__.10} parent=27 // pred_check
            _
          $region30: #{a_call__.10} parent=27 // pred_check_branch
            %155 = sbr.rel (0) target = $region32
          $region31: #{a_call__.10} parent=27 // pred_region
            // Predicated region
            $region33: #{a_call__.10} parent=31 // pred_check
              _
            $region34: #{a_call__.10} parent=31 // pred_check_branch
              %157 = sbr.rel target = $region36
            $region35: #{a_call__.10} parent=31 // pred_region
              // Predicated region
              $region48: #{a_call__.10} parent=35 // pred_check
                _
              $region49: #{a_call__.10} parent=35 // pred_check_branch
                %202 = sbr.rel (0) target = $region51
              $region50: #{a_call__.10} parent=35 // pred_region
                loop: start=0, step=1, limit=1
                $region52: #{a_call__.10} parent=50 // loop_pre_header
                  _
                $region53: #{a_call__.10} parent=50 // loop_header
                  %s204 = sphi 0, %s208
                  %p205 = scmp.ge.s32.totalorder %s204, 1
                  %s209 = sphi %s153, %s153
                  %s210 = sphi %s150, %s150
                $region54: #{a_call__.10} parent=50 // loop_header_branch
                  %207 = sbr.rel (%p205) target = $region58
                $region55: #{a_call__.10} parent=50 // loop_body
                  _
                $region56: #{a_call__.10} parent=50 // loop_footer
                  %s208 = sadd.s32 1, %s204
                $region57: #{a_call__.10} parent=50 // loop_footer_branch
                  %203 = sbr.rel target = $region53
                $region58: #{a_call__.10} parent=50 // loop_exit
                  _
                loop: start=0, step=1, limit=1
                $region59: #{a_call__.10} parent=50 // loop_pre_header
                  _
                $region60: #{a_call__.10} parent=50 // loop_header
                  %s213 = sphi 0, %s217
                  %p214 = scmp.ge.s32.totalorder %s213, 1
                  %s218 = sphi %s153, %s153
                  %s219 = sphi %s150, %s150
                $region61: #{a_call__.10} parent=50 // loop_header_branch
                  %216 = sbr.rel (%p214) target = $region65
                $region62: #{a_call__.10} parent=50 // loop_body
                  %v220 = vld [vmem:[%s218] sm:$0xf]
                  %221 = vst [vmem:[%s219] sm:$0xf] %v220
                  %v222 = vld [vmem:[%s218 + $0x8] sm:$0xf]
                  %223 = vst [vmem:[%s219 + $0x4] sm:$0xf] %v222
                  %v224 = vld [vmem:[%s218 + $0x10] sm:$0xf]
                  %225 = vst [vmem:[%s219 + $0x8] sm:$0xf] %v224
                  %v226 = vld [vmem:[%s218 + $0x18] sm:$0xf]
                  %227 = vst [vmem:[%s219 + $0xc] sm:$0xf] %v226
                  %v228 = vld [vmem:[%s218 + $0x20] sm:$0xf]
                  %229 = vst [vmem:[%s219 + $0x10] sm:$0xf] %v228
                  %v230 = vld [vmem:[%s218 + $0x28] sm:$0xf]
                  %231 = vst [vmem:[%s219 + $0x14] sm:$0xf] %v230
                  %v232 = vld [vmem:[%s218 + $0x30] sm:$0xf]
                  %233 = vst [vmem:[%s219 + $0x18] sm:$0xf] %v232
                  %v234 = vld [vmem:[%s218 + $0x38] sm:$0xf]
                  %235 = vst [vmem:[%s219 + $0x1c] sm:$0xf] %v234
                  %v236 = vld [vmem:[%s218 + $0x40] sm:$0xf]
                  %237 = vst [vmem:[%s219 + $0x20] sm:$0xf] %v236
                  %v238 = vld [vmem:[%s218 + $0x48] sm:$0xf]
                  %239 = vst [vmem:[%s219 + $0x24] sm:$0xf] %v238
                  %v240 = vld [vmem:[%s218 + $0x50] sm:$0xf]
                  %241 = vst [vmem:[%s219 + $0x28] sm:$0xf] %v240
                  %v242 = vld [vmem:[%s218 + $0x58] sm:$0xf]
                  %243 = vst [vmem:[%s219 + $0x2c] sm:$0xf] %v242
                  %v244 = vld [vmem:[%s218 + $0x60] sm:$0xf]
                  %245 = vst [vmem:[%s219 + $0x30] sm:$0xf] %v244
                  %v246 = vld [vmem:[%s218 + $0x68] sm:$0xf]
                  %247 = vst [vmem:[%s219 + $0x34] sm:$0xf] %v246
                  %v248 = vld [vmem:[%s218 + $0x70] sm:$0xf]
                  %249 = vst [vmem:[%s219 + $0x38] sm:$0xf] %v248
                  %v250 = vld [vmem:[%s218 + $0x78] sm:$0xf]
                  %251 = vst [vmem:[%s219 + $0x3c] sm:$0xf] %v250
                $region63: #{a_call__.10} parent=50 // loop_footer
                  %s217 = sadd.s32 1, %s213
                $region64: #{a_call__.10} parent=50 // loop_footer_branch
                  %212 = sbr.rel target = $region60
                $region65: #{a_call__.10} parent=50 // loop_exit
                  _
              $region51: #{a_call__.10} parent=35 // pred_fallthru
                _
            $region36: #{a_call__.10} parent=31 // pred_fallthru
              _
            // Predicated region
            $region37: #{a_call__.10} parent=31 // pred_check
              _
            $region38: #{a_call__.10} parent=31 // pred_check_branch
              %159 = sbr.rel (0) target = $region40
            $region39: #{a_call__.10} parent=31 // pred_region
              loop: start=0, step=1, limit=1
              $region41: #{a_call__.10} parent=39 // loop_pre_header
                _
              $region42: #{a_call__.10} parent=39 // loop_header
                %s162 = sphi 0, %s166
                %p163 = scmp.ge.s32.totalorder %s162, 1
                %s167 = sphi %s153, %s153
                %s168 = sphi %s150, %s150
              $region43: #{a_call__.10} parent=39 // loop_header_branch
                %165 = sbr.rel (%p163) target = $region47
              $region44: #{a_call__.10} parent=39 // loop_body
                %v169 = vld [vmem:[%s167] sm:$0xf]
                %170 = vst [vmem:[%s168] sm:$0xf] %v169
                %v171 = vld [vmem:[%s167 + $0x8] sm:$0xf]
                %172 = vst [vmem:[%s168 + $0x4] sm:$0xf] %v171
                %v173 = vld [vmem:[%s167 + $0x10] sm:$0xf]
                %174 = vst [vmem:[%s168 + $0x8] sm:$0xf] %v173
                %v175 = vld [vmem:[%s167 + $0x18] sm:$0xf]
                %176 = vst [vmem:[%s168 + $0xc] sm:$0xf] %v175
                %v177 = vld [vmem:[%s167 + $0x20] sm:$0xf]
                %178 = vst [vmem:[%s168 + $0x10] sm:$0xf] %v177
                %v179 = vld [vmem:[%s167 + $0x28] sm:$0xf]
                %180 = vst [vmem:[%s168 + $0x14] sm:$0xf] %v179
                %v181 = vld [vmem:[%s167 + $0x30] sm:$0xf]
                %182 = vst [vmem:[%s168 + $0x18] sm:$0xf] %v181
                %v183 = vld [vmem:[%s167 + $0x38] sm:$0xf]
                %184 = vst [vmem:[%s168 + $0x1c] sm:$0xf] %v183
                %v185 = vld [vmem:[%s167 + $0x40] sm:$0xf]
                %186 = vst [vmem:[%s168 + $0x20] sm:$0xf] %v185
                %v187 = vld [vmem:[%s167 + $0x48] sm:$0xf]
                %188 = vst [vmem:[%s168 + $0x24] sm:$0xf] %v187
                %v189 = vld [vmem:[%s167 + $0x50] sm:$0xf]
                %190 = vst [vmem:[%s168 + $0x28] sm:$0xf] %v189
                %v191 = vld [vmem:[%s167 + $0x58] sm:$0xf]
                %192 = vst [vmem:[%s168 + $0x2c] sm:$0xf] %v191
                %v193 = vld [vmem:[%s167 + $0x60] sm:$0xf]
                %194 = vst [vmem:[%s168 + $0x30] sm:$0xf] %v193
                %v195 = vld [vmem:[%s167 + $0x68] sm:$0xf]
                %196 = vst [vmem:[%s168 + $0x34] sm:$0xf] %v195
                %v197 = vld [vmem:[%s167 + $0x70] sm:$0xf]
                %198 = vst [vmem:[%s168 + $0x38] sm:$0xf] %v197
                %v199 = vld [vmem:[%s167 + $0x78] sm:$0xf]
                %200 = vst [vmem:[%s168 + $0x3c] sm:$0xf] %v199
              $region45: #{a_call__.10} parent=39 // loop_footer
                %s166 = sadd.s32 1, %s162
              $region46: #{a_call__.10} parent=39 // loop_footer_branch
                %161 = sbr.rel target = $region42
              $region47: #{a_call__.10} parent=39 // loop_exit
                _
            $region40: #{a_call__.10} parent=31 // pred_fallthru
              _
          $region32: #{a_call__.10} parent=27 // pred_fallthru
            _
          %252 = vnop
        $region28: #{a_call__.10} parent=23 // pred_fallthru
          _
      $region24: #{a_call__.10} parent=5 // pred_fallthru
        _
      %p253 = scmp.le.s32.totalorder 1, %s9
      %p254 = scmp.lt.s32.totalorder %s9, 3
      %p255 = pnand %p253, %p254
      %p256 = pneg %p255
      // Predicated region
      $region66: #{a_call__.10} parent=5 // pred_check
        _
      $region67: #{a_call__.10} parent=5 // pred_check_branch
        %258 = sbr.rel (%p255) target = $region69
      $region68: #{a_call__.10} parent=5 // pred_region
        %s259 = ssub.s32 %s9, 1
        %s260 = sand.u32 %s36, 1
        %s261 = sand.u32 %s36, 1
        %s262 = smul.addr %s261, 64
        %s263 = scalar_lea.vmem [#allocation2], %s262
        // Predicated region
        $region70: #{a_call__.10} parent=68 // pred_check
          %p264 = pneg %p49
        $region71: #{a_call__.10} parent=68 // pred_check_branch
          %266 = sbr.rel (%p264) target = $region73
        $region72: #{a_call__.10} parent=68 // pred_region
          _
        $region73: #{a_call__.10} parent=68 // pred_fallthru
          _
        %s267 = sand.u32 %s36, 1
        %s268 = sand.u32 %s36, 1
        %s269 = smul.addr %s268, 64
        %s270 = scalar_lea.vmem [#allocation2], %s269
        %p271 = pneg %p49
        %p272 = pneg %p46
        %p273 = pneg %p70
        %p274 = pneg %p67
        %p275 = pneg %p91
        %p276 = pneg %p88
        %p277 = pneg %p119
        %p278 = pneg %p116
        %p279 = scmp.lt.s32.totalorder %s18, 1
        %s280 = scalar_select %p279, %s18, 1
        %p281 = scmp.lt.s32.totalorder %s19, 0
        %s282 = scalar_select %p281, %s19, 0
        %s283 = smul.addr %s280, 2
        %s284 = sadd.s32 %s282, %s283
        %s285 = smul.addr %s284, 8
        %s286 = scalar_lea.vmem %s3, %s285
        %p287 = scmp.lt.s32.totalorder %s18, 1
        %s288 = scalar_select %p287, %s18, 1
        %p289 = scmp.lt.s32.totalorder %s19, 0
        %s290 = scalar_select %p289, %s19, 0
        %s291 = smul.addr %s288, 2
        %s292 = sadd.s32 %s290, %s291
        %s293 = smul.addr %s292, 8
        %s294 = scalar_lea.vmem %s3, %s293
        %v295 = vld [vmem:[%s263] sm:$0xf]
        %v296 = vld [vmem:[%s263 + $0x4] sm:$0xf]
        %v297 = vld [vmem:[%s263 + $0x8] sm:$0xf]
        %v298 = vld [vmem:[%s263 + $0xc] sm:$0xf]
        %v299 = vld [vmem:[%s263 + $0x10] sm:$0xf]
        %v300 = vld [vmem:[%s263 + $0x14] sm:$0xf]
        %v301 = vld [vmem:[%s263 + $0x18] sm:$0xf]
        %v302 = vld [vmem:[%s263 + $0x1c] sm:$0xf]
        %v303 = vld [vmem:[%s263 + $0x20] sm:$0xf]
        %v304 = vld [vmem:[%s263 + $0x24] sm:$0xf]
        %v305 = vld [vmem:[%s263 + $0x28] sm:$0xf]
        %v306 = vld [vmem:[%s263 + $0x2c] sm:$0xf]
        %v307 = vld [vmem:[%s263 + $0x30] sm:$0xf]
        %v308 = vld [vmem:[%s263 + $0x34] sm:$0xf]
        %v309 = vld [vmem:[%s263 + $0x38] sm:$0xf]
        %v310 = vld [vmem:[%s263 + $0x3c] sm:$0xf]
        %v311 = vunpack.c.l.bf16 %v295
        %v312 = vunpack.c.l.bf16 %v296
        %v313 = vunpack.c.l.bf16 %v297
        %v314 = vunpack.c.l.bf16 %v298
        %v315 = vunpack.c.l.bf16 %v299
        %v316 = vunpack.c.l.bf16 %v300
        %v317 = vunpack.c.l.bf16 %v301
        %v318 = vunpack.c.l.bf16 %v302
        %v319 = vunpack.c.l.bf16 %v303
        %v320 = vunpack.c.l.bf16 %v304
        %v321 = vunpack.c.l.bf16 %v305
        %v322 = vunpack.c.l.bf16 %v306
        %v323 = vunpack.c.l.bf16 %v307
        %v324 = vunpack.c.l.bf16 %v308
        %v325 = vunpack.c.l.bf16 %v309
        %v326 = vunpack.c.l.bf16 %v310
        %v327 = vld [vmem:[%s1] sm:$0x1]
        %v328 = vld [vmem:[%s1 + $0x1] sm:$0x1]
        %v329 = vld [vmem:[%s1 + $0x2] sm:$0x1]
        %v330 = vld [vmem:[%s1 + $0x3] sm:$0x1]
        %v331 = vld [vmem:[%s1 + $0x4] sm:$0x1]
        %v332 = vld [vmem:[%s1 + $0x5] sm:$0x1]
        %v333 = vld [vmem:[%s1 + $0x6] sm:$0x1]
        %v334 = vld [vmem:[%s1 + $0x7] sm:$0x1]
        %v335 = vld [vmem:[%s1 + $0x8] sm:$0x1]
        %v336 = vld [vmem:[%s1 + $0x9] sm:$0x1]
        %v337 = vld [vmem:[%s1 + $0xa] sm:$0x1]
        %v338 = vld [vmem:[%s1 + $0xb] sm:$0x1]
        %v339 = vld [vmem:[%s1 + $0xc] sm:$0x1]
        %v340 = vld [vmem:[%s1 + $0xd] sm:$0x1]
        %v341 = vld [vmem:[%s1 + $0xe] sm:$0x1]
        %v342 = vld [vmem:[%s1 + $0xf] sm:$0x1]
        %v359 = vlaneseq
        %v360 = vshrl.u32 %v359, 7
        %v361 = vsub.s32 0, %v360
        %v362 = vrot.slane %v327, %v361
        %v363 = vlaneseq
        %v364 = vshrl.u32 %v363, 7
        %v365 = vsub.s32 0, %v364
        %v366 = vrot.slane %v328, %v365
        %v367 = vlaneseq
        %v368 = vshrl.u32 %v367, 7
        %v369 = vsub.s32 0, %v368
        %v370 = vrot.slane %v329, %v369
        %v371 = vlaneseq
        %v372 = vshrl.u32 %v371, 7
        %v373 = vsub.s32 0, %v372
        %v374 = vrot.slane %v330, %v373
        %v375 = vlaneseq
        %v376 = vshrl.u32 %v375, 7
        %v377 = vsub.s32 0, %v376
        %v378 = vrot.slane %v331, %v377
        %v379 = vlaneseq
        %v380 = vshrl.u32 %v379, 7
        %v381 = vsub.s32 0, %v380
        %v382 = vrot.slane %v332, %v381
        %v383 = vlaneseq
        %v384 = vshrl.u32 %v383, 7
        %v385 = vsub.s32 0, %v384
        %v386 = vrot.slane %v333, %v385
        %v387 = vlaneseq
        %v388 = vshrl.u32 %v387, 7
        %v389 = vsub.s32 0, %v388
        %v390 = vrot.slane %v334, %v389
        %v391 = vlaneseq
        %v392 = vshrl.u32 %v391, 7
        %v393 = vsub.s32 0, %v392
        %v394 = vrot.slane %v335, %v393
        %v395 = vlaneseq
        %v396 = vshrl.u32 %v395, 7
        %v397 = vsub.s32 0, %v396
        %v398 = vrot.slane %v336, %v397
        %v399 = vlaneseq
        %v400 = vshrl.u32 %v399, 7
        %v401 = vsub.s32 0, %v400
        %v402 = vrot.slane %v337, %v401
        %v403 = vlaneseq
        %v404 = vshrl.u32 %v403, 7
        %v405 = vsub.s32 0, %v404
        %v406 = vrot.slane %v338, %v405
        %v407 = vlaneseq
        %v408 = vshrl.u32 %v407, 7
        %v409 = vsub.s32 0, %v408
        %v410 = vrot.slane %v339, %v409
        %v411 = vlaneseq
        %v412 = vshrl.u32 %v411, 7
        %v413 = vsub.s32 0, %v412
        %v414 = vrot.slane %v340, %v413
        %v415 = vlaneseq
        %v416 = vshrl.u32 %v415, 7
        %v417 = vsub.s32 0, %v416
        %v418 = vrot.slane %v341, %v417
        %v419 = vlaneseq
        %v420 = vshrl.u32 %v419, 7
        %v421 = vsub.s32 0, %v420
        %v422 = vrot.slane %v342, %v421
        %423 = vset.pattern.permute.xlu0 0
        %424 = vperm.xlu0 %423, %v362
        %v425 = vpop.permute.xlu0 %424
        %427 = vset.pattern.permute.xlu0 0
        %428 = vperm.xlu0 %427, %v366
        %v429 = vpop.permute.xlu0 %428
        %431 = vset.pattern.permute.xlu0 0
        %432 = vperm.xlu0 %431, %v370
        %v433 = vpop.permute.xlu0 %432
        %435 = vset.pattern.permute.xlu0 0
        %436 = vperm.xlu0 %435, %v374
        %v437 = vpop.permute.xlu0 %436
        %439 = vset.pattern.permute.xlu0 0
        %440 = vperm.xlu0 %439, %v378
        %v441 = vpop.permute.xlu0 %440
        %443 = vset.pattern.permute.xlu0 0
        %444 = vperm.xlu0 %443, %v382
        %v445 = vpop.permute.xlu0 %444
        %447 = vset.pattern.permute.xlu0 0
        %448 = vperm.xlu0 %447, %v386
        %v449 = vpop.permute.xlu0 %448
        %451 = vset.pattern.permute.xlu0 0
        %452 = vperm.xlu0 %451, %v390
        %v453 = vpop.permute.xlu0 %452
        %455 = vset.pattern.permute.xlu0 0
        %456 = vperm.xlu0 %455, %v394
        %v457 = vpop.permute.xlu0 %456
        %459 = vset.pattern.permute.xlu0 0
        %460 = vperm.xlu0 %459, %v398
        %v461 = vpop.permute.xlu0 %460
        %463 = vset.pattern.permute.xlu0 0
        %464 = vperm.xlu0 %463, %v402
        %v465 = vpop.permute.xlu0 %464
        %467 = vset.pattern.permute.xlu0 0
        %468 = vperm.xlu0 %467, %v406
        %v469 = vpop.permute.xlu0 %468
        %471 = vset.pattern.permute.xlu0 0
        %472 = vperm.xlu0 %471, %v410
        %v473 = vpop.permute.xlu0 %472
        %475 = vset.pattern.permute.xlu0 0
        %476 = vperm.xlu0 %475, %v414
        %v477 = vpop.permute.xlu0 %476
        %479 = vset.pattern.permute.xlu0 0
        %480 = vperm.xlu0 %479, %v418
        %v481 = vpop.permute.xlu0 %480
        %483 = vset.pattern.permute.xlu0 0
        %484 = vperm.xlu0 %483, %v422
        %v485 = vpop.permute.xlu0 %484
        %v487 = vmul.f32 %v311, %v425
        %v488 = vmul.f32 %v312, %v429
        %v489 = vmul.f32 %v313, %v433
        %v490 = vmul.f32 %v314, %v437
        %v491 = vmul.f32 %v315, %v441
        %v492 = vmul.f32 %v316, %v445
        %v493 = vmul.f32 %v317, %v449
        %v494 = vmul.f32 %v318, %v453
        %v495 = vmul.f32 %v319, %v457
        %v496 = vmul.f32 %v320, %v461
        %v497 = vmul.f32 %v321, %v465
        %v498 = vmul.f32 %v322, %v469
        %v499 = vmul.f32 %v323, %v473
        %v500 = vmul.f32 %v324, %v477
        %v501 = vmul.f32 %v325, %v481
        %v502 = vmul.f32 %v326, %v485
        %v503 = vld [vmem:[%s2] sm:$0x1]
        %v504 = vld [vmem:[%s2 + $0x1] sm:$0x1]
        %v505 = vld [vmem:[%s2 + $0x2] sm:$0x1]
        %v506 = vld [vmem:[%s2 + $0x3] sm:$0x1]
        %v507 = vld [vmem:[%s2 + $0x4] sm:$0x1]
        %v508 = vld [vmem:[%s2 + $0x5] sm:$0x1]
        %v509 = vld [vmem:[%s2 + $0x6] sm:$0x1]
        %v510 = vld [vmem:[%s2 + $0x7] sm:$0x1]
        %v511 = vld [vmem:[%s2 + $0x8] sm:$0x1]
        %v512 = vld [vmem:[%s2 + $0x9] sm:$0x1]
        %v513 = vld [vmem:[%s2 + $0xa] sm:$0x1]
        %v514 = vld [vmem:[%s2 + $0xb] sm:$0x1]
        %v515 = vld [vmem:[%s2 + $0xc] sm:$0x1]
        %v516 = vld [vmem:[%s2 + $0xd] sm:$0x1]
        %v517 = vld [vmem:[%s2 + $0xe] sm:$0x1]
        %v518 = vld [vmem:[%s2 + $0xf] sm:$0x1]
        %v535 = vlaneseq
        %v536 = vshrl.u32 %v535, 7
        %v537 = vsub.s32 0, %v536
        %v538 = vrot.slane %v503, %v537
        %v539 = vlaneseq
        %v540 = vshrl.u32 %v539, 7
        %v541 = vsub.s32 0, %v540
        %v542 = vrot.slane %v504, %v541
        %v543 = vlaneseq
        %v544 = vshrl.u32 %v543, 7
        %v545 = vsub.s32 0, %v544
        %v546 = vrot.slane %v505, %v545
        %v547 = vlaneseq
        %v548 = vshrl.u32 %v547, 7
        %v549 = vsub.s32 0, %v548
        %v550 = vrot.slane %v506, %v549
        %v551 = vlaneseq
        %v552 = vshrl.u32 %v551, 7
        %v553 = vsub.s32 0, %v552
        %v554 = vrot.slane %v507, %v553
        %v555 = vlaneseq
        %v556 = vshrl.u32 %v555, 7
        %v557 = vsub.s32 0, %v556
        %v558 = vrot.slane %v508, %v557
        %v559 = vlaneseq
        %v560 = vshrl.u32 %v559, 7
        %v561 = vsub.s32 0, %v560
        %v562 = vrot.slane %v509, %v561
        %v563 = vlaneseq
        %v564 = vshrl.u32 %v563, 7
        %v565 = vsub.s32 0, %v564
        %v566 = vrot.slane %v510, %v565
        %v567 = vlaneseq
        %v568 = vshrl.u32 %v567, 7
        %v569 = vsub.s32 0, %v568
        %v570 = vrot.slane %v511, %v569
        %v571 = vlaneseq
        %v572 = vshrl.u32 %v571, 7
        %v573 = vsub.s32 0, %v572
        %v574 = vrot.slane %v512, %v573
        %v575 = vlaneseq
        %v576 = vshrl.u32 %v575, 7
        %v577 = vsub.s32 0, %v576
        %v578 = vrot.slane %v513, %v577
        %v579 = vlaneseq
        %v580 = vshrl.u32 %v579, 7
        %v581 = vsub.s32 0, %v580
        %v582 = vrot.slane %v514, %v581
        %v583 = vlaneseq
        %v584 = vshrl.u32 %v583, 7
        %v585 = vsub.s32 0, %v584
        %v586 = vrot.slane %v515, %v585
        %v587 = vlaneseq
        %v588 = vshrl.u32 %v587, 7
        %v589 = vsub.s32 0, %v588
        %v590 = vrot.slane %v516, %v589
        %v591 = vlaneseq
        %v592 = vshrl.u32 %v591, 7
        %v593 = vsub.s32 0, %v592
        %v594 = vrot.slane %v517, %v593
        %v595 = vlaneseq
        %v596 = vshrl.u32 %v595, 7
        %v597 = vsub.s32 0, %v596
        %v598 = vrot.slane %v518, %v597
        %599 = vset.pattern.permute.xlu0 0
        %600 = vperm.xlu0 %599, %v538
        %v601 = vpop.permute.xlu0 %600
        %603 = vset.pattern.permute.xlu0 0
        %604 = vperm.xlu0 %603, %v542
        %v605 = vpop.permute.xlu0 %604
        %607 = vset.pattern.permute.xlu0 0
        %608 = vperm.xlu0 %607, %v546
        %v609 = vpop.permute.xlu0 %608
        %611 = vset.pattern.permute.xlu0 0
        %612 = vperm.xlu0 %611, %v550
        %v613 = vpop.permute.xlu0 %612
        %615 = vset.pattern.permute.xlu0 0
        %616 = vperm.xlu0 %615, %v554
        %v617 = vpop.permute.xlu0 %616
        %619 = vset.pattern.permute.xlu0 0
        %620 = vperm.xlu0 %619, %v558
        %v621 = vpop.permute.xlu0 %620
        %623 = vset.pattern.permute.xlu0 0
        %624 = vperm.xlu0 %623, %v562
        %v625 = vpop.permute.xlu0 %624
        %627 = vset.pattern.permute.xlu0 0
        %628 = vperm.xlu0 %627, %v566
        %v629 = vpop.permute.xlu0 %628
        %631 = vset.pattern.permute.xlu0 0
        %632 = vperm.xlu0 %631, %v570
        %v633 = vpop.permute.xlu0 %632
        %635 = vset.pattern.permute.xlu0 0
        %636 = vperm.xlu0 %635, %v574
        %v637 = vpop.permute.xlu0 %636
        %639 = vset.pattern.permute.xlu0 0
        %640 = vperm.xlu0 %639, %v578
        %v641 = vpop.permute.xlu0 %640
        %643 = vset.pattern.permute.xlu0 0
        %644 = vperm.xlu0 %643, %v582
        %v645 = vpop.permute.xlu0 %644
        %647 = vset.pattern.permute.xlu0 0
        %648 = vperm.xlu0 %647, %v586
        %v649 = vpop.permute.xlu0 %648
        %651 = vset.pattern.permute.xlu0 0
        %652 = vperm.xlu0 %651, %v590
        %v653 = vpop.permute.xlu0 %652
        %655 = vset.pattern.permute.xlu0 0
        %656 = vperm.xlu0 %655, %v594
        %v657 = vpop.permute.xlu0 %656
        %659 = vset.pattern.permute.xlu0 0
        %660 = vperm.xlu0 %659, %v598
        %v661 = vpop.permute.xlu0 %660
        %v663 = vadd.f32 %v487, %v601
        %v664 = vadd.f32 %v488, %v605
        %v665 = vadd.f32 %v489, %v609
        %v666 = vadd.f32 %v490, %v613
        %v667 = vadd.f32 %v491, %v617
        %v668 = vadd.f32 %v492, %v621
        %v669 = vadd.f32 %v493, %v625
        %v670 = vadd.f32 %v494, %v629
        %v671 = vadd.f32 %v495, %v633
        %v672 = vadd.f32 %v496, %v637
        %v673 = vadd.f32 %v497, %v641
        %v674 = vadd.f32 %v498, %v645
        %v675 = vadd.f32 %v499, %v649
        %v676 = vadd.f32 %v500, %v653
        %v677 = vadd.f32 %v501, %v657
        %v678 = vadd.f32 %v502, %v661
        %v679 = vmax.f32 %v663, 0.0
        %v680 = vmax.f32 %v664, 0.0
        %v681 = vmax.f32 %v665, 0.0
        %v682 = vmax.f32 %v666, 0.0
        %v683 = vmax.f32 %v667, 0.0
        %v684 = vmax.f32 %v668, 0.0
        %v685 = vmax.f32 %v669, 0.0
        %v686 = vmax.f32 %v670, 0.0
        %v687 = vmax.f32 %v671, 0.0
        %v688 = vmax.f32 %v672, 0.0
        %v689 = vmax.f32 %v673, 0.0
        %v690 = vmax.f32 %v674, 0.0
        %v691 = vmax.f32 %v675, 0.0
        %v692 = vmax.f32 %v676, 0.0
        %v693 = vmax.f32 %v677, 0.0
        %v694 = vmax.f32 %v678, 0.0
        %vm695 = vcmask 64512
        %v696 = vsel %vm695, %v679, -inf
        %v697 = vrot.slane %v696, 4
        %v698 = vmax.f32 %v696, %v697
        %v699 = vrot.slane %v698, 2
        %v700 = vmax.f32 %v698, %v699
        %v701 = vrot.slane %v700, 1
        %v702 = vmax.f32 %v700, %v701
        %v703 = vsel %vm695, %v680, -inf
        %v704 = vrot.slane %v703, 4
        %v705 = vmax.f32 %v703, %v704
        %v706 = vrot.slane %v705, 2
        %v707 = vmax.f32 %v705, %v706
        %v708 = vrot.slane %v707, 1
        %v709 = vmax.f32 %v707, %v708
        %v710 = vsel %vm695, %v681, -inf
        %v711 = vrot.slane %v710, 4
        %v712 = vmax.f32 %v710, %v711
        %v713 = vrot.slane %v712, 2
        %v714 = vmax.f32 %v712, %v713
        %v715 = vrot.slane %v714, 1
        %v716 = vmax.f32 %v714, %v715
        %v717 = vsel %vm695, %v682, -inf
        %v718 = vrot.slane %v717, 4
        %v719 = vmax.f32 %v717, %v718
        %v720 = vrot.slane %v719, 2
        %v721 = vmax.f32 %v719, %v720
        %v722 = vrot.slane %v721, 1
        %v723 = vmax.f32 %v721, %v722
        %v724 = vsel %vm695, %v683, -inf
        %v725 = vrot.slane %v724, 4
        %v726 = vmax.f32 %v724, %v725
        %v727 = vrot.slane %v726, 2
        %v728 = vmax.f32 %v726, %v727
        %v729 = vrot.slane %v728, 1
        %v730 = vmax.f32 %v728, %v729
        %v731 = vsel %vm695, %v684, -inf
        %v732 = vrot.slane %v731, 4
        %v733 = vmax.f32 %v731, %v732
        %v734 = vrot.slane %v733, 2
        %v735 = vmax.f32 %v733, %v734
        %v736 = vrot.slane %v735, 1
        %v737 = vmax.f32 %v735, %v736
        %v738 = vsel %vm695, %v685, -inf
        %v739 = vrot.slane %v738, 4
        %v740 = vmax.f32 %v738, %v739
        %v741 = vrot.slane %v740, 2
        %v742 = vmax.f32 %v740, %v741
        %v743 = vrot.slane %v742, 1
        %v744 = vmax.f32 %v742, %v743
        %v745 = vsel %vm695, %v686, -inf
        %v746 = vrot.slane %v745, 4
        %v747 = vmax.f32 %v745, %v746
        %v748 = vrot.slane %v747, 2
        %v749 = vmax.f32 %v747, %v748
        %v750 = vrot.slane %v749, 1
        %v751 = vmax.f32 %v749, %v750
        %v752 = vsel %vm695, %v687, -inf
        %v753 = vrot.slane %v752, 4
        %v754 = vmax.f32 %v752, %v753
        %v755 = vrot.slane %v754, 2
        %v756 = vmax.f32 %v754, %v755
        %v757 = vrot.slane %v756, 1
        %v758 = vmax.f32 %v756, %v757
        %v759 = vsel %vm695, %v688, -inf
        %v760 = vrot.slane %v759, 4
        %v761 = vmax.f32 %v759, %v760
        %v762 = vrot.slane %v761, 2
        %v763 = vmax.f32 %v761, %v762
        %v764 = vrot.slane %v763, 1
        %v765 = vmax.f32 %v763, %v764
        %v766 = vsel %vm695, %v689, -inf
        %v767 = vrot.slane %v766, 4
        %v768 = vmax.f32 %v766, %v767
        %v769 = vrot.slane %v768, 2
        %v770 = vmax.f32 %v768, %v769
        %v771 = vrot.slane %v770, 1
        %v772 = vmax.f32 %v770, %v771
        %v773 = vsel %vm695, %v690, -inf
        %v774 = vrot.slane %v773, 4
        %v775 = vmax.f32 %v773, %v774
        %v776 = vrot.slane %v775, 2
        %v777 = vmax.f32 %v775, %v776
        %v778 = vrot.slane %v777, 1
        %v779 = vmax.f32 %v777, %v778
        %v780 = vsel %vm695, %v691, -inf
        %v781 = vrot.slane %v780, 4
        %v782 = vmax.f32 %v780, %v781
        %v783 = vrot.slane %v782, 2
        %v784 = vmax.f32 %v782, %v783
        %v785 = vrot.slane %v784, 1
        %v786 = vmax.f32 %v784, %v785
        %v787 = vsel %vm695, %v692, -inf
        %v788 = vrot.slane %v787, 4
        %v789 = vmax.f32 %v787, %v788
        %v790 = vrot.slane %v789, 2
        %v791 = vmax.f32 %v789, %v790
        %v792 = vrot.slane %v791, 1
        %v793 = vmax.f32 %v791, %v792
        %v794 = vsel %vm695, %v693, -inf
        %v795 = vrot.slane %v794, 4
        %v796 = vmax.f32 %v794, %v795
        %v797 = vrot.slane %v796, 2
        %v798 = vmax.f32 %v796, %v797
        %v799 = vrot.slane %v798, 1
        %v800 = vmax.f32 %v798, %v799
        %v801 = vsel %vm695, %v694, -inf
        %v802 = vrot.slane %v801, 4
        %v803 = vmax.f32 %v801, %v802
        %v804 = vrot.slane %v803, 2
        %v805 = vmax.f32 %v803, %v804
        %v806 = vrot.slane %v805, 1
        %v807 = vmax.f32 %v805, %v806
        %vm824 = vcmask 1041409
        %v825 = vsel %vm824, %v709, %v702
        %vm826 = vcmask 1042434
        %v827 = vsel %vm826, %v716, %v825
        %vm828 = vcmask 1043459
        %v829 = vsel %vm828, %v723, %v827
        %vm830 = vcmask 1044484
        %v831 = vsel %vm830, %v730, %v829
        %vm832 = vcmask 1045509
        %v833 = vsel %vm832, %v737, %v831
        %vm834 = vcmask 1046534
        %v835 = vsel %vm834, %v744, %v833
        %vm836 = vcmask 1047559
        %v837 = vsel %vm836, %v751, %v835
        %v838 = vsel %vm824, %v765, %v758
        %v839 = vsel %vm826, %v772, %v838
        %v840 = vsel %vm828, %v779, %v839
        %v841 = vsel %vm830, %v786, %v840
        %v842 = vsel %vm832, %v793, %v841
        %v843 = vsel %vm834, %v800, %v842
        %v844 = vsel %vm836, %v807, %v843
        %847 = vst.msk [vmem:[%s294] sm:$0xff] %vm695, %v837
        %848 = vst.msk [vmem:[%s294 + $0x8] sm:$0xff] %vm695, %v844
        %p849 = scmp.lt.s32.totalorder %s18, 1
        %s850 = scalar_select %p849, %s18, 1
        %p851 = scmp.lt.s32.totalorder %s19, 0
        %s852 = scalar_select %p851, %s19, 0
        %s853 = smul.addr %s850, 2
        %s854 = sadd.s32 %s852, %s853
        %s855 = smul.addr %s854, 8
        %s856 = scalar_lea.vmem %s3, %s855
        // Predicated region
        $region74: #{a_call__.10} parent=68 // pred_check
          %p857 = pneg %p116
        $region75: #{a_call__.10} parent=68 // pred_check_branch
          %859 = sbr.rel (%p857) target = $region77
        $region76: #{a_call__.10} parent=68 // pred_region
          _
        $region77: #{a_call__.10} parent=68 // pred_fallthru
          _
      $region69: #{a_call__.10} parent=5 // pred_fallthru
        _
      %p860 = scmp.le.s32.totalorder 2, %s9
      // Predicated region
      $region78: #{a_call__.10} parent=5 // pred_check
        %p861 = pneg %p860
      $region79: #{a_call__.10} parent=5 // pred_check_branch
        %863 = sbr.rel (%p861) target = $region81
      $region80: #{a_call__.10} parent=5 // pred_region
        %s864 = ssub.s32 %s9, 2
        // Predicated region
        $region82: #{a_call__.10} parent=80 // pred_check
          %p865 = pneg %p122
        $region83: #{a_call__.10} parent=80 // pred_check_branch
          %867 = sbr.rel (%p865) target = $region85
        $region84: #{a_call__.10} parent=80 // pred_region
          %p868 = scmp.lt.s32.totalorder %s20, 1
          %s869 = scalar_select %p868, %s20, 1
          %p870 = scmp.lt.s32.totalorder %s21, 0
          %s871 = scalar_select %p870, %s21, 0
          %s872 = smul.addr %s869, 2
          %s873 = sadd.s32 %s871, %s872
          %s874 = smul.addr %s873, 8
          %s875 = scalar_lea.vmem %s3, %s874
        $region85: #{a_call__.10} parent=80 // pred_fallthru
          _
      $region81: #{a_call__.10} parent=5 // pred_fallthru
        _
    $region6: #{a_call__.10} parent=1 // loop_footer
      %s13 = sadd.s32 1, %s9
    $region7: #{a_call__.10} parent=1 // loop_footer_branch
      %8 = sbr.rel target = $region3
    $region8: #{a_call__.10} parent=1 // loop_exit
      _

// kernel: a_call__.11
$region0: #{a_call__.11}
  #allocation0 [shape = 'u32[]', space=smem, size = 0x4, offset = 0x4, fixed_abs, tag = 'smem constant byte address 0x4 - core index']
  #allocation1 [shape = 'u32[144,128]{1,0:T(1,128)}', space=vmem, size = 0x12000, scoped, tag = 'internal scratch']
  %s0 = inlined_call_operand.vmem [shape: bf16[8,256], index: 0, kind: input, shape index: {}]
  %s1 = inlined_call_operand.vmem [shape: bf16[8,8], index: 1, kind: input, shape index: {}]
  %s2 = inlined_call_operand.vmem [shape: bf16[8,256], index: 2, kind: output, shape index: {0}]
  %s3 = inlined_call_operand.vmem [shape: f32[1,8,1], index: 3, kind: output, shape index: {1}]
  %s4 = inlined_call_operand.vmem [shape: f32[1,8,1], index: 4, kind: output, shape index: {2}]
  %5 = xla_tuple %s2, %s3, %s4
  %s6 = sld [smem:[#allocation0]]
  $region34: #{a_call__.11} parent=0
    _
  %s8 = ssub.s32 1, %s6
  %s9 = scalar_select 0, %s8, %s6
  // Predicated region
  $region2: #{a_call__.11} parent=0 // pred_check
    _
  $region3: #{a_call__.11} parent=0 // pred_check_branch
    %11 = sbr.rel (0) target = $region5
  $region4: #{a_call__.11} parent=0 // pred_region
    _
  $region5: #{a_call__.11} parent=0 // pred_fallthru
    _
  // Predicated region
  $region6: #{a_call__.11} parent=0 // pred_check
    _
  $region7: #{a_call__.11} parent=0 // pred_check_branch
    %13 = sbr.rel (0) target = $region9
  $region8: #{a_call__.11} parent=0 // pred_region
    _
  $region9: #{a_call__.11} parent=0 // pred_fallthru
    _
  %v15 = vld [vmem:[%s0] sm:$0xff]
  %v16 = vld [vmem:[%s1] sm:$0xf]
  %v18 = vunpack.c.l.b16 %v15
  %v19 = vunpack.c.h.b16 %v15
  %v20 = vpack.c.b16 %v18, %v18
  %v21 = vpack.c.b16 %v19, %v19
  %vm22 = vcmask 64512
  %v24 = vsel %vm22, %v16, 0
  %vm26 = vcmask 1043456
  %v28 = vsel %vm26, %v20, 0
  %v31 = vsel %vm26, %v21, 0
  %33 = vmatprep.subr.bf16.mxu0 %v31
  %34 = vmatpush1.bf16.msra.mxu0 %v28
  %35 = vmatprep.subr.bf16.mxu0 0
  %36 = vmatpush1.bf16.msra.mxu0 0
  %37 = vmatprep.subr.bf16.mxu0 0
  %38 = vmatpush1.bf16.msra.mxu0 0
  %39 = vmatprep.subr.bf16.mxu0 0
  %40 = vmatpush1.bf16.msra.mxu0 0
  %41 = vmatprep.subr.bf16.mxu0 0
  %42 = vmatpush1.bf16.msra.mxu0 0
  %43 = vmatprep.subr.bf16.mxu0 0
  %44 = vmatpush1.bf16.msra.mxu0 0
  %45 = vmatprep.subr.bf16.mxu0 0
  %46 = vmatpush1.bf16.msra.mxu0 0
  %47 = vmatprep.subr.bf16.mxu0 0
  %48 = vmatpush1.bf16.msra.mxu0 0
  %49 = vmatprep.subr.bf16.mxu0 0
  %50 = vmatpush1.bf16.msra.mxu0 0
  %51 = vmatprep.subr.bf16.mxu0 0
  %52 = vmatpush1.bf16.msra.mxu0 0
  %53 = vmatprep.subr.bf16.mxu0 0
  %54 = vmatpush1.bf16.msra.mxu0 0
  %55 = vmatprep.subr.bf16.mxu0 0
  %56 = vmatpush1.bf16.msra.mxu0 0
  %57 = vmatprep.subr.bf16.mxu0 0
  %58 = vmatpush1.bf16.msra.mxu0 0
  %59 = vmatprep.subr.bf16.mxu0 0
  %60 = vmatpush1.bf16.msra.mxu0 0
  %61 = vmatprep.subr.bf16.mxu0 0
  %62 = vmatpush1.bf16.msra.mxu0 0
  %63 = vmatprep.subr.bf16.mxu0 0
  %64 = vmatpush1.bf16.msra.mxu0 0
  %65 = vmatprep.mubr.bf16.mxu0 0
  %66 = vmatmul.mubr.bf16.gmra.mrb[0].mxu0 %v24
  %v67 = vpop.f32.mrb[0].mxu0
  %v68 = vadd.f32 0.0, %v67
  %v69 = vpop.f32.mrb[0].mxu0
  %v70 = vadd.f32 0.0, %v69
  %v71 = vpop.f32.mrb[0].mxu0
  %v72 = vpop.f32.mrb[0].mxu0
  %73 = vdwg.mxu0
  %v74 = vpack.c.bf16 %v68, %v68
  %v75 = vpack.c.bf16 %v70, %v70
  %v78 = vunpack.c.l.b16 %v74
  %v79 = vunpack.c.l.b16 %v75
  %v80 = vpack.c.b16 %v79, %v78
  %82 = vst [vmem:[%s2] sm:$0xff] %v80
  %v83 = vadd.f32 %v68, %v70
  %84 = vadd.xlane.f32.xlu0 %v83
  %v85 = vpop.xlane.xlu0 %84
  %vm86 = vcmask 7168
  %87 = vst.msk [vmem:[%s3] sm:$0xff] %vm86, %v85
  %v88 = vmul.f32 %v68, %v68
  %v89 = vmul.f32 %v70, %v70
  %v90 = vadd.f32 %v88, %v89
  %91 = vadd.xlane.f32.xlu0 %v90
  %v92 = vpop.xlane.xlu0 %91
  %93 = vst.msk [vmem:[%s4] sm:$0xff] %vm86, %v92
  // Predicated region
  $region10: #{a_call__.11} parent=0 // pred_check
    _
  $region11: #{a_call__.11} parent=0 // pred_check_branch
    %95 = sbr.rel (0) target = $region13
  $region12: #{a_call__.11} parent=0 // pred_region
    _
  $region13: #{a_call__.11} parent=0 // pred_fallthru
    _
  // Predicated region
  $region14: #{a_call__.11} parent=0 // pred_check
    _
  $region15: #{a_call__.11} parent=0 // pred_check_branch
    %97 = sbr.rel (0) target = $region17
  $region16: #{a_call__.11} parent=0 // pred_region
    _
  $region17: #{a_call__.11} parent=0 // pred_fallthru
    _
  // Predicated region
  $region18: #{a_call__.11} parent=0 // pred_check
    _
  $region19: #{a_call__.11} parent=0 // pred_check_branch
    %99 = sbr.rel (0) target = $region21
  $region20: #{a_call__.11} parent=0 // pred_region
    _
  $region21: #{a_call__.11} parent=0 // pred_fallthru
    _
  // Predicated region
  $region22: #{a_call__.11} parent=0 // pred_check
    _
  $region23: #{a_call__.11} parent=0 // pred_check_branch
    %101 = sbr.rel (0) target = $region25
  $region24: #{a_call__.11} parent=0 // pred_region
    _
  $region25: #{a_call__.11} parent=0 // pred_fallthru
    _
  // Predicated region
  $region26: #{a_call__.11} parent=0 // pred_check
    _
  $region27: #{a_call__.11} parent=0 // pred_check_branch
    %103 = sbr.rel (0) target = $region29
  $region28: #{a_call__.11} parent=0 // pred_region
    _
  $region29: #{a_call__.11} parent=0 // pred_fallthru
    _
  // Predicated region
  $region30: #{a_call__.11} parent=0 // pred_check
    _
  $region31: #{a_call__.11} parent=0 // pred_check_branch
    %105 = sbr.rel (0) target = $region33
  $region32: #{a_call__.11} parent=0 // pred_region
    _
  $region33: #{a_call__.11} parent=0 // pred_fallthru
    _

// kernel: a_call__.12
$region0: #{a_call__.12}
  #allocation0 [shape = 'u32[]', space=smem, size = 0x4, offset = 0x4, fixed_abs, tag = 'smem constant byte address 0x4 - core index']
  #allocation1 [shape = 'u32[144,128]{1,0:T(1,128)}', space=vmem, size = 0x12000, scoped, tag = 'internal scratch']
  %s0 = inlined_call_operand.vmem [shape: bf16[8,256], index: 0, kind: input, shape index: {}]
  %s1 = inlined_call_operand.vmem [shape: f32[8,1], index: 1, kind: input, shape index: {}]
  %s2 = inlined_call_operand.vmem [shape: f32[8,1], index: 2, kind: input, shape index: {}]
  %s3 = inlined_call_operand.vmem [shape: bf16[16,8], index: 3, kind: input, shape index: {}]
  %s4 = inlined_call_operand.vmem [shape: bf16[16,256], index: 4, kind: output, shape index: {0}]
  %s5 = inlined_call_operand.vmem [shape: f32[1,16,1], index: 5, kind: output, shape index: {1}]
  %s6 = inlined_call_operand.vmem [shape: f32[1,16,1], index: 6, kind: output, shape index: {2}]
  %7 = xla_tuple %s4, %s5, %s6
  %s8 = sld [smem:[#allocation0]]
  $region42: #{a_call__.12} parent=0
    _
  %s10 = ssub.s32 1, %s8
  %s11 = scalar_select 0, %s10, %s8
  // Predicated region
  $region2: #{a_call__.12} parent=0 // pred_check
    _
  $region3: #{a_call__.12} parent=0 // pred_check_branch
    %13 = sbr.rel (0) target = $region5
  $region4: #{a_call__.12} parent=0 // pred_region
    _
  $region5: #{a_call__.12} parent=0 // pred_fallthru
    _
  // Predicated region
  $region6: #{a_call__.12} parent=0 // pred_check
    _
  $region7: #{a_call__.12} parent=0 // pred_check_branch
    %15 = sbr.rel (0) target = $region9
  $region8: #{a_call__.12} parent=0 // pred_region
    _
  $region9: #{a_call__.12} parent=0 // pred_fallthru
    _
  // Predicated region
  $region10: #{a_call__.12} parent=0 // pred_check
    _
  $region11: #{a_call__.12} parent=0 // pred_check_branch
    %17 = sbr.rel (0) target = $region13
  $region12: #{a_call__.12} parent=0 // pred_region
    _
  $region13: #{a_call__.12} parent=0 // pred_fallthru
    _
  // Predicated region
  $region14: #{a_call__.12} parent=0 // pred_check
    _
  $region15: #{a_call__.12} parent=0 // pred_check_branch
    %19 = sbr.rel (0) target = $region17
  $region16: #{a_call__.12} parent=0 // pred_region
    _
  $region17: #{a_call__.12} parent=0 // pred_fallthru
    _
  %v21 = vld [vmem:[%s0] sm:$0xff]
  %v22 = vunpack.c.l.bf16 %v21
  %v23 = vunpack.c.h.bf16 %v21
  %v24 = vld [vmem:[%s1] sm:$0xff]
  %26 = vset.pattern.permute.xlu0 0
  %27 = vperm.xlu0 %26, %v24
  %v28 = vpop.permute.xlu0 %27
  %v30 = vmul.f32 %v22, %v28
  %v31 = vmul.f32 %v23, %v28
  %v32 = vld [vmem:[%s2] sm:$0xff]
  %34 = vset.pattern.permute.xlu0 0
  %35 = vperm.xlu0 %34, %v32
  %v36 = vpop.permute.xlu0 %35
  %v38 = vadd.f32 %v30, %v36
  %v39 = vadd.f32 %v31, %v36
  %v40 = vmax.f32 %v38, 0.0
  %v41 = vmax.f32 %v39, 0.0
  %v42 = vpack.c.bf16 %v40, %v40
  %v43 = vpack.c.bf16 %v41, %v41
  %v44 = vld [vmem:[%s3] sm:$0xf]
  %v45 = vld [vmem:[%s3 + $0x4] sm:$0xf]
  %v48 = vunpack.c.l.b16 %v44
  %v49 = vunpack.c.l.b16 %v45
  %v50 = vpack.c.b16 %v49, %v48
  %vm51 = vcmask 64512
  %v53 = vsel %vm51, %v50, 0
  %vm55 = vcmask 1043456
  %v57 = vsel %vm55, %v42, 0
  %v60 = vsel %vm55, %v43, 0
  %62 = vmatprep.subr.bf16.mxu0 %v60
  %63 = vmatpush1.bf16.msra.mxu0 %v57
  %64 = vmatprep.subr.bf16.mxu0 0
  %65 = vmatpush1.bf16.msra.mxu0 0
  %66 = vmatprep.subr.bf16.mxu0 0
  %67 = vmatpush1.bf16.msra.mxu0 0
  %68 = vmatprep.subr.bf16.mxu0 0
  %69 = vmatpush1.bf16.msra.mxu0 0
  %70 = vmatprep.subr.bf16.mxu0 0
  %71 = vmatpush1.bf16.msra.mxu0 0
  %72 = vmatprep.subr.bf16.mxu0 0
  %73 = vmatpush1.bf16.msra.mxu0 0
  %74 = vmatprep.subr.bf16.mxu0 0
  %75 = vmatpush1.bf16.msra.mxu0 0
  %76 = vmatprep.subr.bf16.mxu0 0
  %77 = vmatpush1.bf16.msra.mxu0 0
  %78 = vmatprep.subr.bf16.mxu0 0
  %79 = vmatpush1.bf16.msra.mxu0 0
  %80 = vmatprep.subr.bf16.mxu0 0
  %81 = vmatpush1.bf16.msra.mxu0 0
  %82 = vmatprep.subr.bf16.mxu0 0
  %83 = vmatpush1.bf16.msra.mxu0 0
  %84 = vmatprep.subr.bf16.mxu0 0
  %85 = vmatpush1.bf16.msra.mxu0 0
  %86 = vmatprep.subr.bf16.mxu0 0
  %87 = vmatpush1.bf16.msra.mxu0 0
  %88 = vmatprep.subr.bf16.mxu0 0
  %89 = vmatpush1.bf16.msra.mxu0 0
  %90 = vmatprep.subr.bf16.mxu0 0
  %91 = vmatpush1.bf16.msra.mxu0 0
  %92 = vmatprep.subr.bf16.mxu0 0
  %93 = vmatpush1.bf16.msra.mxu0 0
  %94 = vmatprep.mubr.bf16.mxu0 0
  %95 = vmatmul.mubr.bf16.gmra.mrb[0].mxu0 %v53
  %v96 = vpop.f32.mrb[0].mxu0
  %v97 = vadd.f32 0.0, %v96
  %v98 = vpop.f32.mrb[0].mxu0
  %v99 = vadd.f32 0.0, %v98
  %v100 = vpop.f32.mrb[0].mxu0
  %v101 = vadd.f32 0.0, %v100
  %v102 = vpop.f32.mrb[0].mxu0
  %v103 = vadd.f32 0.0, %v102
  %104 = vdwg.mxu0
  %v105 = vpack.c.bf16 %v101, %v97
  %v106 = vpack.c.bf16 %v103, %v99
  %v109 = vunpack.c.l.b16 %v105
  %v110 = vunpack.c.l.b16 %v106
  %v111 = vunpack.c.h.b16 %v105
  %v112 = vunpack.c.h.b16 %v106
  %v113 = vpack.c.b16 %v110, %v109
  %v114 = vpack.c.b16 %v112, %v111
  %117 = vst [vmem:[%s4] sm:$0xff] %v113
  %118 = vst [vmem:[%s4 + $0x8] sm:$0xff] %v114
  %v119 = vadd.f32 %v97, %v99
  %120 = vadd.xlane.f32.xlu0 %v119
  %v121 = vpop.xlane.xlu0 %120
  %v122 = vadd.f32 %v101, %v103
  %123 = vadd.xlane.f32.xlu0 %v122
  %v124 = vpop.xlane.xlu0 %123
  %vm125 = vcmask 7168
  %126 = vst.msk [vmem:[%s5] sm:$0xff] %vm125, %v121
  %127 = vst.msk [vmem:[%s5 + $0x8] sm:$0xff] %vm125, %v124
  %v128 = vmul.f32 %v97, %v97
  %v129 = vmul.f32 %v99, %v99
  %v130 = vmul.f32 %v101, %v101
  %v131 = vmul.f32 %v103, %v103
  %v132 = vadd.f32 %v128, %v129
  %133 = vadd.xlane.f32.xlu0 %v132
  %v134 = vpop.xlane.xlu0 %133
  %v135 = vadd.f32 %v130, %v131
  %136 = vadd.xlane.f32.xlu0 %v135
  %v137 = vpop.xlane.xlu0 %136
  %138 = vst.msk [vmem:[%s6] sm:$0xff] %vm125, %v134
  %139 = vst.msk [vmem:[%s6 + $0x8] sm:$0xff] %vm125, %v137
  // Predicated region
  $region18: #{a_call__.12} parent=0 // pred_check
    _
  $region19: #{a_call__.12} parent=0 // pred_check_branch
    %141 = sbr.rel (0) target = $region21
  $region20: #{a_call__.12} parent=0 // pred_region
    _
  $region21: #{a_call__.12} parent=0 // pred_fallthru
    _
  // Predicated region
  $region22: #{a_call__.12} parent=0 // pred_check
    _
  $region23: #{a_call__.12} parent=0 // pred_check_branch
    %143 = sbr.rel (0) target = $region25
  $region24: #{a_call__.12} parent=0 // pred_region
    _
  $region25: #{a_call__.12} parent=0 // pred_fallthru
    _
  // Predicated region
  $region26: #{a_call__.12} parent=0 // pred_check
    _
  $region27: #{a_call__.12} parent=0 // pred_check_branch
    %145 = sbr.rel (0) target = $region29
  $region28: #{a_call__.12} parent=0 // pred_region
    _
  $region29: #{a_call__.12} parent=0 // pred_fallthru
    _
  // Predicated region
  $region30: #{a_call__.12} parent=0 // pred_check
    _
  $region31: #{a_call__.12} parent=0 // pred_check_branch
    %147 = sbr.rel (0) target = $region33
  $region32: #{a_call__.12} parent=0 // pred_region
    _
  $region33: #{a_call__.12} parent=0 // pred_fallthru
    _
  // Predicated region
  $region34: #{a_call__.12} parent=0 // pred_check
    _
  $region35: #{a_call__.12} parent=0 // pred_check_branch
    %149 = sbr.rel (0) target = $region37
  $region36: #{a_call__.12} parent=0 // pred_region
    _
  $region37: #{a_call__.12} parent=0 // pred_fallthru
    _
  // Predicated region
  $region38: #{a_call__.12} parent=0 // pred_check
    _
  $region39: #{a_call__.12} parent=0 // pred_check_branch
    %151 = sbr.rel (0) target = $region41
  $region40: #{a_call__.12} parent=0 // pred_region
    _
  $region41: #{a_call__.12} parent=0 // pred_fallthru
    _

// kernel: a_call__.13
$region0: #{a_call__.13}
  #allocation0 [shape = 'u32[]', space=smem, size = 0x4, offset = 0x4, fixed_abs, tag = 'smem constant byte address 0x4 - core index']
  #allocation1 [shape = 'u32[144,128]{1,0:T(1,128)}', space=vmem, size = 0x12000, scoped, tag = 'internal scratch']
  %s0 = inlined_call_operand.vmem [shape: bf16[16,2,16,8], index: 0, kind: input, shape index: {}]
  %s1 = inlined_call_operand.vmem [shape: f32[16,1,1], index: 1, kind: input, shape index: {}]
  %s2 = inlined_call_operand.vmem [shape: f32[16,1,1], index: 2, kind: input, shape index: {}]
  %s3 = inlined_call_operand.vmem [shape: f32[2,16,8], index: 3, kind: output, shape index: {}]
  %s4 = sld [smem:[#allocation0]]
  $region86: #{a_call__.13} parent=0
    _
  %s6 = ssub.s32 1, %s4
  %s7 = scalar_select 0, %s6, %s4
  $region1: #{a_call__.13} parent=0
    #allocation2 [shape = 'u8[131072]{0}', space=vmem, size = 0x20000, scoped, tag = 'input window, operand 0']
    loop: start=0, step=1, limit=4
    $region2: #{a_call__.13} parent=1 // loop_pre_header
      _
    $region3: #{a_call__.13} parent=1 // loop_header
      %s9 = sphi 0, %s13
      %p10 = scmp.ge.s32.totalorder %s9, 4
      %s16 = sphi 0, %s28
      %s17 = sphi 0, %s24
      %s18 = sphi 0, %s16
      %s19 = sphi 0, %s17
      %s20 = sphi 0, %s18
      %s21 = sphi 0, %s19
      %s33 = sphi 0, %s35
      %s36 = sphi 0, %s33
      %s37 = sphi 0, %s36
      %s53 = sphi 0, %s37
      %s57 = sphi 0, %s57
      %s59 = sphi 0, %s57
      %s60 = sphi 0, %s59
      %s74 = sphi 0, %s60
      %s78 = sphi 0, %s78
      %s80 = sphi 0, %s78
      %s81 = sphi 0, %s80
      %s95 = sphi 0, %s81
      %s103 = sphi 0, %s105
      %s106 = sphi 0, %s103
      %s107 = sphi 0, %s106
      %s123 = sphi 0, %s107
    $region4: #{a_call__.13} parent=1 // loop_header_branch
      %12 = sbr.rel (%p10) target = $region8
    $region5: #{a_call__.13} parent=1 // loop_body
      %s14 = ssub.s32 %s9, 1
      %s15 = ssub.s32 %s9, 2
      %s22 = sadd.s32 1, %s17
      %p23 = scmp.ge.s32.totalorder %s22, 1
      %s24 = scalar_select %p23, 0, %s22
      %s25 = sadd.s32 1, %s16
      %s26 = scalar_select %p23, %s25, %s16
      %p27 = scmp.ge.s32.totalorder %s26, 2
      %s28 = scalar_select %p27, 0, %s26
      %s29 = ssub.s32 %s16, %s28
      %s30 = ssub.s32 %s17, %s24
      %s31 = sor.u32 %s29, %s30
      %p32 = scmp.eq.s32.totalorder %s31, 0
      %s34 = sadd.s32 %s33, 1
      %s35 = scalar_select %p32, %s33, %s34
      %p38 = pneg %p32
      %p39 = scmp.eq.s32.totalorder %s9, 1
      %p40 = por %p38, %p39
      %p41 = scmp.ne.s32.totalorder %s33, %s36
      %p42 = scmp.eq.s32.totalorder %s9, 0
      %p43 = por %p41, %p42
      %p44 = scmp.ne.s32.totalorder %s33, %s36
      %p45 = scmp.eq.s32.totalorder %s14, 1
      %p46 = por %p44, %p45
      %p47 = scmp.ne.s32.totalorder %s36, %s37
      %p48 = scmp.eq.s32.totalorder %s14, 0
      %p49 = por %p47, %p48
      %p50 = scmp.ne.s32.totalorder %s36, %s37
      %p51 = scmp.eq.s32.totalorder %s15, 1
      %p52 = por %p50, %p51
      %p54 = scmp.ne.s32.totalorder %s37, %s53
      %p55 = scmp.eq.s32.totalorder %s15, 0
      %p56 = por %p54, %p55
      %s58 = sadd.s32 %s57, 1
      %p61 = scmp.eq.s32.totalorder %s9, 1
      %p62 = scmp.ne.s32.totalorder %s57, %s59
      %p63 = scmp.eq.s32.totalorder %s9, 0
      %p64 = por %p62, %p63
      %p65 = scmp.ne.s32.totalorder %s57, %s59
      %p66 = scmp.eq.s32.totalorder %s14, 1
      %p67 = por %p65, %p66
      %p68 = scmp.ne.s32.totalorder %s59, %s60
      %p69 = scmp.eq.s32.totalorder %s14, 0
      %p70 = por %p68, %p69
      %p71 = scmp.ne.s32.totalorder %s59, %s60
      %p72 = scmp.eq.s32.totalorder %s15, 1
      %p73 = por %p71, %p72
      %p75 = scmp.ne.s32.totalorder %s60, %s74
      %p76 = scmp.eq.s32.totalorder %s15, 0
      %p77 = por %p75, %p76
      %s79 = sadd.s32 %s78, 1
      %p82 = scmp.eq.s32.totalorder %s9, 1
      %p83 = scmp.ne.s32.totalorder %s78, %s80
      %p84 = scmp.eq.s32.totalorder %s9, 0
      %p85 = por %p83, %p84
      %p86 = scmp.ne.s32.totalorder %s78, %s80
      %p87 = scmp.eq.s32.totalorder %s14, 1
      %p88 = por %p86, %p87
      %p89 = scmp.ne.s32.totalorder %s80, %s81
      %p90 = scmp.eq.s32.totalorder %s14, 0
      %p91 = por %p89, %p90
      %p92 = scmp.ne.s32.totalorder %s80, %s81
      %p93 = scmp.eq.s32.totalorder %s15, 1
      %p94 = por %p92, %p93
      %p96 = scmp.ne.s32.totalorder %s81, %s95
      %p97 = scmp.eq.s32.totalorder %s15, 0
      %p98 = por %p96, %p97
      %s99 = ssub.s32 %s16, %s28
      %s100 = ssub.s32 %s17, %s24
      %s101 = sor.u32 %s99, %s100
      %p102 = scmp.eq.s32.totalorder %s101, 0
      %s104 = sadd.s32 %s103, 1
      %s105 = scalar_select %p102, %s103, %s104
      %p108 = pneg %p102
      %p109 = scmp.eq.s32.totalorder %s9, 1
      %p110 = por %p108, %p109
      %p111 = scmp.ne.s32.totalorder %s103, %s106
      %p112 = scmp.eq.s32.totalorder %s9, 0
      %p113 = por %p111, %p112
      %p114 = scmp.ne.s32.totalorder %s103, %s106
      %p115 = scmp.eq.s32.totalorder %s14, 1
      %p116 = por %p114, %p115
      %p117 = scmp.ne.s32.totalorder %s106, %s107
      %p118 = scmp.eq.s32.totalorder %s14, 0
      %p119 = por %p117, %p118
      %p120 = scmp.ne.s32.totalorder %s106, %s107
      %p121 = scmp.eq.s32.totalorder %s15, 1
      %p122 = por %p120, %p121
      %p124 = scmp.ne.s32.totalorder %s107, %s123
      %p125 = scmp.eq.s32.totalorder %s15, 0
      %p126 = por %p124, %p125
      %p127 = scmp.le.s32.totalorder 1, %s9
      %p128 = scmp.lt.s32.totalorder %s9, 3
      %p129 = pnand %p127, %p128
      %p130 = pneg %p129
      // Predicated region
      $region9: #{a_call__.13} parent=5 // pred_check
        _
      $region10: #{a_call__.13} parent=5 // pred_check_branch
        %132 = sbr.rel (%p129) target = $region12
      $region11: #{a_call__.13} parent=5 // pred_region
        %s133 = ssub.s32 %s9, 1
        // Predicated region
        $region13: #{a_call__.13} parent=11 // pred_check
          %p134 = pneg %p70
        $region14: #{a_call__.13} parent=11 // pred_check_branch
          %136 = sbr.rel (%p134) target = $region16
        $region15: #{a_call__.13} parent=11 // pred_region
          _
        $region16: #{a_call__.13} parent=11 // pred_fallthru
          _
        // Predicated region
        $region17: #{a_call__.13} parent=11 // pred_check
          %p137 = pneg %p91
        $region18: #{a_call__.13} parent=11 // pred_check_branch
          %139 = sbr.rel (%p137) target = $region20
        $region19: #{a_call__.13} parent=11 // pred_region
          _
        $region20: #{a_call__.13} parent=11 // pred_fallthru
          _
      $region12: #{a_call__.13} parent=5 // pred_fallthru
        _
      %p140 = scmp.lt.s32.totalorder %s9, 2
      // Predicated region
      $region21: #{a_call__.13} parent=5 // pred_check
        %p141 = pneg %p140
      $region22: #{a_call__.13} parent=5 // pred_check_branch
        %143 = sbr.rel (%p141) target = $region24
      $region23: #{a_call__.13} parent=5 // pred_region
        // Predicated region
        $region25: #{a_call__.13} parent=23 // pred_check
          %p144 = pneg %p43
        $region26: #{a_call__.13} parent=23 // pred_check_branch
          %146 = sbr.rel (%p144) target = $region28
        $region27: #{a_call__.13} parent=23 // pred_region
          %s147 = sand.u32 %s33, 1
          %s148 = sand.u32 %s33, 1
          %s149 = smul.addr %s148, 128
          %s150 = scalar_lea.vmem [#allocation2], %s149
          %s151 = smul.addr %s16, 2
          %s152 = sadd.s32 %s17, %s151
          %s153 = smul.addr %s152, 4
          %s154 = scalar_lea.vmem %s0, %s153
          // Predicated region
          $region29: #{a_call__.13} parent=27 // pred_check
            _
          $region30: #{a_call__.13} parent=27 // pred_check_branch
            %156 = sbr.rel (0) target = $region32
          $region31: #{a_call__.13} parent=27 // pred_region
            // Predicated region
            $region33: #{a_call__.13} parent=31 // pred_check
              _
            $region34: #{a_call__.13} parent=31 // pred_check_branch
              %158 = sbr.rel target = $region36
            $region35: #{a_call__.13} parent=31 // pred_region
              // Predicated region
              $region48: #{a_call__.13} parent=35 // pred_check
                _
              $region49: #{a_call__.13} parent=35 // pred_check_branch
                %235 = sbr.rel (0) target = $region51
              $region50: #{a_call__.13} parent=35 // pred_region
                loop: start=0, step=1, limit=1
                $region52: #{a_call__.13} parent=50 // loop_pre_header
                  _
                $region53: #{a_call__.13} parent=50 // loop_header
                  %s237 = sphi 0, %s241
                  %p238 = scmp.ge.s32.totalorder %s237, 1
                  %s242 = sphi %s154, %s154
                  %s243 = sphi %s150, %s150
                $region54: #{a_call__.13} parent=50 // loop_header_branch
                  %240 = sbr.rel (%p238) target = $region58
                $region55: #{a_call__.13} parent=50 // loop_body
                  _
                $region56: #{a_call__.13} parent=50 // loop_footer
                  %s241 = sadd.s32 1, %s237
                $region57: #{a_call__.13} parent=50 // loop_footer_branch
                  %236 = sbr.rel target = $region53
                $region58: #{a_call__.13} parent=50 // loop_exit
                  _
                loop: start=0, step=1, limit=1
                $region59: #{a_call__.13} parent=50 // loop_pre_header
                  _
                $region60: #{a_call__.13} parent=50 // loop_header
                  %s246 = sphi 0, %s250
                  %p247 = scmp.ge.s32.totalorder %s246, 1
                  %s251 = sphi %s154, %s154
                  %s252 = sphi %s150, %s150
                $region61: #{a_call__.13} parent=50 // loop_header_branch
                  %249 = sbr.rel (%p247) target = $region65
                $region62: #{a_call__.13} parent=50 // loop_body
                  %v253 = vld [vmem:[%s251] sm:$0xf]
                  %254 = vst [vmem:[%s252] sm:$0xf] %v253
                  %v255 = vld [vmem:[%s251 + $0x4] sm:$0xf]
                  %256 = vst [vmem:[%s252 + $0x4] sm:$0xf] %v255
                  %v257 = vld [vmem:[%s251 + $0x10] sm:$0xf]
                  %258 = vst [vmem:[%s252 + $0x8] sm:$0xf] %v257
                  %v259 = vld [vmem:[%s251 + $0x14] sm:$0xf]
                  %260 = vst [vmem:[%s252 + $0xc] sm:$0xf] %v259
                  %v261 = vld [vmem:[%s251 + $0x20] sm:$0xf]
                  %262 = vst [vmem:[%s252 + $0x10] sm:$0xf] %v261
                  %v263 = vld [vmem:[%s251 + $0x24] sm:$0xf]
                  %264 = vst [vmem:[%s252 + $0x14] sm:$0xf] %v263
                  %v265 = vld [vmem:[%s251 + $0x30] sm:$0xf]
                  %266 = vst [vmem:[%s252 + $0x18] sm:$0xf] %v265
                  %v267 = vld [vmem:[%s251 + $0x34] sm:$0xf]
                  %268 = vst [vmem:[%s252 + $0x1c] sm:$0xf] %v267
                  %v269 = vld [vmem:[%s251 + $0x40] sm:$0xf]
                  %270 = vst [vmem:[%s252 + $0x20] sm:$0xf] %v269
                  %v271 = vld [vmem:[%s251 + $0x44] sm:$0xf]
                  %272 = vst [vmem:[%s252 + $0x24] sm:$0xf] %v271
                  %v273 = vld [vmem:[%s251 + $0x50] sm:$0xf]
                  %274 = vst [vmem:[%s252 + $0x28] sm:$0xf] %v273
                  %v275 = vld [vmem:[%s251 + $0x54] sm:$0xf]
                  %276 = vst [vmem:[%s252 + $0x2c] sm:$0xf] %v275
                  %v277 = vld [vmem:[%s251 + $0x60] sm:$0xf]
                  %278 = vst [vmem:[%s252 + $0x30] sm:$0xf] %v277
                  %v279 = vld [vmem:[%s251 + $0x64] sm:$0xf]
                  %280 = vst [vmem:[%s252 + $0x34] sm:$0xf] %v279
                  %v281 = vld [vmem:[%s251 + $0x70] sm:$0xf]
                  %282 = vst [vmem:[%s252 + $0x38] sm:$0xf] %v281
                  %v283 = vld [vmem:[%s251 + $0x74] sm:$0xf]
                  %284 = vst [vmem:[%s252 + $0x3c] sm:$0xf] %v283
                  %v285 = vld [vmem:[%s251 + $0x80] sm:$0xf]
                  %286 = vst [vmem:[%s252 + $0x40] sm:$0xf] %v285
                  %v287 = vld [vmem:[%s251 + $0x84] sm:$0xf]
                  %288 = vst [vmem:[%s252 + $0x44] sm:$0xf] %v287
                  %v289 = vld [vmem:[%s251 + $0x90] sm:$0xf]
                  %290 = vst [vmem:[%s252 + $0x48] sm:$0xf] %v289
                  %v291 = vld [vmem:[%s251 + $0x94] sm:$0xf]
                  %292 = vst [vmem:[%s252 + $0x4c] sm:$0xf] %v291
                  %v293 = vld [vmem:[%s251 + $0xa0] sm:$0xf]
                  %294 = vst [vmem:[%s252 + $0x50] sm:$0xf] %v293
                  %v295 = vld [vmem:[%s251 + $0xa4] sm:$0xf]
                  %296 = vst [vmem:[%s252 + $0x54] sm:$0xf] %v295
                  %v297 = vld [vmem:[%s251 + $0xb0] sm:$0xf]
                  %298 = vst [vmem:[%s252 + $0x58] sm:$0xf] %v297
                  %v299 = vld [vmem:[%s251 + $0xb4] sm:$0xf]
                  %300 = vst [vmem:[%s252 + $0x5c] sm:$0xf] %v299
                  %v301 = vld [vmem:[%s251 + $0xc0] sm:$0xf]
                  %302 = vst [vmem:[%s252 + $0x60] sm:$0xf] %v301
                  %v303 = vld [vmem:[%s251 + $0xc4] sm:$0xf]
                  %304 = vst [vmem:[%s252 + $0x64] sm:$0xf] %v303
                  %v305 = vld [vmem:[%s251 + $0xd0] sm:$0xf]
                  %306 = vst [vmem:[%s252 + $0x68] sm:$0xf] %v305
                  %v307 = vld [vmem:[%s251 + $0xd4] sm:$0xf]
                  %308 = vst [vmem:[%s252 + $0x6c] sm:$0xf] %v307
                  %v309 = vld [vmem:[%s251 + $0xe0] sm:$0xf]
                  %310 = vst [vmem:[%s252 + $0x70] sm:$0xf] %v309
                  %v311 = vld [vmem:[%s251 + $0xe4] sm:$0xf]
                  %312 = vst [vmem:[%s252 + $0x74] sm:$0xf] %v311
                  %v313 = vld [vmem:[%s251 + $0xf0] sm:$0xf]
                  %314 = vst [vmem:[%s252 + $0x78] sm:$0xf] %v313
                  %v315 = vld [vmem:[%s251 + $0xf4] sm:$0xf]
                  %316 = vst [vmem:[%s252 + $0x7c] sm:$0xf] %v315
                $region63: #{a_call__.13} parent=50 // loop_footer
                  %s250 = sadd.s32 1, %s246
                $region64: #{a_call__.13} parent=50 // loop_footer_branch
                  %245 = sbr.rel target = $region60
                $region65: #{a_call__.13} parent=50 // loop_exit
                  _
              $region51: #{a_call__.13} parent=35 // pred_fallthru
                _
            $region36: #{a_call__.13} parent=31 // pred_fallthru
              _
            // Predicated region
            $region37: #{a_call__.13} parent=31 // pred_check
              _
            $region38: #{a_call__.13} parent=31 // pred_check_branch
              %160 = sbr.rel (0) target = $region40
            $region39: #{a_call__.13} parent=31 // pred_region
              loop: start=0, step=1, limit=1
              $region41: #{a_call__.13} parent=39 // loop_pre_header
                _
              $region42: #{a_call__.13} parent=39 // loop_header
                %s163 = sphi 0, %s167
                %p164 = scmp.ge.s32.totalorder %s163, 1
                %s168 = sphi %s154, %s154
                %s169 = sphi %s150, %s150
              $region43: #{a_call__.13} parent=39 // loop_header_branch
                %166 = sbr.rel (%p164) target = $region47
              $region44: #{a_call__.13} parent=39 // loop_body
                %v170 = vld [vmem:[%s168] sm:$0xf]
                %171 = vst [vmem:[%s169] sm:$0xf] %v170
                %v172 = vld [vmem:[%s168 + $0x4] sm:$0xf]
                %173 = vst [vmem:[%s169 + $0x4] sm:$0xf] %v172
                %v174 = vld [vmem:[%s168 + $0x10] sm:$0xf]
                %175 = vst [vmem:[%s169 + $0x8] sm:$0xf] %v174
                %v176 = vld [vmem:[%s168 + $0x14] sm:$0xf]
                %177 = vst [vmem:[%s169 + $0xc] sm:$0xf] %v176
                %v178 = vld [vmem:[%s168 + $0x20] sm:$0xf]
                %179 = vst [vmem:[%s169 + $0x10] sm:$0xf] %v178
                %v180 = vld [vmem:[%s168 + $0x24] sm:$0xf]
                %181 = vst [vmem:[%s169 + $0x14] sm:$0xf] %v180
                %v182 = vld [vmem:[%s168 + $0x30] sm:$0xf]
                %183 = vst [vmem:[%s169 + $0x18] sm:$0xf] %v182
                %v184 = vld [vmem:[%s168 + $0x34] sm:$0xf]
                %185 = vst [vmem:[%s169 + $0x1c] sm:$0xf] %v184
                %v186 = vld [vmem:[%s168 + $0x40] sm:$0xf]
                %187 = vst [vmem:[%s169 + $0x20] sm:$0xf] %v186
                %v188 = vld [vmem:[%s168 + $0x44] sm:$0xf]
                %189 = vst [vmem:[%s169 + $0x24] sm:$0xf] %v188
                %v190 = vld [vmem:[%s168 + $0x50] sm:$0xf]
                %191 = vst [vmem:[%s169 + $0x28] sm:$0xf] %v190
                %v192 = vld [vmem:[%s168 + $0x54] sm:$0xf]
                %193 = vst [vmem:[%s169 + $0x2c] sm:$0xf] %v192
                %v194 = vld [vmem:[%s168 + $0x60] sm:$0xf]
                %195 = vst [vmem:[%s169 + $0x30] sm:$0xf] %v194
                %v196 = vld [vmem:[%s168 + $0x64] sm:$0xf]
                %197 = vst [vmem:[%s169 + $0x34] sm:$0xf] %v196
                %v198 = vld [vmem:[%s168 + $0x70] sm:$0xf]
                %199 = vst [vmem:[%s169 + $0x38] sm:$0xf] %v198
                %v200 = vld [vmem:[%s168 + $0x74] sm:$0xf]
                %201 = vst [vmem:[%s169 + $0x3c] sm:$0xf] %v200
                %v202 = vld [vmem:[%s168 + $0x80] sm:$0xf]
                %203 = vst [vmem:[%s169 + $0x40] sm:$0xf] %v202
                %v204 = vld [vmem:[%s168 + $0x84] sm:$0xf]
                %205 = vst [vmem:[%s169 + $0x44] sm:$0xf] %v204
                %v206 = vld [vmem:[%s168 + $0x90] sm:$0xf]
                %207 = vst [vmem:[%s169 + $0x48] sm:$0xf] %v206
                %v208 = vld [vmem:[%s168 + $0x94] sm:$0xf]
                %209 = vst [vmem:[%s169 + $0x4c] sm:$0xf] %v208
                %v210 = vld [vmem:[%s168 + $0xa0] sm:$0xf]
                %211 = vst [vmem:[%s169 + $0x50] sm:$0xf] %v210
                %v212 = vld [vmem:[%s168 + $0xa4] sm:$0xf]
                %213 = vst [vmem:[%s169 + $0x54] sm:$0xf] %v212
                %v214 = vld [vmem:[%s168 + $0xb0] sm:$0xf]
                %215 = vst [vmem:[%s169 + $0x58] sm:$0xf] %v214
                %v216 = vld [vmem:[%s168 + $0xb4] sm:$0xf]
                %217 = vst [vmem:[%s169 + $0x5c] sm:$0xf] %v216
                %v218 = vld [vmem:[%s168 + $0xc0] sm:$0xf]
                %219 = vst [vmem:[%s169 + $0x60] sm:$0xf] %v218
                %v220 = vld [vmem:[%s168 + $0xc4] sm:$0xf]
                %221 = vst [vmem:[%s169 + $0x64] sm:$0xf] %v220
                %v222 = vld [vmem:[%s168 + $0xd0] sm:$0xf]
                %223 = vst [vmem:[%s169 + $0x68] sm:$0xf] %v222
                %v224 = vld [vmem:[%s168 + $0xd4] sm:$0xf]
                %225 = vst [vmem:[%s169 + $0x6c] sm:$0xf] %v224
                %v226 = vld [vmem:[%s168 + $0xe0] sm:$0xf]
                %227 = vst [vmem:[%s169 + $0x70] sm:$0xf] %v226
                %v228 = vld [vmem:[%s168 + $0xe4] sm:$0xf]
                %229 = vst [vmem:[%s169 + $0x74] sm:$0xf] %v228
                %v230 = vld [vmem:[%s168 + $0xf0] sm:$0xf]
                %231 = vst [vmem:[%s169 + $0x78] sm:$0xf] %v230
                %v232 = vld [vmem:[%s168 + $0xf4] sm:$0xf]
                %233 = vst [vmem:[%s169 + $0x7c] sm:$0xf] %v232
              $region45: #{a_call__.13} parent=39 // loop_footer
                %s167 = sadd.s32 1, %s163
              $region46: #{a_call__.13} parent=39 // loop_footer_branch
                %162 = sbr.rel target = $region42
              $region47: #{a_call__.13} parent=39 // loop_exit
                _
            $region40: #{a_call__.13} parent=31 // pred_fallthru
              _
          $region32: #{a_call__.13} parent=27 // pred_fallthru
            _
          %317 = vnop
        $region28: #{a_call__.13} parent=23 // pred_fallthru
          _
      $region24: #{a_call__.13} parent=5 // pred_fallthru
        _
      %p318 = scmp.le.s32.totalorder 1, %s9
      %p319 = scmp.lt.s32.totalorder %s9, 3
      %p320 = pnand %p318, %p319
      %p321 = pneg %p320
      // Predicated region
      $region66: #{a_call__.13} parent=5 // pred_check
        _
      $region67: #{a_call__.13} parent=5 // pred_check_branch
        %323 = sbr.rel (%p320) target = $region69
      $region68: #{a_call__.13} parent=5 // pred_region
        %s324 = ssub.s32 %s9, 1
        %s325 = sand.u32 %s36, 1
        %s326 = sand.u32 %s36, 1
        %s327 = smul.addr %s326, 128
        %s328 = scalar_lea.vmem [#allocation2], %s327
        // Predicated region
        $region70: #{a_call__.13} parent=68 // pred_check
          %p329 = pneg %p49
        $region71: #{a_call__.13} parent=68 // pred_check_branch
          %331 = sbr.rel (%p329) target = $region73
        $region72: #{a_call__.13} parent=68 // pred_region
          _
        $region73: #{a_call__.13} parent=68 // pred_fallthru
          _
        %s332 = sand.u32 %s36, 1
        %s333 = sand.u32 %s36, 1
        %s334 = smul.addr %s333, 128
        %s335 = scalar_lea.vmem [#allocation2], %s334
        %p336 = pneg %p49
        %p337 = pneg %p46
        %p338 = pneg %p70
        %p339 = pneg %p67
        %p340 = pneg %p91
        %p341 = pneg %p88
        %p342 = pneg %p119
        %p343 = pneg %p116
        %p344 = scmp.lt.s32.totalorder %s18, 1
        %s345 = scalar_select %p344, %s18, 1
        %p346 = scmp.lt.s32.totalorder %s19, 0
        %s347 = scalar_select %p346, %s19, 0
        %s348 = smul.addr %s345, 2
        %s349 = sadd.s32 %s347, %s348
        %s350 = smul.addr %s349, 8
        %s351 = scalar_lea.vmem %s3, %s350
        %p352 = scmp.lt.s32.totalorder %s18, 1
        %s353 = scalar_select %p352, %s18, 1
        %p354 = scmp.lt.s32.totalorder %s19, 0
        %s355 = scalar_select %p354, %s19, 0
        %s356 = smul.addr %s353, 2
        %s357 = sadd.s32 %s355, %s356
        %s358 = smul.addr %s357, 8
        %s359 = scalar_lea.vmem %s3, %s358
        %v360 = vld [vmem:[%s328] sm:$0xf]
        %v361 = vld [vmem:[%s328 + $0x4] sm:$0xf]
        %v362 = vld [vmem:[%s328 + $0x8] sm:$0xf]
        %v363 = vld [vmem:[%s328 + $0xc] sm:$0xf]
        %v364 = vld [vmem:[%s328 + $0x10] sm:$0xf]
        %v365 = vld [vmem:[%s328 + $0x14] sm:$0xf]
        %v366 = vld [vmem:[%s328 + $0x18] sm:$0xf]
        %v367 = vld [vmem:[%s328 + $0x1c] sm:$0xf]
        %v368 = vld [vmem:[%s328 + $0x20] sm:$0xf]
        %v369 = vld [vmem:[%s328 + $0x24] sm:$0xf]
        %v370 = vld [vmem:[%s328 + $0x28] sm:$0xf]
        %v371 = vld [vmem:[%s328 + $0x2c] sm:$0xf]
        %v372 = vld [vmem:[%s328 + $0x30] sm:$0xf]
        %v373 = vld [vmem:[%s328 + $0x34] sm:$0xf]
        %v374 = vld [vmem:[%s328 + $0x38] sm:$0xf]
        %v375 = vld [vmem:[%s328 + $0x3c] sm:$0xf]
        %v376 = vld [vmem:[%s328 + $0x40] sm:$0xf]
        %v377 = vld [vmem:[%s328 + $0x44] sm:$0xf]
        %v378 = vld [vmem:[%s328 + $0x48] sm:$0xf]
        %v379 = vld [vmem:[%s328 + $0x4c] sm:$0xf]
        %v380 = vld [vmem:[%s328 + $0x50] sm:$0xf]
        %v381 = vld [vmem:[%s328 + $0x54] sm:$0xf]
        %v382 = vld [vmem:[%s328 + $0x58] sm:$0xf]
        %v383 = vld [vmem:[%s328 + $0x5c] sm:$0xf]
        %v384 = vld [vmem:[%s328 + $0x60] sm:$0xf]
        %v385 = vld [vmem:[%s328 + $0x64] sm:$0xf]
        %v386 = vld [vmem:[%s328 + $0x68] sm:$0xf]
        %v387 = vld [vmem:[%s328 + $0x6c] sm:$0xf]
        %v388 = vld [vmem:[%s328 + $0x70] sm:$0xf]
        %v389 = vld [vmem:[%s328 + $0x74] sm:$0xf]
        %v390 = vld [vmem:[%s328 + $0x78] sm:$0xf]
        %v391 = vld [vmem:[%s328 + $0x7c] sm:$0xf]
        %v392 = vunpack.c.l.bf16 %v360
        %v393 = vunpack.c.l.bf16 %v361
        %v394 = vunpack.c.l.bf16 %v362
        %v395 = vunpack.c.l.bf16 %v363
        %v396 = vunpack.c.l.bf16 %v364
        %v397 = vunpack.c.l.bf16 %v365
        %v398 = vunpack.c.l.bf16 %v366
        %v399 = vunpack.c.l.bf16 %v367
        %v400 = vunpack.c.l.bf16 %v368
        %v401 = vunpack.c.l.bf16 %v369
        %v402 = vunpack.c.l.bf16 %v370
        %v403 = vunpack.c.l.bf16 %v371
        %v404 = vunpack.c.l.bf16 %v372
        %v405 = vunpack.c.l.bf16 %v373
        %v406 = vunpack.c.l.bf16 %v374
        %v407 = vunpack.c.l.bf16 %v375
        %v408 = vunpack.c.l.bf16 %v376
        %v409 = vunpack.c.l.bf16 %v377
        %v410 = vunpack.c.l.bf16 %v378
        %v411 = vunpack.c.l.bf16 %v379
        %v412 = vunpack.c.l.bf16 %v380
        %v413 = vunpack.c.l.bf16 %v381
        %v414 = vunpack.c.l.bf16 %v382
        %v415 = vunpack.c.l.bf16 %v383
        %v416 = vunpack.c.l.bf16 %v384
        %v417 = vunpack.c.l.bf16 %v385
        %v418 = vunpack.c.l.bf16 %v386
        %v419 = vunpack.c.l.bf16 %v387
        %v420 = vunpack.c.l.bf16 %v388
        %v421 = vunpack.c.l.bf16 %v389
        %v422 = vunpack.c.l.bf16 %v390
        %v423 = vunpack.c.l.bf16 %v391
        %v424 = vld [vmem:[%s1] sm:$0x1]
        %v425 = vld [vmem:[%s1 + $0x1] sm:$0x1]
        %v426 = vld [vmem:[%s1 + $0x2] sm:$0x1]
        %v427 = vld [vmem:[%s1 + $0x3] sm:$0x1]
        %v428 = vld [vmem:[%s1 + $0x4] sm:$0x1]
        %v429 = vld [vmem:[%s1 + $0x5] sm:$0x1]
        %v430 = vld [vmem:[%s1 + $0x6] sm:$0x1]
        %v431 = vld [vmem:[%s1 + $0x7] sm:$0x1]
        %v432 = vld [vmem:[%s1 + $0x8] sm:$0x1]
        %v433 = vld [vmem:[%s1 + $0x9] sm:$0x1]
        %v434 = vld [vmem:[%s1 + $0xa] sm:$0x1]
        %v435 = vld [vmem:[%s1 + $0xb] sm:$0x1]
        %v436 = vld [vmem:[%s1 + $0xc] sm:$0x1]
        %v437 = vld [vmem:[%s1 + $0xd] sm:$0x1]
        %v438 = vld [vmem:[%s1 + $0xe] sm:$0x1]
        %v439 = vld [vmem:[%s1 + $0xf] sm:$0x1]
        %v456 = vlaneseq
        %v457 = vshrl.u32 %v456, 7
        %v458 = vsub.s32 0, %v457
        %v459 = vrot.slane %v424, %v458
        %v460 = vlaneseq
        %v461 = vshrl.u32 %v460, 7
        %v462 = vsub.s32 0, %v461
        %v463 = vrot.slane %v425, %v462
        %v464 = vlaneseq
        %v465 = vshrl.u32 %v464, 7
        %v466 = vsub.s32 0, %v465
        %v467 = vrot.slane %v426, %v466
        %v468 = vlaneseq
        %v469 = vshrl.u32 %v468, 7
        %v470 = vsub.s32 0, %v469
        %v471 = vrot.slane %v427, %v470
        %v472 = vlaneseq
        %v473 = vshrl.u32 %v472, 7
        %v474 = vsub.s32 0, %v473
        %v475 = vrot.slane %v428, %v474
        %v476 = vlaneseq
        %v477 = vshrl.u32 %v476, 7
        %v478 = vsub.s32 0, %v477
        %v479 = vrot.slane %v429, %v478
        %v480 = vlaneseq
        %v481 = vshrl.u32 %v480, 7
        %v482 = vsub.s32 0, %v481
        %v483 = vrot.slane %v430, %v482
        %v484 = vlaneseq
        %v485 = vshrl.u32 %v484, 7
        %v486 = vsub.s32 0, %v485
        %v487 = vrot.slane %v431, %v486
        %v488 = vlaneseq
        %v489 = vshrl.u32 %v488, 7
        %v490 = vsub.s32 0, %v489
        %v491 = vrot.slane %v432, %v490
        %v492 = vlaneseq
        %v493 = vshrl.u32 %v492, 7
        %v494 = vsub.s32 0, %v493
        %v495 = vrot.slane %v433, %v494
        %v496 = vlaneseq
        %v497 = vshrl.u32 %v496, 7
        %v498 = vsub.s32 0, %v497
        %v499 = vrot.slane %v434, %v498
        %v500 = vlaneseq
        %v501 = vshrl.u32 %v500, 7
        %v502 = vsub.s32 0, %v501
        %v503 = vrot.slane %v435, %v502
        %v504 = vlaneseq
        %v505 = vshrl.u32 %v504, 7
        %v506 = vsub.s32 0, %v505
        %v507 = vrot.slane %v436, %v506
        %v508 = vlaneseq
        %v509 = vshrl.u32 %v508, 7
        %v510 = vsub.s32 0, %v509
        %v511 = vrot.slane %v437, %v510
        %v512 = vlaneseq
        %v513 = vshrl.u32 %v512, 7
        %v514 = vsub.s32 0, %v513
        %v515 = vrot.slane %v438, %v514
        %v516 = vlaneseq
        %v517 = vshrl.u32 %v516, 7
        %v518 = vsub.s32 0, %v517
        %v519 = vrot.slane %v439, %v518
        %520 = vset.pattern.permute.xlu0 0
        %521 = vperm.xlu0 %520, %v459
        %v522 = vpop.permute.xlu0 %521
        %524 = vset.pattern.permute.xlu0 0
        %525 = vperm.xlu0 %524, %v463
        %v526 = vpop.permute.xlu0 %525
        %528 = vset.pattern.permute.xlu0 0
        %529 = vperm.xlu0 %528, %v467
        %v530 = vpop.permute.xlu0 %529
        %532 = vset.pattern.permute.xlu0 0
        %533 = vperm.xlu0 %532, %v471
        %v534 = vpop.permute.xlu0 %533
        %536 = vset.pattern.permute.xlu0 0
        %537 = vperm.xlu0 %536, %v475
        %v538 = vpop.permute.xlu0 %537
        %540 = vset.pattern.permute.xlu0 0
        %541 = vperm.xlu0 %540, %v479
        %v542 = vpop.permute.xlu0 %541
        %544 = vset.pattern.permute.xlu0 0
        %545 = vperm.xlu0 %544, %v483
        %v546 = vpop.permute.xlu0 %545
        %548 = vset.pattern.permute.xlu0 0
        %549 = vperm.xlu0 %548, %v487
        %v550 = vpop.permute.xlu0 %549
        %552 = vset.pattern.permute.xlu0 0
        %553 = vperm.xlu0 %552, %v491
        %v554 = vpop.permute.xlu0 %553
        %556 = vset.pattern.permute.xlu0 0
        %557 = vperm.xlu0 %556, %v495
        %v558 = vpop.permute.xlu0 %557
        %560 = vset.pattern.permute.xlu0 0
        %561 = vperm.xlu0 %560, %v499
        %v562 = vpop.permute.xlu0 %561
        %564 = vset.pattern.permute.xlu0 0
        %565 = vperm.xlu0 %564, %v503
        %v566 = vpop.permute.xlu0 %565
        %568 = vset.pattern.permute.xlu0 0
        %569 = vperm.xlu0 %568, %v507
        %v570 = vpop.permute.xlu0 %569
        %572 = vset.pattern.permute.xlu0 0
        %573 = vperm.xlu0 %572, %v511
        %v574 = vpop.permute.xlu0 %573
        %576 = vset.pattern.permute.xlu0 0
        %577 = vperm.xlu0 %576, %v515
        %v578 = vpop.permute.xlu0 %577
        %580 = vset.pattern.permute.xlu0 0
        %581 = vperm.xlu0 %580, %v519
        %v582 = vpop.permute.xlu0 %581
        %v584 = vmul.f32 %v392, %v522
        %v585 = vmul.f32 %v393, %v522
        %v586 = vmul.f32 %v394, %v526
        %v587 = vmul.f32 %v395, %v526
        %v588 = vmul.f32 %v396, %v530
        %v589 = vmul.f32 %v397, %v530
        %v590 = vmul.f32 %v398, %v534
        %v591 = vmul.f32 %v399, %v534
        %v592 = vmul.f32 %v400, %v538
        %v593 = vmul.f32 %v401, %v538
        %v594 = vmul.f32 %v402, %v542
        %v595 = vmul.f32 %v403, %v542
        %v596 = vmul.f32 %v404, %v546
        %v597 = vmul.f32 %v405, %v546
        %v598 = vmul.f32 %v406, %v550
        %v599 = vmul.f32 %v407, %v550
        %v600 = vmul.f32 %v408, %v554
        %v601 = vmul.f32 %v409, %v554
        %v602 = vmul.f32 %v410, %v558
        %v603 = vmul.f32 %v411, %v558
        %v604 = vmul.f32 %v412, %v562
        %v605 = vmul.f32 %v413, %v562
        %v606 = vmul.f32 %v414, %v566
        %v607 = vmul.f32 %v415, %v566
        %v608 = vmul.f32 %v416, %v570
        %v609 = vmul.f32 %v417, %v570
        %v610 = vmul.f32 %v418, %v574
        %v611 = vmul.f32 %v419, %v574
        %v612 = vmul.f32 %v420, %v578
        %v613 = vmul.f32 %v421, %v578
        %v614 = vmul.f32 %v422, %v582
        %v615 = vmul.f32 %v423, %v582
        %v616 = vld [vmem:[%s2] sm:$0x1]
        %v617 = vld [vmem:[%s2 + $0x1] sm:$0x1]
        %v618 = vld [vmem:[%s2 + $0x2] sm:$0x1]
        %v619 = vld [vmem:[%s2 + $0x3] sm:$0x1]
        %v620 = vld [vmem:[%s2 + $0x4] sm:$0x1]
        %v621 = vld [vmem:[%s2 + $0x5] sm:$0x1]
        %v622 = vld [vmem:[%s2 + $0x6] sm:$0x1]
        %v623 = vld [vmem:[%s2 + $0x7] sm:$0x1]
        %v624 = vld [vmem:[%s2 + $0x8] sm:$0x1]
        %v625 = vld [vmem:[%s2 + $0x9] sm:$0x1]
        %v626 = vld [vmem:[%s2 + $0xa] sm:$0x1]
        %v627 = vld [vmem:[%s2 + $0xb] sm:$0x1]
        %v628 = vld [vmem:[%s2 + $0xc] sm:$0x1]
        %v629 = vld [vmem:[%s2 + $0xd] sm:$0x1]
        %v630 = vld [vmem:[%s2 + $0xe] sm:$0x1]
        %v631 = vld [vmem:[%s2 + $0xf] sm:$0x1]
        %v648 = vlaneseq
        %v649 = vshrl.u32 %v648, 7
        %v650 = vsub.s32 0, %v649
        %v651 = vrot.slane %v616, %v650
        %v652 = vlaneseq
        %v653 = vshrl.u32 %v652, 7
        %v654 = vsub.s32 0, %v653
        %v655 = vrot.slane %v617, %v654
        %v656 = vlaneseq
        %v657 = vshrl.u32 %v656, 7
        %v658 = vsub.s32 0, %v657
        %v659 = vrot.slane %v618, %v658
        %v660 = vlaneseq
        %v661 = vshrl.u32 %v660, 7
        %v662 = vsub.s32 0, %v661
        %v663 = vrot.slane %v619, %v662
        %v664 = vlaneseq
        %v665 = vshrl.u32 %v664, 7
        %v666 = vsub.s32 0, %v665
        %v667 = vrot.slane %v620, %v666
        %v668 = vlaneseq
        %v669 = vshrl.u32 %v668, 7
        %v670 = vsub.s32 0, %v669
        %v671 = vrot.slane %v621, %v670
        %v672 = vlaneseq
        %v673 = vshrl.u32 %v672, 7
        %v674 = vsub.s32 0, %v673
        %v675 = vrot.slane %v622, %v674
        %v676 = vlaneseq
        %v677 = vshrl.u32 %v676, 7
        %v678 = vsub.s32 0, %v677
        %v679 = vrot.slane %v623, %v678
        %v680 = vlaneseq
        %v681 = vshrl.u32 %v680, 7
        %v682 = vsub.s32 0, %v681
        %v683 = vrot.slane %v624, %v682
        %v684 = vlaneseq
        %v685 = vshrl.u32 %v684, 7
        %v686 = vsub.s32 0, %v685
        %v687 = vrot.slane %v625, %v686
        %v688 = vlaneseq
        %v689 = vshrl.u32 %v688, 7
        %v690 = vsub.s32 0, %v689
        %v691 = vrot.slane %v626, %v690
        %v692 = vlaneseq
        %v693 = vshrl.u32 %v692, 7
        %v694 = vsub.s32 0, %v693
        %v695 = vrot.slane %v627, %v694
        %v696 = vlaneseq
        %v697 = vshrl.u32 %v696, 7
        %v698 = vsub.s32 0, %v697
        %v699 = vrot.slane %v628, %v698
        %v700 = vlaneseq
        %v701 = vshrl.u32 %v700, 7
        %v702 = vsub.s32 0, %v701
        %v703 = vrot.slane %v629, %v702
        %v704 = vlaneseq
        %v705 = vshrl.u32 %v704, 7
        %v706 = vsub.s32 0, %v705
        %v707 = vrot.slane %v630, %v706
        %v708 = vlaneseq
        %v709 = vshrl.u32 %v708, 7
        %v710 = vsub.s32 0, %v709
        %v711 = vrot.slane %v631, %v710
        %712 = vset.pattern.permute.xlu0 0
        %713 = vperm.xlu0 %712, %v651
        %v714 = vpop.permute.xlu0 %713
        %716 = vset.pattern.permute.xlu0 0
        %717 = vperm.xlu0 %716, %v655
        %v718 = vpop.permute.xlu0 %717
        %720 = vset.pattern.permute.xlu0 0
        %721 = vperm.xlu0 %720, %v659
        %v722 = vpop.permute.xlu0 %721
        %724 = vset.pattern.permute.xlu0 0
        %725 = vperm.xlu0 %724, %v663
        %v726 = vpop.permute.xlu0 %725
        %728 = vset.pattern.permute.xlu0 0
        %729 = vperm.xlu0 %728, %v667
        %v730 = vpop.permute.xlu0 %729
        %732 = vset.pattern.permute.xlu0 0
        %733 = vperm.xlu0 %732, %v671
        %v734 = vpop.permute.xlu0 %733
        %736 = vset.pattern.permute.xlu0 0
        %737 = vperm.xlu0 %736, %v675
        %v738 = vpop.permute.xlu0 %737
        %740 = vset.pattern.permute.xlu0 0
        %741 = vperm.xlu0 %740, %v679
        %v742 = vpop.permute.xlu0 %741
        %744 = vset.pattern.permute.xlu0 0
        %745 = vperm.xlu0 %744, %v683
        %v746 = vpop.permute.xlu0 %745
        %748 = vset.pattern.permute.xlu0 0
        %749 = vperm.xlu0 %748, %v687
        %v750 = vpop.permute.xlu0 %749
        %752 = vset.pattern.permute.xlu0 0
        %753 = vperm.xlu0 %752, %v691
        %v754 = vpop.permute.xlu0 %753
        %756 = vset.pattern.permute.xlu0 0
        %757 = vperm.xlu0 %756, %v695
        %v758 = vpop.permute.xlu0 %757
        %760 = vset.pattern.permute.xlu0 0
        %761 = vperm.xlu0 %760, %v699
        %v762 = vpop.permute.xlu0 %761
        %764 = vset.pattern.permute.xlu0 0
        %765 = vperm.xlu0 %764, %v703
        %v766 = vpop.permute.xlu0 %765
        %768 = vset.pattern.permute.xlu0 0
        %769 = vperm.xlu0 %768, %v707
        %v770 = vpop.permute.xlu0 %769
        %772 = vset.pattern.permute.xlu0 0
        %773 = vperm.xlu0 %772, %v711
        %v774 = vpop.permute.xlu0 %773
        %v776 = vadd.f32 %v584, %v714
        %v777 = vadd.f32 %v585, %v714
        %v778 = vadd.f32 %v586, %v718
        %v779 = vadd.f32 %v587, %v718
        %v780 = vadd.f32 %v588, %v722
        %v781 = vadd.f32 %v589, %v722
        %v782 = vadd.f32 %v590, %v726
        %v783 = vadd.f32 %v591, %v726
        %v784 = vadd.f32 %v592, %v730
        %v785 = vadd.f32 %v593, %v730
        %v786 = vadd.f32 %v594, %v734
        %v787 = vadd.f32 %v595, %v734
        %v788 = vadd.f32 %v596, %v738
        %v789 = vadd.f32 %v597, %v738
        %v790 = vadd.f32 %v598, %v742
        %v791 = vadd.f32 %v599, %v742
        %v792 = vadd.f32 %v600, %v746
        %v793 = vadd.f32 %v601, %v746
        %v794 = vadd.f32 %v602, %v750
        %v795 = vadd.f32 %v603, %v750
        %v796 = vadd.f32 %v604, %v754
        %v797 = vadd.f32 %v605, %v754
        %v798 = vadd.f32 %v606, %v758
        %v799 = vadd.f32 %v607, %v758
        %v800 = vadd.f32 %v608, %v762
        %v801 = vadd.f32 %v609, %v762
        %v802 = vadd.f32 %v610, %v766
        %v803 = vadd.f32 %v611, %v766
        %v804 = vadd.f32 %v612, %v770
        %v805 = vadd.f32 %v613, %v770
        %v806 = vadd.f32 %v614, %v774
        %v807 = vadd.f32 %v615, %v774
        %v808 = vmax.f32 %v776, 0.0
        %v809 = vmax.f32 %v777, 0.0
        %v810 = vmax.f32 %v778, 0.0
        %v811 = vmax.f32 %v779, 0.0
        %v812 = vmax.f32 %v780, 0.0
        %v813 = vmax.f32 %v781, 0.0
        %v814 = vmax.f32 %v782, 0.0
        %v815 = vmax.f32 %v783, 0.0
        %v816 = vmax.f32 %v784, 0.0
        %v817 = vmax.f32 %v785, 0.0
        %v818 = vmax.f32 %v786, 0.0
        %v819 = vmax.f32 %v787, 0.0
        %v820 = vmax.f32 %v788, 0.0
        %v821 = vmax.f32 %v789, 0.0
        %v822 = vmax.f32 %v790, 0.0
        %v823 = vmax.f32 %v791, 0.0
        %v824 = vmax.f32 %v792, 0.0
        %v825 = vmax.f32 %v793, 0.0
        %v826 = vmax.f32 %v794, 0.0
        %v827 = vmax.f32 %v795, 0.0
        %v828 = vmax.f32 %v796, 0.0
        %v829 = vmax.f32 %v797, 0.0
        %v830 = vmax.f32 %v798, 0.0
        %v831 = vmax.f32 %v799, 0.0
        %v832 = vmax.f32 %v800, 0.0
        %v833 = vmax.f32 %v801, 0.0
        %v834 = vmax.f32 %v802, 0.0
        %v835 = vmax.f32 %v803, 0.0
        %v836 = vmax.f32 %v804, 0.0
        %v837 = vmax.f32 %v805, 0.0
        %v838 = vmax.f32 %v806, 0.0
        %v839 = vmax.f32 %v807, 0.0
        %vm840 = vcmask 64512
        %v841 = vsel %vm840, %v808, -inf
        %v842 = vsel %vm840, %v809, -inf
        %v843 = vmax.f32 %v841, %v842
        %v844 = vrot.slane %v843, 4
        %v845 = vmax.f32 %v843, %v844
        %v846 = vrot.slane %v845, 2
        %v847 = vmax.f32 %v845, %v846
        %v848 = vrot.slane %v847, 1
        %v849 = vmax.f32 %v847, %v848
        %v850 = vsel %vm840, %v810, -inf
        %v851 = vsel %vm840, %v811, -inf
        %v852 = vmax.f32 %v850, %v851
        %v853 = vrot.slane %v852, 4
        %v854 = vmax.f32 %v852, %v853
        %v855 = vrot.slane %v854, 2
        %v856 = vmax.f32 %v854, %v855
        %v857 = vrot.slane %v856, 1
        %v858 = vmax.f32 %v856, %v857
        %v859 = vsel %vm840, %v812, -inf
        %v860 = vsel %vm840, %v813, -inf
        %v861 = vmax.f32 %v859, %v860
        %v862 = vrot.slane %v861, 4
        %v863 = vmax.f32 %v861, %v862
        %v864 = vrot.slane %v863, 2
        %v865 = vmax.f32 %v863, %v864
        %v866 = vrot.slane %v865, 1
        %v867 = vmax.f32 %v865, %v866
        %v868 = vsel %vm840, %v814, -inf
        %v869 = vsel %vm840, %v815, -inf
        %v870 = vmax.f32 %v868, %v869
        %v871 = vrot.slane %v870, 4
        %v872 = vmax.f32 %v870, %v871
        %v873 = vrot.slane %v872, 2
        %v874 = vmax.f32 %v872, %v873
        %v875 = vrot.slane %v874, 1
        %v876 = vmax.f32 %v874, %v875
        %v877 = vsel %vm840, %v816, -inf
        %v878 = vsel %vm840, %v817, -inf
        %v879 = vmax.f32 %v877, %v878
        %v880 = vrot.slane %v879, 4
        %v881 = vmax.f32 %v879, %v880
        %v882 = vrot.slane %v881, 2
        %v883 = vmax.f32 %v881, %v882
        %v884 = vrot.slane %v883, 1
        %v885 = vmax.f32 %v883, %v884
        %v886 = vsel %vm840, %v818, -inf
        %v887 = vsel %vm840, %v819, -inf
        %v888 = vmax.f32 %v886, %v887
        %v889 = vrot.slane %v888, 4
        %v890 = vmax.f32 %v888, %v889
        %v891 = vrot.slane %v890, 2
        %v892 = vmax.f32 %v890, %v891
        %v893 = vrot.slane %v892, 1
        %v894 = vmax.f32 %v892, %v893
        %v895 = vsel %vm840, %v820, -inf
        %v896 = vsel %vm840, %v821, -inf
        %v897 = vmax.f32 %v895, %v896
        %v898 = vrot.slane %v897, 4
        %v899 = vmax.f32 %v897, %v898
        %v900 = vrot.slane %v899, 2
        %v901 = vmax.f32 %v899, %v900
        %v902 = vrot.slane %v901, 1
        %v903 = vmax.f32 %v901, %v902
        %v904 = vsel %vm840, %v822, -inf
        %v905 = vsel %vm840, %v823, -inf
        %v906 = vmax.f32 %v904, %v905
        %v907 = vrot.slane %v906, 4
        %v908 = vmax.f32 %v906, %v907
        %v909 = vrot.slane %v908, 2
        %v910 = vmax.f32 %v908, %v909
        %v911 = vrot.slane %v910, 1
        %v912 = vmax.f32 %v910, %v911
        %v913 = vsel %vm840, %v824, -inf
        %v914 = vsel %vm840, %v825, -inf
        %v915 = vmax.f32 %v913, %v914
        %v916 = vrot.slane %v915, 4
        %v917 = vmax.f32 %v915, %v916
        %v918 = vrot.slane %v917, 2
        %v919 = vmax.f32 %v917, %v918
        %v920 = vrot.slane %v919, 1
        %v921 = vmax.f32 %v919, %v920
        %v922 = vsel %vm840, %v826, -inf
        %v923 = vsel %vm840, %v827, -inf
        %v924 = vmax.f32 %v922, %v923
        %v925 = vrot.slane %v924, 4
        %v926 = vmax.f32 %v924, %v925
        %v927 = vrot.slane %v926, 2
        %v928 = vmax.f32 %v926, %v927
        %v929 = vrot.slane %v928, 1
        %v930 = vmax.f32 %v928, %v929
        %v931 = vsel %vm840, %v828, -inf
        %v932 = vsel %vm840, %v829, -inf
        %v933 = vmax.f32 %v931, %v932
        %v934 = vrot.slane %v933, 4
        %v935 = vmax.f32 %v933, %v934
        %v936 = vrot.slane %v935, 2
        %v937 = vmax.f32 %v935, %v936
        %v938 = vrot.slane %v937, 1
        %v939 = vmax.f32 %v937, %v938
        %v940 = vsel %vm840, %v830, -inf
        %v941 = vsel %vm840, %v831, -inf
        %v942 = vmax.f32 %v940, %v941
        %v943 = vrot.slane %v942, 4
        %v944 = vmax.f32 %v942, %v943
        %v945 = vrot.slane %v944, 2
        %v946 = vmax.f32 %v944, %v945
        %v947 = vrot.slane %v946, 1
        %v948 = vmax.f32 %v946, %v947
        %v949 = vsel %vm840, %v832, -inf
        %v950 = vsel %vm840, %v833, -inf
        %v951 = vmax.f32 %v949, %v950
        %v952 = vrot.slane %v951, 4
        %v953 = vmax.f32 %v951, %v952
        %v954 = vrot.slane %v953, 2
        %v955 = vmax.f32 %v953, %v954
        %v956 = vrot.slane %v955, 1
        %v957 = vmax.f32 %v955, %v956
        %v958 = vsel %vm840, %v834, -inf
        %v959 = vsel %vm840, %v835, -inf
        %v960 = vmax.f32 %v958, %v959
        %v961 = vrot.slane %v960, 4
        %v962 = vmax.f32 %v960, %v961
        %v963 = vrot.slane %v962, 2
        %v964 = vmax.f32 %v962, %v963
        %v965 = vrot.slane %v964, 1
        %v966 = vmax.f32 %v964, %v965
        %v967 = vsel %vm840, %v836, -inf
        %v968 = vsel %vm840, %v837, -inf
        %v969 = vmax.f32 %v967, %v968
        %v970 = vrot.slane %v969, 4
        %v971 = vmax.f32 %v969, %v970
        %v972 = vrot.slane %v971, 2
        %v973 = vmax.f32 %v971, %v972
        %v974 = vrot.slane %v973, 1
        %v975 = vmax.f32 %v973, %v974
        %v976 = vsel %vm840, %v838, -inf
        %v977 = vsel %vm840, %v839, -inf
        %v978 = vmax.f32 %v976, %v977
        %v979 = vrot.slane %v978, 4
        %v980 = vmax.f32 %v978, %v979
        %v981 = vrot.slane %v980, 2
        %v982 = vmax.f32 %v980, %v981
        %v983 = vrot.slane %v982, 1
        %v984 = vmax.f32 %v982, %v983
        %vm1001 = vcmask 1041409
        %v1002 = vsel %vm1001, %v858, %v849
        %vm1003 = vcmask 1042434
        %v1004 = vsel %vm1003, %v867, %v1002
        %vm1005 = vcmask 1043459
        %v1006 = vsel %vm1005, %v876, %v1004
        %vm1007 = vcmask 1044484
        %v1008 = vsel %vm1007, %v885, %v1006
        %vm1009 = vcmask 1045509
        %v1010 = vsel %vm1009, %v894, %v1008
        %vm1011 = vcmask 1046534
        %v1012 = vsel %vm1011, %v903, %v1010
        %vm1013 = vcmask 1047559
        %v1014 = vsel %vm1013, %v912, %v1012
        %v1015 = vsel %vm1001, %v930, %v921
        %v1016 = vsel %vm1003, %v939, %v1015
        %v1017 = vsel %vm1005, %v948, %v1016
        %v1018 = vsel %vm1007, %v957, %v1017
        %v1019 = vsel %vm1009, %v966, %v1018
        %v1020 = vsel %vm1011, %v975, %v1019
        %v1021 = vsel %vm1013, %v984, %v1020
        %1024 = vst.msk [vmem:[%s359] sm:$0xff] %vm840, %v1014
        %1025 = vst.msk [vmem:[%s359 + $0x8] sm:$0xff] %vm840, %v1021
        %p1026 = scmp.lt.s32.totalorder %s18, 1
        %s1027 = scalar_select %p1026, %s18, 1
        %p1028 = scmp.lt.s32.totalorder %s19, 0
        %s1029 = scalar_select %p1028, %s19, 0
        %s1030 = smul.addr %s1027, 2
        %s1031 = sadd.s32 %s1029, %s1030
        %s1032 = smul.addr %s1031, 8
        %s1033 = scalar_lea.vmem %s3, %s1032
        // Predicated region
        $region74: #{a_call__.13} parent=68 // pred_check
          %p1034 = pneg %p116
        $region75: #{a_call__.13} parent=68 // pred_check_branch
          %1036 = sbr.rel (%p1034) target = $region77
        $region76: #{a_call__.13} parent=68 // pred_region
          _
        $region77: #{a_call__.13} parent=68 // pred_fallthru
          _
      $region69: #{a_call__.13} parent=5 // pred_fallthru
        _
      %p1037 = scmp.le.s32.totalorder 2, %s9
      // Predicated region
      $region78: #{a_call__.13} parent=5 // pred_check
        %p1038 = pneg %p1037
      $region79: #{a_call__.13} parent=5 // pred_check_branch
        %1040 = sbr.rel (%p1038) target = $region81
      $region80: #{a_call__.13} parent=5 // pred_region
        %s1041 = ssub.s32 %s9, 2
        // Predicated region
        $region82: #{a_call__.13} parent=80 // pred_check
          %p1042 = pneg %p122
        $region83: #{a_call__.13} parent=80 // pred_check_branch
          %1044 = sbr.rel (%p1042) target = $region85
        $region84: #{a_call__.13} parent=80 // pred_region
          %p1045 = scmp.lt.s32.totalorder %s20, 1
          %s1046 = scalar_select %p1045, %s20, 1
          %p1047 = scmp.lt.s32.totalorder %s21, 0
          %s1048 = scalar_select %p1047, %s21, 0
          %s1049 = smul.addr %s1046, 2
          %s1050 = sadd.s32 %s1048, %s1049
          %s1051 = smul.addr %s1050, 8
          %s1052 = scalar_lea.vmem %s3, %s1051
        $region85: #{a_call__.13} parent=80 // pred_fallthru
          _
      $region81: #{a_call__.13} parent=5 // pred_fallthru
        _
    $region6: #{a_call__.13} parent=1 // loop_footer
      %s13 = sadd.s32 1, %s9
    $region7: #{a_call__.13} parent=1 // loop_footer_branch
      %8 = sbr.rel target = $region3
    $region8: #{a_call__.13} parent=1 // loop_exit
      _

</llo_original>
